<compile_context>
chip_gen: v7x
topology: tpu7x:2x2x1
jax: 0.10.0
libtpu: 0.0.40
codegen_flags: <defaults>
</compile_context>

<pallas_src>
import functools

import jax
import jax.numpy as jnp
from jax import lax
from jax.experimental import pallas as pl
from jax.experimental.pallas import tpu as pltpu


def _head_level_kernel(feat_ref, w_ref, b_ref, goff_ref, awh_ref,
                       box_ref, score_ref, obj_ref, sig_ref, *,
                       stride, num_anchors, num_classes):
    """Fused 1x1-conv + YOLO decode for one tile of (N*H*W) positions.

    feat_ref  : (tm, Cin)        bf16  feature rows
    w_ref     : (Cin, Cpad)      bf16  role-permuted, zero-padded conv weight
    b_ref     : (1, Cpad)        f32   permuted (padded) bias
    goff_ref  : (tm, 2A)         f32   stride*(grid_xy - 0.5), xy interleaved/anchor
    awh_ref   : (1, 2A)          f32   anchor (w, h), interleaved per anchor
    box_ref   : (tm, 4A)         f32   [x1,y1,x2,y2] per anchor (anchor-major)
    score_ref : (tm, A*NC)       f32   obj*cls per anchor (anchor-major)
    obj_ref   : (tm, A)          f32   sigmoid(obj) per anchor
    sig_ref   : (tm, 4A)         f32   raw sigmas per anchor (anchor-major)
    """
    a_num = num_anchors
    nc = num_classes

    # 1x1 conv == channel matmul on the MXU (bf16 operands, f32 accumulate).
    p = jnp.dot(feat_ref[...], w_ref[...],
                preferred_element_type=jnp.float32) + b_ref[...]

    # One wide EUP sigmoid slab over all [xy | wh | obj | cls] columns.
    n_act = a_num * (5 + nc)
    s = jax.nn.sigmoid(p[:, :n_act])

    s_xy = s[:, :2 * a_num]                   # (tm, 2A), xy interleaved per anchor
    s_wh = s[:, 2 * a_num:4 * a_num]          # (tm, 2A), wh interleaved per anchor
    s_obj = s[:, 4 * a_num:5 * a_num]         # (tm, A)
    s_cls = s[:, 5 * a_num:n_act]             # (tm, A*NC), anchor-major classes
    raw_sig = p[:, n_act:n_act + 4 * a_num]   # (tm, 4A), raw sigmas (inference path)

    # xy = (2*sig - 0.5 + grid)*stride  ==  2*stride*sig + stride*(grid - 0.5)
    cxy = (2.0 * stride) * s_xy + goff_ref[...]
    # wh = 4*sig^2 * anchor_wh == (2*sig)^2 * anchor_wh
    t = 2.0 * s_wh
    wh = t * t * awh_ref[...]

    x1y1 = cxy - 0.5 * wh                     # cxcywh -> xyxy (still interleaved)
    x2y2 = cxy + 0.5 * wh

    # Assemble anchor-major [x1,y1,x2,y2] per anchor (tiny in-VMEM lane shuffle,
    # replaces the old per-anchor narrow HBM stores + XLA transpose).
    pieces = []
    for a in range(a_num):
        pieces.append(x1y1[:, 2 * a:2 * a + 2])
        pieces.append(x2y2[:, 2 * a:2 * a + 2])
    box_ref[...] = jnp.concatenate(pieces, axis=1)

    # Dense per-class scores = obj * cls, anchor-major packing.
    score_ref[...] = jnp.concatenate(
        [s_cls[:, a * nc:(a + 1) * nc] * s_obj[:, a:a + 1]
         for a in range(a_num)], axis=1)

    obj_ref[...] = s_obj
    sig_ref[...] = raw_sig


def _permute_columns(w, b, num_anchors, num_classes):
    """Reorder predictor output channels by role:
       [xy(2A) | wh(2A) | obj(A) | cls(A*NC) | sig(4A)], zero-pad to 128 lanes.
       (In a real model this permutation would be baked into the weights once.)"""
    cp = 5 + num_classes + 4
    perm = []
    for a in range(num_anchors):
        perm += [a * cp + 0, a * cp + 1]                        # tx, ty
    for a in range(num_anchors):
        perm += [a * cp + 2, a * cp + 3]                        # tw, th
    for a in range(num_anchors):
        perm += [a * cp + 4]                                    # obj
    for a in range(num_anchors):
        perm += [a * cp + 5 + c for c in range(num_classes)]    # cls
    for a in range(num_anchors):
        perm += [a * cp + 5 + num_classes + c for c in range(4)]  # sigmas
    perm = jnp.asarray(perm, jnp.int32)
    w_p = jnp.take(w, perm, axis=1)
    b_p = jnp.take(b, perm, axis=0)
    cused = w_p.shape[1]
    cpad = ((cused + 127) // 128) * 128
    if cpad != cused:                     # padded cols are zero, never decoded
        w_p = jnp.pad(w_p, ((0, 0), (0, cpad - cused)))
        b_p = jnp.pad(b_p, (0, cpad - cused))
    return w_p, b_p


def head_level(feat, w, b, anchors_wh, stride, num_classes, *, tile_m=1024):
    """Run the fused conv+decode kernel for one pyramid level.

    feat: (N, H, W, Cin) f32, w: (Cin, A*(5+NC+4)), b: (Cout,), anchors_wh: (A, 2)
    Returns (boxes, scores, obj, sigmas) with shape (N, H*W*A, {4,NC,1,4}),
    rows ordered (y, x, a) to match torch.where traversal of a (N, Y, X, A) tensor.
    """
    n, h, w_sp, cin = feat.shape
    a_num = anchors_wh.shape[0]
    hw = h * w_sp
    m_total = n * hw
    tm = m_total if m_total <= tile_m else tile_m   # tile_m is a multiple of 8

    # bf16 matmul operands halve the dominant HBM read; decode stays f32.
    feat2 = feat.reshape(m_total, cin).astype(jnp.bfloat16)
    w_p, b_p = _permute_columns(w, b, a_num, num_classes)
    w_p = w_p.astype(jnp.bfloat16)
    b_p = b_p.reshape(1, -1).astype(jnp.float32)
    cpad = w_p.shape[1]

    # Host-precomputed grid offsets stride*(g - 0.5), xy interleaved per anchor.
    idx = jnp.arange(hw, dtype=jnp.int32)
    gx = (idx % w_sp).astype(jnp.float32)
    gy = (idx // w_sp).astype(jnp.float32)
    goff = (jnp.stack([gx, gy], axis=1) - 0.5) * float(stride)     # (HW, 2)
    goff = jnp.tile(goff, (n, a_num))                              # (N*HW, 2A)

    awh = anchors_wh.astype(jnp.float32).reshape(1, 2 * a_num)     # [w0,h0,w1,h1,..]

    kernel = functools.partial(
        _head_level_kernel, stride=float(stride),
        num_anchors=a_num, num_classes=num_classes)

    boxes, scores, obj, sig = pl.pallas_call(
        kernel,
        out_shape=(
            jax.ShapeDtypeStruct((m_total, 4 * a_num), jnp.float32),
            jax.ShapeDtypeStruct((m_total, num_classes * a_num), jnp.float32),
            jax.ShapeDtypeStruct((m_total, a_num), jnp.float32),
            jax.ShapeDtypeStruct((m_total, 4 * a_num), jnp.float32),
        ),
        grid=(pl.cdiv(m_total, tm),),
        in_specs=[
            pl.BlockSpec((tm, cin), lambda i: (i, 0)),
            pl.BlockSpec((cin, cpad), lambda i: (0, 0)),
            pl.BlockSpec((1, cpad), lambda i: (0, 0)),
            pl.BlockSpec((tm, 2 * a_num), lambda i: (i, 0)),
            pl.BlockSpec((1, 2 * a_num), lambda i: (0, 0)),
        ],
        out_specs=(
            pl.BlockSpec((tm, 4 * a_num), lambda i: (i, 0)),
            pl.BlockSpec((tm, num_classes * a_num), lambda i: (i, 0)),
            pl.BlockSpec((tm, a_num), lambda i: (i, 0)),
            pl.BlockSpec((tm, 4 * a_num), lambda i: (i, 0)),
        ),
        compiler_params=pltpu.CompilerParams(
            dimension_semantics=("parallel",)),    # v7x: M tiles split across TCs
    )(feat2, w_p, b_p, goff, awh)

    # Anchor-major channel packing -> contiguous (free) reshapes; no transpose,
    # no post-kernel channel slicing.
    return (boxes.reshape(n, hw * a_num, 4),
            scores.reshape(n, hw * a_num, num_classes),
            obj.reshape(n, hw * a_num, 1),
            sig.reshape(n, hw * a_num, 4))


def head_forward(features, weights, biases, anchors, strides, num_classes,
                 score_thresh):
    """Dense equivalent of Head.forward in eval mode (predictor + decode).

    Returns (boxes_xyxy, class_scores, objectness, sigmas, score_mask),
    dense over all (level, cell, anchor) positions.
    """
    boxes, scores, objs, sigmas = [], [], [], []
    for feat, w, b, anch, stride in zip(features, weights, biases, anchors,
                                        strides):
        bx, sc, ob, sg = head_level(feat, w, b, anch, stride, num_classes)
        boxes.append(bx)
        scores.append(sc)
        objs.append(ob)
        sigmas.append(sg)
    boxes = jnp.concatenate(boxes, axis=1)
    scores = jnp.concatenate(scores, axis=1)
    objs = jnp.concatenate(objs, axis=1)
    sigmas = jnp.concatenate(sigmas, axis=1)
    # Dense stand-in for torch.where(pred[...,4] > t) & (logits > t).
    mask = (objs > score_thresh) & (scores > score_thresh)
    # TODO(synk): per-image batched NMS, box clamping to image_shapes, rescale by
    #             scale_factors, merge, and the training compute_loss (dynamic
    #             target matching) are dynamic-shape ops with no Pallas equivalent.
    return boxes, scores, objs, sigmas, mask


def _reference_level(feat, w, b, anchors_wh, stride, num_classes):
    """Pure-JAX reference for one level (matmul operands bf16-rounded like kernel)."""
    n, h, w_sp, cin = feat.shape
    a_num = anchors_wh.shape[0]
    cp = 5 + num_classes + 4
    f16 = feat.astype(jnp.bfloat16).astype(jnp.float32)
    w16 = w.astype(jnp.bfloat16).astype(jnp.float32)
    p = jnp.einsum("nhwc,cd->nhwd", f16, w16,
                   precision=lax.Precision.HIGHEST) + b
    p = p.reshape(n, h, w_sp, a_num, cp)
    raw, sig = p[..., :5 + num_classes], p[..., 5 + num_classes:]
    s = jax.nn.sigmoid(raw)
    gx = lax.broadcasted_iota(jnp.float32, (h, w_sp), 1)[None, :, :, None, None]
    gy = lax.broadcasted_iota(jnp.float32, (h, w_sp), 0)[None, :, :, None, None]
    grid_xy = jnp.concatenate([gx, gy], axis=-1)
    xy = (2.0 * s[..., :2] - 0.5 + grid_xy) * stride
    wh = 4.0 * s[..., 2:4] ** 2 * anchors_wh[None, None, None]
    x1y1, x2y2 = xy - 0.5 * wh, xy + 0.5 * wh
    obj = s[..., 4:5]
    cls = s[..., 5:5 + num_classes]
    out = jnp.concatenate([x1y1, x2y2, obj * cls, obj, sig], axis=-1)
    return out.reshape(n, h * w_sp * a_num, -1)


if __name__ == "__main__":
    key = jax.random.PRNGKey(0)
    N, CIN, NC, A = 2, 32, 4, 3
    strides = (8, 16)
    spatial = ((16, 16), (8, 8))
    anchors = jnp.array([[[10., 13.], [16., 30.], [33., 23.]],
                         [[30., 61.], [62., 45.], [59., 119.]]], jnp.float32)
    cout = A * (5 + NC + 4)
    score_thresh = 0.1

    keys = jax.random.split(key, 6)
    features = [jax.random.normal(keys[i], (N, h, w, CIN), jnp.float32)
                for i, (h, w) in enumerate(spatial)]
    weights = [0.05 * jax.random.normal(keys[2 + i], (CIN, cout), jnp.float32)
               for i in range(len(strides))]
    biases = [0.1 * jax.random.normal(keys[4 + i], (cout,), jnp.float32)
              for i in range(len(strides))]

    boxes, scores, objs, sigmas, mask = head_forward(
        features, weights, biases, anchors, strides, NC, score_thresh)
    jax.block_until_ready((boxes, scores, objs, sigmas, mask))

    # Verify against a pure-JAX reference of the same dense computation.
    ref = jnp.concatenate(
        [_reference_level(f, w, b, a, s, NC)
         for f, w, b, a, s in zip(features, weights, biases, anchors, strides)],
        axis=1)
    got = jnp.concatenate([boxes, scores, objs, sigmas], axis=-1)
    assert jnp.allclose(got, ref, atol=2e-3, rtol=2e-3), "mismatch vs reference"

    print("KERNEL_OK")
</pallas_src>

<mosaic_0001>
module attributes {stable_mosaic.version = 11 : i64} {
  func.func @_head_level_kernel(%arg0: i32, %arg1: memref<512x32xbf16, #tpu.memory_space<vmem>>, %arg2: memref<32x128xbf16, #tpu.memory_space<vmem>>, %arg3: memref<1x128xf32, #tpu.memory_space<vmem>>, %arg4: memref<512x6xf32, #tpu.memory_space<vmem>>, %arg5: memref<1x6xf32, #tpu.memory_space<vmem>>, %arg6: memref<512x12xf32, #tpu.memory_space<vmem>>, %arg7: memref<512x12xf32, #tpu.memory_space<vmem>>, %arg8: memref<512x3xf32, #tpu.memory_space<vmem>>, %arg9: memref<512x12xf32, #tpu.memory_space<vmem>>) attributes {dimension_semantics = [#tpu.dimension_semantics<parallel>], iteration_bounds = array<i64: 1>, scalar_prefetch = 0 : i64, scratch_operands = 0 : i64, tpu.core_type = #tpu.core_type<tc>, window_params = [{transform_indices = @transform_0, window_bounds = array<i64: 512, 32>}, {pipeline_mode = #tpu.pipeline_mode<synchronous>, transform_indices = @transform_1, window_bounds = array<i64: 32, 128>}, {pipeline_mode = #tpu.pipeline_mode<synchronous>, transform_indices = @transform_2, window_bounds = array<i64: 1, 128>}, {transform_indices = @transform_3, window_bounds = array<i64: 512, 6>}, {pipeline_mode = #tpu.pipeline_mode<synchronous>, transform_indices = @transform_4, window_bounds = array<i64: 1, 6>}, {transform_indices = @transform_5, window_bounds = array<i64: 512, 12>}, {transform_indices = @transform_6, window_bounds = array<i64: 512, 12>}, {transform_indices = @transform_7, window_bounds = array<i64: 512, 3>}, {transform_indices = @transform_8, window_bounds = array<i64: 512, 12>}]} {
    %c0 = arith.constant 0 : index
    %c0_0 = arith.constant 0 : index
    %0 = vector.load %arg1[%c0, %c0_0] : memref<512x32xbf16, #tpu.memory_space<vmem>>, vector<512x32xbf16>
    %c0_1 = arith.constant 0 : index
    %c0_2 = arith.constant 0 : index
    %1 = vector.load %arg2[%c0_1, %c0_2] : memref<32x128xbf16, #tpu.memory_space<vmem>>, vector<32x128xbf16>
    %cst = arith.constant dense<0.000000e+00> : vector<512x128xf32>
    %2 = tpu.matmul %0, %1, %cst {dimension_numbers = #tpu.dot_dimension_numbers<[1], [0], [0], [1], [0, 0, 1, 1], [], []>} : vector<512x32xbf16>, vector<32x128xbf16>, vector<512x128xf32> -> vector<512x128xf32>
    %c0_3 = arith.constant 0 : index
    %c0_4 = arith.constant 0 : index
    %3 = vector.load %arg3[%c0_3, %c0_4] : memref<1x128xf32, #tpu.memory_space<vmem>>, vector<1x128xf32>
    %4 = vector.broadcast %3 : vector<1x128xf32> to vector<512x128xf32>
    %5 = arith.addf %2, %4 : vector<512x128xf32>
    %6 = vector.extract_strided_slice %5 {offsets = [0, 0], sizes = [512, 27], strides = [1, 1]} : vector<512x128xf32> to vector<512x27xf32>
    %7 = arith.negf %6 : vector<512x27xf32>
    %8 = math.exp %7 : vector<512x27xf32>
    %cst_5 = arith.constant 1.000000e+00 : f32
    %9 = vector.broadcast %cst_5 : f32 to vector<512x27xf32>
    %10 = arith.addf %9, %8 : vector<512x27xf32>
    %11 = arith.divf %9, %10 : vector<512x27xf32>
    %12 = vector.extract_strided_slice %11 {offsets = [0, 0], sizes = [512, 6], strides = [1, 1]} : vector<512x27xf32> to vector<512x6xf32>
    %13 = vector.extract_strided_slice %11 {offsets = [0, 6], sizes = [512, 6], strides = [1, 1]} : vector<512x27xf32> to vector<512x6xf32>
    %14 = vector.extract_strided_slice %11 {offsets = [0, 12], sizes = [512, 3], strides = [1, 1]} : vector<512x27xf32> to vector<512x3xf32>
    %15 = vector.extract_strided_slice %11 {offsets = [0, 15], sizes = [512, 12], strides = [1, 1]} : vector<512x27xf32> to vector<512x12xf32>
    %16 = vector.extract_strided_slice %5 {offsets = [0, 27], sizes = [512, 12], strides = [1, 1]} : vector<512x128xf32> to vector<512x12xf32>
    %cst_6 = arith.constant 1.600000e+01 : f32
    %17 = vector.broadcast %cst_6 : f32 to vector<512x6xf32>
    %18 = arith.mulf %17, %12 : vector<512x6xf32>
    %c0_7 = arith.constant 0 : index
    %c0_8 = arith.constant 0 : index
    %19 = vector.load %arg4[%c0_7, %c0_8] : memref<512x6xf32, #tpu.memory_space<vmem>>, vector<512x6xf32>
    %20 = arith.addf %18, %19 : vector<512x6xf32>
    %cst_9 = arith.constant 2.000000e+00 : f32
    %21 = vector.broadcast %cst_9 : f32 to vector<512x6xf32>
    %22 = arith.mulf %21, %13 : vector<512x6xf32>
    %23 = arith.mulf %22, %22 : vector<512x6xf32>
    %c0_10 = arith.constant 0 : index
    %c0_11 = arith.constant 0 : index
    %24 = vector.load %arg5[%c0_10, %c0_11] : memref<1x6xf32, #tpu.memory_space<vmem>>, vector<1x6xf32>
    %25 = vector.broadcast %24 : vector<1x6xf32> to vector<512x6xf32>
    %26 = arith.mulf %23, %25 : vector<512x6xf32>
    %cst_12 = arith.constant 5.000000e-01 : f32
    %27 = vector.broadcast %cst_12 : f32 to vector<512x6xf32>
    %28 = arith.mulf %27, %26 : vector<512x6xf32>
    %29 = arith.subf %20, %28 : vector<512x6xf32>
    %cst_13 = arith.constant 5.000000e-01 : f32
    %30 = vector.broadcast %cst_13 : f32 to vector<512x6xf32>
    %31 = arith.mulf %30, %26 : vector<512x6xf32>
    %32 = arith.addf %20, %31 : vector<512x6xf32>
    %33 = vector.extract_strided_slice %29 {offsets = [0, 0], sizes = [512, 2], strides = [1, 1]} : vector<512x6xf32> to vector<512x2xf32>
    %34 = vector.extract_strided_slice %32 {offsets = [0, 0], sizes = [512, 2], strides = [1, 1]} : vector<512x6xf32> to vector<512x2xf32>
    %35 = vector.extract_strided_slice %29 {offsets = [0, 2], sizes = [512, 2], strides = [1, 1]} : vector<512x6xf32> to vector<512x2xf32>
    %36 = vector.extract_strided_slice %32 {offsets = [0, 2], sizes = [512, 2], strides = [1, 1]} : vector<512x6xf32> to vector<512x2xf32>
    %37 = vector.extract_strided_slice %29 {offsets = [0, 4], sizes = [512, 2], strides = [1, 1]} : vector<512x6xf32> to vector<512x2xf32>
    %38 = vector.extract_strided_slice %32 {offsets = [0, 4], sizes = [512, 2], strides = [1, 1]} : vector<512x6xf32> to vector<512x2xf32>
    %39 = tpu.concatenate %33, %34, %35, %36, %37, %38 in 1 : vector<512x2xf32>, vector<512x2xf32>, vector<512x2xf32>, vector<512x2xf32>, vector<512x2xf32>, vector<512x2xf32> -> vector<512x12xf32>
    %c0_14 = arith.constant 0 : index
    %c0_15 = arith.constant 0 : index
    %40 = vector.load %arg6[%c0_14, %c0_15] : memref<512x12xf32, #tpu.memory_space<vmem>>, vector<512x12xf32>
    tpu.vector_store %arg6[%c0_14, %c0_15], %39 {strides = array<i32>} : memref<512x12xf32, #tpu.memory_space<vmem>>, vector<512x12xf32>,
    %41 = vector.extract_strided_slice %15 {offsets = [0, 0], sizes = [512, 4], strides = [1, 1]} : vector<512x12xf32> to vector<512x4xf32>
    %42 = vector.extract_strided_slice %14 {offsets = [0, 0], sizes = [512, 1], strides = [1, 1]} : vector<512x3xf32> to vector<512x1xf32>
    %43 = vector.broadcast %42 : vector<512x1xf32> to vector<512x4xf32>
    %44 = arith.mulf %41, %43 : vector<512x4xf32>
    %45 = vector.extract_strided_slice %15 {offsets = [0, 4], sizes = [512, 4], strides = [1, 1]} : vector<512x12xf32> to vector<512x4xf32>
    %46 = vector.extract_strided_slice %14 {offsets = [0, 1], sizes = [512, 1], strides = [1, 1]} : vector<512x3xf32> to vector<512x1xf32>
    %47 = vector.broadcast %46 : vector<512x1xf32> to vector<512x4xf32>
    %48 = arith.mulf %45, %47 : vector<512x4xf32>
    %49 = vector.extract_strided_slice %15 {offsets = [0, 8], sizes = [512, 4], strides = [1, 1]} : vector<512x12xf32> to vector<512x4xf32>
    %50 = vector.extract_strided_slice %14 {offsets = [0, 2], sizes = [512, 1], strides = [1, 1]} : vector<512x3xf32> to vector<512x1xf32>
    %51 = vector.broadcast %50 : vector<512x1xf32> to vector<512x4xf32>
    %52 = arith.mulf %49, %51 : vector<512x4xf32>
    %53 = tpu.concatenate %44, %48, %52 in 1 : vector<512x4xf32>, vector<512x4xf32>, vector<512x4xf32> -> vector<512x12xf32>
    %c0_16 = arith.constant 0 : index
    %c0_17 = arith.constant 0 : index
    %54 = vector.load %arg7[%c0_16, %c0_17] : memref<512x12xf32, #tpu.memory_space<vmem>>, vector<512x12xf32>
    tpu.vector_store %arg7[%c0_16, %c0_17], %53 {strides = array<i32>} : memref<512x12xf32, #tpu.memory_space<vmem>>, vector<512x12xf32>,
    %c0_18 = arith.constant 0 : index
    %c0_19 = arith.constant 0 : index
    %55 = vector.load %arg8[%c0_18, %c0_19] : memref<512x3xf32, #tpu.memory_space<vmem>>, vector<512x3xf32>
    tpu.vector_store %arg8[%c0_18, %c0_19], %14 {strides = array<i32>} : memref<512x3xf32, #tpu.memory_space<vmem>>, vector<512x3xf32>,
    %c0_20 = arith.constant 0 : index
    %c0_21 = arith.constant 0 : index
    %56 = vector.load %arg9[%c0_20, %c0_21] : memref<512x12xf32, #tpu.memory_space<vmem>>, vector<512x12xf32>
    tpu.vector_store %arg9[%c0_20, %c0_21], %16 {strides = array<i32>} : memref<512x12xf32, #tpu.memory_space<vmem>>, vector<512x12xf32>,
    return
  }
  func.func @transform_0(%arg0: i32) -> (i32, i32) {
    %c0_i32 = arith.constant 0 : i32
    %c0_i32_0 = arith.constant 0 : i32
    return %arg0, %c0_i32 : i32, i32
  }
  func.func @transform_1(%arg0: i32) -> (i32, i32) {
    %c0_i32 = arith.constant 0 : i32
    %c0_i32_0 = arith.constant 0 : i32
    %c0_i32_1 = arith.constant 0 : i32
    return %c0_i32, %c0_i32_0 : i32, i32
  }
  func.func @transform_2(%arg0: i32) -> (i32, i32) {
    %c0_i32 = arith.constant 0 : i32
    %c0_i32_0 = arith.constant 0 : i32
    %c0_i32_1 = arith.constant 0 : i32
    return %c0_i32, %c0_i32_0 : i32, i32
  }
  func.func @transform_3(%arg0: i32) -> (i32, i32) {
    %c0_i32 = arith.constant 0 : i32
    %c0_i32_0 = arith.constant 0 : i32
    return %arg0, %c0_i32 : i32, i32
  }
  func.func @transform_4(%arg0: i32) -> (i32, i32) {
    %c0_i32 = arith.constant 0 : i32
    %c0_i32_0 = arith.constant 0 : i32
    %c0_i32_1 = arith.constant 0 : i32
    return %c0_i32, %c0_i32_0 : i32, i32
  }
  func.func @transform_5(%arg0: i32) -> (i32, i32) {
    %c0_i32 = arith.constant 0 : i32
    %c0_i32_0 = arith.constant 0 : i32
    return %arg0, %c0_i32 : i32, i32
  }
  func.func @transform_6(%arg0: i32) -> (i32, i32) {
    %c0_i32 = arith.constant 0 : i32
    %c0_i32_0 = arith.constant 0 : i32
    return %arg0, %c0_i32 : i32, i32
  }
  func.func @transform_7(%arg0: i32) -> (i32, i32) {
    %c0_i32 = arith.constant 0 : i32
    %c0_i32_0 = arith.constant 0 : i32
    return %arg0, %c0_i32 : i32, i32
  }
  func.func @transform_8(%arg0: i32) -> (i32, i32) {
    %c0_i32 = arith.constant 0 : i32
    %c0_i32_0 = arith.constant 0 : i32
    return %arg0, %c0_i32 : i32, i32
  }
}

</mosaic_0001>

<llo_original>
// kernel: tpu_custom_call.1
$region0: #{tpu_custom_call.1}
  #allocation0 [shape = 'u32[]', space=smem, size = 0x4, offset = 0x4, fixed_abs, tag = 'smem constant byte address 0x4 - core index']
  #allocation1 [shape = 'u32[144,128]{1,0:T(1,128)}', space=vmem, size = 0x12000, scoped, tag = 'internal scratch']
  %s0 = inlined_call_operand.vmem [shape: bf16[512,32], index: 0, kind: input, shape index: {}]
  %s1 = inlined_call_operand.vmem [shape: bf16[32,128], index: 1, kind: input, shape index: {}]
  %s2 = inlined_call_operand.vmem [shape: f32[1,128], index: 2, kind: input, shape index: {}]
  %s3 = inlined_call_operand.vmem [shape: f32[512,6], index: 3, kind: input, shape index: {}]
  %s4 = inlined_call_operand.vmem [shape: f32[1,6], index: 4, kind: input, shape index: {}]
  %s5 = inlined_call_operand.vmem [shape: f32[512,12], index: 5, kind: output, shape index: {0}]
  %s6 = inlined_call_operand.vmem [shape: f32[512,12], index: 6, kind: output, shape index: {1}]
  %s7 = inlined_call_operand.vmem [shape: f32[512,3], index: 7, kind: output, shape index: {2}]
  %s8 = inlined_call_operand.vmem [shape: f32[512,12], index: 8, kind: output, shape index: {3}]
  %9 = xla_tuple %s5, %s6, %s7, %s8
  %s10 = sld [smem:[#allocation0]]
  $region54: #{tpu_custom_call.1} parent=0
    _
  %s12 = ssub.s32 1, %s10
  %s13 = scalar_select 0, %s12, %s10
  // Predicated region
  $region2: #{tpu_custom_call.1} parent=0 // pred_check
    _
  $region3: #{tpu_custom_call.1} parent=0 // pred_check_branch
    %15 = sbr.rel (0) target = $region5
  $region4: #{tpu_custom_call.1} parent=0 // pred_region
    _
  $region5: #{tpu_custom_call.1} parent=0 // pred_fallthru
    _
  // Predicated region
  $region6: #{tpu_custom_call.1} parent=0 // pred_check
    _
  $region7: #{tpu_custom_call.1} parent=0 // pred_check_branch
    %17 = sbr.rel (0) target = $region9
  $region8: #{tpu_custom_call.1} parent=0 // pred_region
    _
  $region9: #{tpu_custom_call.1} parent=0 // pred_fallthru
    _
  // Predicated region
  $region10: #{tpu_custom_call.1} parent=0 // pred_check
    _
  $region11: #{tpu_custom_call.1} parent=0 // pred_check_branch
    %19 = sbr.rel (0) target = $region13
  $region12: #{tpu_custom_call.1} parent=0 // pred_region
    _
  $region13: #{tpu_custom_call.1} parent=0 // pred_fallthru
    _
  // Predicated region
  $region14: #{tpu_custom_call.1} parent=0 // pred_check
    _
  $region15: #{tpu_custom_call.1} parent=0 // pred_check_branch
    %21 = sbr.rel (0) target = $region17
  $region16: #{tpu_custom_call.1} parent=0 // pred_region
    _
  $region17: #{tpu_custom_call.1} parent=0 // pred_fallthru
    _
  // Predicated region
  $region18: #{tpu_custom_call.1} parent=0 // pred_check
    _
  $region19: #{tpu_custom_call.1} parent=0 // pred_check_branch
    %23 = sbr.rel (0) target = $region21
  $region20: #{tpu_custom_call.1} parent=0 // pred_region
    _
  $region21: #{tpu_custom_call.1} parent=0 // pred_fallthru
    _
  %v25 = vld [vmem:[%s0] sm:$0xf]
  %v26 = vld [vmem:[%s0 + $0x4] sm:$0xf]
  %v27 = vld [vmem:[%s0 + $0x8] sm:$0xf]
  %v28 = vld [vmem:[%s0 + $0xc] sm:$0xf]
  %v29 = vld [vmem:[%s0 + $0x10] sm:$0xf]
  %v30 = vld [vmem:[%s0 + $0x14] sm:$0xf]
  %v31 = vld [vmem:[%s0 + $0x18] sm:$0xf]
  %v32 = vld [vmem:[%s0 + $0x1c] sm:$0xf]
  %v33 = vld [vmem:[%s0 + $0x20] sm:$0xf]
  %v34 = vld [vmem:[%s0 + $0x24] sm:$0xf]
  %v35 = vld [vmem:[%s0 + $0x28] sm:$0xf]
  %v36 = vld [vmem:[%s0 + $0x2c] sm:$0xf]
  %v37 = vld [vmem:[%s0 + $0x30] sm:$0xf]
  %v38 = vld [vmem:[%s0 + $0x34] sm:$0xf]
  %v39 = vld [vmem:[%s0 + $0x38] sm:$0xf]
  %v40 = vld [vmem:[%s0 + $0x3c] sm:$0xf]
  %v41 = vld [vmem:[%s0 + $0x40] sm:$0xf]
  %v42 = vld [vmem:[%s0 + $0x44] sm:$0xf]
  %v43 = vld [vmem:[%s0 + $0x48] sm:$0xf]
  %v44 = vld [vmem:[%s0 + $0x4c] sm:$0xf]
  %v45 = vld [vmem:[%s0 + $0x50] sm:$0xf]
  %v46 = vld [vmem:[%s0 + $0x54] sm:$0xf]
  %v47 = vld [vmem:[%s0 + $0x58] sm:$0xf]
  %v48 = vld [vmem:[%s0 + $0x5c] sm:$0xf]
  %v49 = vld [vmem:[%s0 + $0x60] sm:$0xf]
  %v50 = vld [vmem:[%s0 + $0x64] sm:$0xf]
  %v51 = vld [vmem:[%s0 + $0x68] sm:$0xf]
  %v52 = vld [vmem:[%s0 + $0x6c] sm:$0xf]
  %v53 = vld [vmem:[%s0 + $0x70] sm:$0xf]
  %v54 = vld [vmem:[%s0 + $0x74] sm:$0xf]
  %v55 = vld [vmem:[%s0 + $0x78] sm:$0xf]
  %v56 = vld [vmem:[%s0 + $0x7c] sm:$0xf]
  %v57 = vld [vmem:[%s0 + $0x80] sm:$0xf]
  %v58 = vld [vmem:[%s0 + $0x84] sm:$0xf]
  %v59 = vld [vmem:[%s0 + $0x88] sm:$0xf]
  %v60 = vld [vmem:[%s0 + $0x8c] sm:$0xf]
  %v61 = vld [vmem:[%s0 + $0x90] sm:$0xf]
  %v62 = vld [vmem:[%s0 + $0x94] sm:$0xf]
  %v63 = vld [vmem:[%s0 + $0x98] sm:$0xf]
  %v64 = vld [vmem:[%s0 + $0x9c] sm:$0xf]
  %v65 = vld [vmem:[%s0 + $0xa0] sm:$0xf]
  %v66 = vld [vmem:[%s0 + $0xa4] sm:$0xf]
  %v67 = vld [vmem:[%s0 + $0xa8] sm:$0xf]
  %v68 = vld [vmem:[%s0 + $0xac] sm:$0xf]
  %v69 = vld [vmem:[%s0 + $0xb0] sm:$0xf]
  %v70 = vld [vmem:[%s0 + $0xb4] sm:$0xf]
  %v71 = vld [vmem:[%s0 + $0xb8] sm:$0xf]
  %v72 = vld [vmem:[%s0 + $0xbc] sm:$0xf]
  %v73 = vld [vmem:[%s0 + $0xc0] sm:$0xf]
  %v74 = vld [vmem:[%s0 + $0xc4] sm:$0xf]
  %v75 = vld [vmem:[%s0 + $0xc8] sm:$0xf]
  %v76 = vld [vmem:[%s0 + $0xcc] sm:$0xf]
  %v77 = vld [vmem:[%s0 + $0xd0] sm:$0xf]
  %v78 = vld [vmem:[%s0 + $0xd4] sm:$0xf]
  %v79 = vld [vmem:[%s0 + $0xd8] sm:$0xf]
  %v80 = vld [vmem:[%s0 + $0xdc] sm:$0xf]
  %v81 = vld [vmem:[%s0 + $0xe0] sm:$0xf]
  %v82 = vld [vmem:[%s0 + $0xe4] sm:$0xf]
  %v83 = vld [vmem:[%s0 + $0xe8] sm:$0xf]
  %v84 = vld [vmem:[%s0 + $0xec] sm:$0xf]
  %v85 = vld [vmem:[%s0 + $0xf0] sm:$0xf]
  %v86 = vld [vmem:[%s0 + $0xf4] sm:$0xf]
  %v87 = vld [vmem:[%s0 + $0xf8] sm:$0xf]
  %v88 = vld [vmem:[%s0 + $0xfc] sm:$0xf]
  %v89 = vld [vmem:[%s1] sm:$0xf]
  %v90 = vld [vmem:[%s1 + $0x4] sm:$0xf]
  %v91 = vld [vmem:[%s1 + $0x8] sm:$0xf]
  %v92 = vld [vmem:[%s1 + $0xc] sm:$0xf]
  %v93 = vld [vmem:[%s2] sm:$0x1]
  %v95 = vlaneseq
  %v96 = vshrl.u32 %v95, 7
  %v97 = vsub.s32 0, %v96
  %v98 = vrot.slane %v93, %v97
  %v164 = vunpack.c.l.b16 %v25
  %v165 = vunpack.c.l.b16 %v26
  %v166 = vunpack.c.l.b16 %v27
  %v167 = vunpack.c.l.b16 %v28
  %v168 = vunpack.c.l.b16 %v29
  %v169 = vunpack.c.l.b16 %v30
  %v170 = vunpack.c.l.b16 %v31
  %v171 = vunpack.c.l.b16 %v32
  %v172 = vunpack.c.l.b16 %v33
  %v173 = vunpack.c.l.b16 %v34
  %v174 = vunpack.c.l.b16 %v35
  %v175 = vunpack.c.l.b16 %v36
  %v176 = vunpack.c.l.b16 %v37
  %v177 = vunpack.c.l.b16 %v38
  %v178 = vunpack.c.l.b16 %v39
  %v179 = vunpack.c.l.b16 %v40
  %v180 = vunpack.c.l.b16 %v41
  %v181 = vunpack.c.l.b16 %v42
  %v182 = vunpack.c.l.b16 %v43
  %v183 = vunpack.c.l.b16 %v44
  %v184 = vunpack.c.l.b16 %v45
  %v185 = vunpack.c.l.b16 %v46
  %v186 = vunpack.c.l.b16 %v47
  %v187 = vunpack.c.l.b16 %v48
  %v188 = vunpack.c.l.b16 %v49
  %v189 = vunpack.c.l.b16 %v50
  %v190 = vunpack.c.l.b16 %v51
  %v191 = vunpack.c.l.b16 %v52
  %v192 = vunpack.c.l.b16 %v53
  %v193 = vunpack.c.l.b16 %v54
  %v194 = vunpack.c.l.b16 %v55
  %v195 = vunpack.c.l.b16 %v56
  %v196 = vunpack.c.l.b16 %v57
  %v197 = vunpack.c.l.b16 %v58
  %v198 = vunpack.c.l.b16 %v59
  %v199 = vunpack.c.l.b16 %v60
  %v200 = vunpack.c.l.b16 %v61
  %v201 = vunpack.c.l.b16 %v62
  %v202 = vunpack.c.l.b16 %v63
  %v203 = vunpack.c.l.b16 %v64
  %v204 = vunpack.c.l.b16 %v65
  %v205 = vunpack.c.l.b16 %v66
  %v206 = vunpack.c.l.b16 %v67
  %v207 = vunpack.c.l.b16 %v68
  %v208 = vunpack.c.l.b16 %v69
  %v209 = vunpack.c.l.b16 %v70
  %v210 = vunpack.c.l.b16 %v71
  %v211 = vunpack.c.l.b16 %v72
  %v212 = vunpack.c.l.b16 %v73
  %v213 = vunpack.c.l.b16 %v74
  %v214 = vunpack.c.l.b16 %v75
  %v215 = vunpack.c.l.b16 %v76
  %v216 = vunpack.c.l.b16 %v77
  %v217 = vunpack.c.l.b16 %v78
  %v218 = vunpack.c.l.b16 %v79
  %v219 = vunpack.c.l.b16 %v80
  %v220 = vunpack.c.l.b16 %v81
  %v221 = vunpack.c.l.b16 %v82
  %v222 = vunpack.c.l.b16 %v83
  %v223 = vunpack.c.l.b16 %v84
  %v224 = vunpack.c.l.b16 %v85
  %v225 = vunpack.c.l.b16 %v86
  %v226 = vunpack.c.l.b16 %v87
  %v227 = vunpack.c.l.b16 %v88
  %v228 = vpack.c.b16 %v165, %v164
  %v229 = vpack.c.b16 %v167, %v166
  %v230 = vpack.c.b16 %v169, %v168
  %v231 = vpack.c.b16 %v171, %v170
  %v232 = vpack.c.b16 %v173, %v172
  %v233 = vpack.c.b16 %v175, %v174
  %v234 = vpack.c.b16 %v177, %v176
  %v235 = vpack.c.b16 %v179, %v178
  %v236 = vpack.c.b16 %v181, %v180
  %v237 = vpack.c.b16 %v183, %v182
  %v238 = vpack.c.b16 %v185, %v184
  %v239 = vpack.c.b16 %v187, %v186
  %v240 = vpack.c.b16 %v189, %v188
  %v241 = vpack.c.b16 %v191, %v190
  %v242 = vpack.c.b16 %v193, %v192
  %v243 = vpack.c.b16 %v195, %v194
  %v244 = vpack.c.b16 %v197, %v196
  %v245 = vpack.c.b16 %v199, %v198
  %v246 = vpack.c.b16 %v201, %v200
  %v247 = vpack.c.b16 %v203, %v202
  %v248 = vpack.c.b16 %v205, %v204
  %v249 = vpack.c.b16 %v207, %v206
  %v250 = vpack.c.b16 %v209, %v208
  %v251 = vpack.c.b16 %v211, %v210
  %v252 = vpack.c.b16 %v213, %v212
  %v253 = vpack.c.b16 %v215, %v214
  %v254 = vpack.c.b16 %v217, %v216
  %v255 = vpack.c.b16 %v219, %v218
  %v256 = vpack.c.b16 %v221, %v220
  %v257 = vpack.c.b16 %v223, %v222
  %v258 = vpack.c.b16 %v225, %v224
  %v259 = vpack.c.b16 %v227, %v226
  %v264 = vunpack.c.l.b16 %v89
  %v265 = vunpack.c.l.b16 %v90
  %v266 = vunpack.c.l.b16 %v91
  %v267 = vunpack.c.l.b16 %v92
  %v268 = vpack.c.b16 %v265, %v264
  %v269 = vpack.c.b16 %v267, %v266
  %vm272 = vcmask 261120
  %v274 = vsel %vm272, %v228, 0
  %v277 = vsel %vm272, %v229, 0
  %v280 = vsel %vm272, %v230, 0
  %v283 = vsel %vm272, %v231, 0
  %v286 = vsel %vm272, %v232, 0
  %v289 = vsel %vm272, %v233, 0
  %v292 = vsel %vm272, %v234, 0
  %v295 = vsel %vm272, %v235, 0
  %v298 = vsel %vm272, %v236, 0
  %v301 = vsel %vm272, %v237, 0
  %v304 = vsel %vm272, %v238, 0
  %v307 = vsel %vm272, %v239, 0
  %v310 = vsel %vm272, %v240, 0
  %v313 = vsel %vm272, %v241, 0
  %v316 = vsel %vm272, %v242, 0
  %v319 = vsel %vm272, %v243, 0
  %v322 = vsel %vm272, %v244, 0
  %v325 = vsel %vm272, %v245, 0
  %v328 = vsel %vm272, %v246, 0
  %v331 = vsel %vm272, %v247, 0
  %v334 = vsel %vm272, %v248, 0
  %v337 = vsel %vm272, %v249, 0
  %v340 = vsel %vm272, %v250, 0
  %v343 = vsel %vm272, %v251, 0
  %v346 = vsel %vm272, %v252, 0
  %v349 = vsel %vm272, %v253, 0
  %v352 = vsel %vm272, %v254, 0
  %v355 = vsel %vm272, %v255, 0
  %v358 = vsel %vm272, %v256, 0
  %v361 = vsel %vm272, %v257, 0
  %v364 = vsel %vm272, %v258, 0
  %v367 = vsel %vm272, %v259, 0
  %369 = vmatprep.subr.bf16.mxu0 0
  %370 = vmatpush1.bf16.msra.mxu0 %v268
  %371 = vmatprep.subr.bf16.mxu0 0
  %372 = vmatpush1.bf16.msra.mxu0 %v269
  %373 = vmatprep.subr.bf16.mxu0 0
  %374 = vmatpush1.bf16.msra.mxu0 0
  %375 = vmatprep.subr.bf16.mxu0 0
  %376 = vmatpush1.bf16.msra.mxu0 0
  %377 = vmatprep.subr.bf16.mxu0 0
  %378 = vmatpush1.bf16.msra.mxu0 0
  %379 = vmatprep.subr.bf16.mxu0 0
  %380 = vmatpush1.bf16.msra.mxu0 0
  %381 = vmatprep.subr.bf16.mxu0 0
  %382 = vmatpush1.bf16.msra.mxu0 0
  %383 = vmatprep.subr.bf16.mxu0 0
  %384 = vmatpush1.bf16.msra.mxu0 0
  %385 = vmatprep.subr.bf16.mxu0 0
  %386 = vmatpush1.bf16.msra.mxu0 0
  %387 = vmatprep.subr.bf16.mxu0 0
  %388 = vmatpush1.bf16.msra.mxu0 0
  %389 = vmatprep.subr.bf16.mxu0 0
  %390 = vmatpush1.bf16.msra.mxu0 0
  %391 = vmatprep.subr.bf16.mxu0 0
  %392 = vmatpush1.bf16.msra.mxu0 0
  %393 = vmatprep.subr.bf16.mxu0 0
  %394 = vmatpush1.bf16.msra.mxu0 0
  %395 = vmatprep.subr.bf16.mxu0 0
  %396 = vmatpush1.bf16.msra.mxu0 0
  %397 = vmatprep.subr.bf16.mxu0 0
  %398 = vmatpush1.bf16.msra.mxu0 0
  %399 = vmatprep.subr.bf16.mxu0 0
  %400 = vmatpush1.bf16.msra.mxu0 0
  %401 = vmatprep.mubr.bf16.mxu0 0
  %402 = vmatmul.mubr.bf16.gmra.mrb[0].mxu0 %v274
  %v403 = vpop.f32.mrb[0].mxu0
  %v404 = vadd.f32 %v98, %v403
  %v405 = vpop.f32.mrb[0].mxu0
  %v406 = vpop.f32.mrb[0].mxu0
  %v407 = vadd.f32 %v98, %v406
  %v408 = vpop.f32.mrb[0].mxu0
  %409 = vmatprep.mubr.bf16.mxu0 0
  %410 = vmatmul.mubr.bf16.gmra.mrb[0].mxu0 %v277
  %v411 = vpop.f32.mrb[0].mxu0
  %v412 = vadd.f32 %v98, %v411
  %v413 = vpop.f32.mrb[0].mxu0
  %v414 = vpop.f32.mrb[0].mxu0
  %v415 = vadd.f32 %v98, %v414
  %v416 = vpop.f32.mrb[0].mxu0
  %417 = vmatprep.mubr.bf16.mxu0 0
  %418 = vmatmul.mubr.bf16.gmra.mrb[0].mxu0 %v280
  %v419 = vpop.f32.mrb[0].mxu0
  %v420 = vadd.f32 %v98, %v419
  %v421 = vpop.f32.mrb[0].mxu0
  %v422 = vpop.f32.mrb[0].mxu0
  %v423 = vadd.f32 %v98, %v422
  %v424 = vpop.f32.mrb[0].mxu0
  %425 = vmatprep.mubr.bf16.mxu0 0
  %426 = vmatmul.mubr.bf16.gmra.mrb[0].mxu0 %v283
  %v427 = vpop.f32.mrb[0].mxu0
  %v428 = vadd.f32 %v98, %v427
  %v429 = vpop.f32.mrb[0].mxu0
  %v430 = vpop.f32.mrb[0].mxu0
  %v431 = vadd.f32 %v98, %v430
  %v432 = vpop.f32.mrb[0].mxu0
  %433 = vmatprep.mubr.bf16.mxu0 0
  %434 = vmatmul.mubr.bf16.gmra.mrb[0].mxu0 %v286
  %v435 = vpop.f32.mrb[0].mxu0
  %v436 = vadd.f32 %v98, %v435
  %v437 = vpop.f32.mrb[0].mxu0
  %v438 = vpop.f32.mrb[0].mxu0
  %v439 = vadd.f32 %v98, %v438
  %v440 = vpop.f32.mrb[0].mxu0
  %441 = vmatprep.mubr.bf16.mxu0 0
  %442 = vmatmul.mubr.bf16.gmra.mrb[0].mxu0 %v289
  %v443 = vpop.f32.mrb[0].mxu0
  %v444 = vadd.f32 %v98, %v443
  %v445 = vpop.f32.mrb[0].mxu0
  %v446 = vpop.f32.mrb[0].mxu0
  %v447 = vadd.f32 %v98, %v446
  %v448 = vpop.f32.mrb[0].mxu0
  %449 = vmatprep.mubr.bf16.mxu0 0
  %450 = vmatmul.mubr.bf16.gmra.mrb[0].mxu0 %v292
  %v451 = vpop.f32.mrb[0].mxu0
  %v452 = vadd.f32 %v98, %v451
  %v453 = vpop.f32.mrb[0].mxu0
  %v454 = vpop.f32.mrb[0].mxu0
  %v455 = vadd.f32 %v98, %v454
  %v456 = vpop.f32.mrb[0].mxu0
  %457 = vmatprep.mubr.bf16.mxu0 0
  %458 = vmatmul.mubr.bf16.gmra.mrb[0].mxu0 %v295
  %v459 = vpop.f32.mrb[0].mxu0
  %v460 = vadd.f32 %v98, %v459
  %v461 = vpop.f32.mrb[0].mxu0
  %v462 = vpop.f32.mrb[0].mxu0
  %v463 = vadd.f32 %v98, %v462
  %v464 = vpop.f32.mrb[0].mxu0
  %465 = vmatprep.mubr.bf16.mxu0 0
  %466 = vmatmul.mubr.bf16.gmra.mrb[0].mxu0 %v298
  %v467 = vpop.f32.mrb[0].mxu0
  %v468 = vadd.f32 %v98, %v467
  %v469 = vpop.f32.mrb[0].mxu0
  %v470 = vpop.f32.mrb[0].mxu0
  %v471 = vadd.f32 %v98, %v470
  %v472 = vpop.f32.mrb[0].mxu0
  %473 = vmatprep.mubr.bf16.mxu0 0
  %474 = vmatmul.mubr.bf16.gmra.mrb[0].mxu0 %v301
  %v475 = vpop.f32.mrb[0].mxu0
  %v476 = vadd.f32 %v98, %v475
  %v477 = vpop.f32.mrb[0].mxu0
  %v478 = vpop.f32.mrb[0].mxu0
  %v479 = vadd.f32 %v98, %v478
  %v480 = vpop.f32.mrb[0].mxu0
  %481 = vmatprep.mubr.bf16.mxu0 0
  %482 = vmatmul.mubr.bf16.gmra.mrb[0].mxu0 %v304
  %v483 = vpop.f32.mrb[0].mxu0
  %v484 = vadd.f32 %v98, %v483
  %v485 = vpop.f32.mrb[0].mxu0
  %v486 = vpop.f32.mrb[0].mxu0
  %v487 = vadd.f32 %v98, %v486
  %v488 = vpop.f32.mrb[0].mxu0
  %489 = vmatprep.mubr.bf16.mxu0 0
  %490 = vmatmul.mubr.bf16.gmra.mrb[0].mxu0 %v307
  %v491 = vpop.f32.mrb[0].mxu0
  %v492 = vadd.f32 %v98, %v491
  %v493 = vpop.f32.mrb[0].mxu0
  %v494 = vpop.f32.mrb[0].mxu0
  %v495 = vadd.f32 %v98, %v494
  %v496 = vpop.f32.mrb[0].mxu0
  %497 = vmatprep.mubr.bf16.mxu0 0
  %498 = vmatmul.mubr.bf16.gmra.mrb[0].mxu0 %v310
  %v499 = vpop.f32.mrb[0].mxu0
  %v500 = vadd.f32 %v98, %v499
  %v501 = vpop.f32.mrb[0].mxu0
  %v502 = vpop.f32.mrb[0].mxu0
  %v503 = vadd.f32 %v98, %v502
  %v504 = vpop.f32.mrb[0].mxu0
  %505 = vmatprep.mubr.bf16.mxu0 0
  %506 = vmatmul.mubr.bf16.gmra.mrb[0].mxu0 %v313
  %v507 = vpop.f32.mrb[0].mxu0
  %v508 = vadd.f32 %v98, %v507
  %v509 = vpop.f32.mrb[0].mxu0
  %v510 = vpop.f32.mrb[0].mxu0
  %v511 = vadd.f32 %v98, %v510
  %v512 = vpop.f32.mrb[0].mxu0
  %513 = vmatprep.mubr.bf16.mxu0 0
  %514 = vmatmul.mubr.bf16.gmra.mrb[0].mxu0 %v316
  %v515 = vpop.f32.mrb[0].mxu0
  %v516 = vadd.f32 %v98, %v515
  %v517 = vpop.f32.mrb[0].mxu0
  %v518 = vpop.f32.mrb[0].mxu0
  %v519 = vadd.f32 %v98, %v518
  %v520 = vpop.f32.mrb[0].mxu0
  %521 = vmatprep.mubr.bf16.mxu0 0
  %522 = vmatmul.mubr.bf16.gmra.mrb[0].mxu0 %v319
  %v523 = vpop.f32.mrb[0].mxu0
  %v524 = vadd.f32 %v98, %v523
  %v525 = vpop.f32.mrb[0].mxu0
  %v526 = vpop.f32.mrb[0].mxu0
  %v527 = vadd.f32 %v98, %v526
  %v528 = vpop.f32.mrb[0].mxu0
  %529 = vmatprep.mubr.bf16.mxu0 0
  %530 = vmatmul.mubr.bf16.gmra.mrb[0].mxu0 %v322
  %v531 = vpop.f32.mrb[0].mxu0
  %v532 = vadd.f32 %v98, %v531
  %v533 = vpop.f32.mrb[0].mxu0
  %v534 = vpop.f32.mrb[0].mxu0
  %v535 = vadd.f32 %v98, %v534
  %v536 = vpop.f32.mrb[0].mxu0
  %537 = vmatprep.mubr.bf16.mxu0 0
  %538 = vmatmul.mubr.bf16.gmra.mrb[0].mxu0 %v325
  %v539 = vpop.f32.mrb[0].mxu0
  %v540 = vadd.f32 %v98, %v539
  %v541 = vpop.f32.mrb[0].mxu0
  %v542 = vpop.f32.mrb[0].mxu0
  %v543 = vadd.f32 %v98, %v542
  %v544 = vpop.f32.mrb[0].mxu0
  %545 = vmatprep.mubr.bf16.mxu0 0
  %546 = vmatmul.mubr.bf16.gmra.mrb[0].mxu0 %v328
  %v547 = vpop.f32.mrb[0].mxu0
  %v548 = vadd.f32 %v98, %v547
  %v549 = vpop.f32.mrb[0].mxu0
  %v550 = vpop.f32.mrb[0].mxu0
  %v551 = vadd.f32 %v98, %v550
  %v552 = vpop.f32.mrb[0].mxu0
  %553 = vmatprep.mubr.bf16.mxu0 0
  %554 = vmatmul.mubr.bf16.gmra.mrb[0].mxu0 %v331
  %v555 = vpop.f32.mrb[0].mxu0
  %v556 = vadd.f32 %v98, %v555
  %v557 = vpop.f32.mrb[0].mxu0
  %v558 = vpop.f32.mrb[0].mxu0
  %v559 = vadd.f32 %v98, %v558
  %v560 = vpop.f32.mrb[0].mxu0
  %561 = vmatprep.mubr.bf16.mxu0 0
  %562 = vmatmul.mubr.bf16.gmra.mrb[0].mxu0 %v334
  %v563 = vpop.f32.mrb[0].mxu0
  %v564 = vadd.f32 %v98, %v563
  %v565 = vpop.f32.mrb[0].mxu0
  %v566 = vpop.f32.mrb[0].mxu0
  %v567 = vadd.f32 %v98, %v566
  %v568 = vpop.f32.mrb[0].mxu0
  %569 = vmatprep.mubr.bf16.mxu0 0
  %570 = vmatmul.mubr.bf16.gmra.mrb[0].mxu0 %v337
  %v571 = vpop.f32.mrb[0].mxu0
  %v572 = vadd.f32 %v98, %v571
  %v573 = vpop.f32.mrb[0].mxu0
  %v574 = vpop.f32.mrb[0].mxu0
  %v575 = vadd.f32 %v98, %v574
  %v576 = vpop.f32.mrb[0].mxu0
  %577 = vmatprep.mubr.bf16.mxu0 0
  %578 = vmatmul.mubr.bf16.gmra.mrb[0].mxu0 %v340
  %v579 = vpop.f32.mrb[0].mxu0
  %v580 = vadd.f32 %v98, %v579
  %v581 = vpop.f32.mrb[0].mxu0
  %v582 = vpop.f32.mrb[0].mxu0
  %v583 = vadd.f32 %v98, %v582
  %v584 = vpop.f32.mrb[0].mxu0
  %585 = vmatprep.mubr.bf16.mxu0 0
  %586 = vmatmul.mubr.bf16.gmra.mrb[0].mxu0 %v343
  %v587 = vpop.f32.mrb[0].mxu0
  %v588 = vadd.f32 %v98, %v587
  %v589 = vpop.f32.mrb[0].mxu0
  %v590 = vpop.f32.mrb[0].mxu0
  %v591 = vadd.f32 %v98, %v590
  %v592 = vpop.f32.mrb[0].mxu0
  %593 = vmatprep.mubr.bf16.mxu0 0
  %594 = vmatmul.mubr.bf16.gmra.mrb[0].mxu0 %v346
  %v595 = vpop.f32.mrb[0].mxu0
  %v596 = vadd.f32 %v98, %v595
  %v597 = vpop.f32.mrb[0].mxu0
  %v598 = vpop.f32.mrb[0].mxu0
  %v599 = vadd.f32 %v98, %v598
  %v600 = vpop.f32.mrb[0].mxu0
  %601 = vmatprep.mubr.bf16.mxu0 0
  %602 = vmatmul.mubr.bf16.gmra.mrb[0].mxu0 %v349
  %v603 = vpop.f32.mrb[0].mxu0
  %v604 = vadd.f32 %v98, %v603
  %v605 = vpop.f32.mrb[0].mxu0
  %v606 = vpop.f32.mrb[0].mxu0
  %v607 = vadd.f32 %v98, %v606
  %v608 = vpop.f32.mrb[0].mxu0
  %609 = vmatprep.mubr.bf16.mxu0 0
  %610 = vmatmul.mubr.bf16.gmra.mrb[0].mxu0 %v352
  %v611 = vpop.f32.mrb[0].mxu0
  %v612 = vadd.f32 %v98, %v611
  %v613 = vpop.f32.mrb[0].mxu0
  %v614 = vpop.f32.mrb[0].mxu0
  %v615 = vadd.f32 %v98, %v614
  %v616 = vpop.f32.mrb[0].mxu0
  %617 = vmatprep.mubr.bf16.mxu0 0
  %618 = vmatmul.mubr.bf16.gmra.mrb[0].mxu0 %v355
  %v619 = vpop.f32.mrb[0].mxu0
  %v620 = vadd.f32 %v98, %v619
  %v621 = vpop.f32.mrb[0].mxu0
  %v622 = vpop.f32.mrb[0].mxu0
  %v623 = vadd.f32 %v98, %v622
  %v624 = vpop.f32.mrb[0].mxu0
  %625 = vmatprep.mubr.bf16.mxu0 0
  %626 = vmatmul.mubr.bf16.gmra.mrb[0].mxu0 %v358
  %v627 = vpop.f32.mrb[0].mxu0
  %v628 = vadd.f32 %v98, %v627
  %v629 = vpop.f32.mrb[0].mxu0
  %v630 = vpop.f32.mrb[0].mxu0
  %v631 = vadd.f32 %v98, %v630
  %v632 = vpop.f32.mrb[0].mxu0
  %633 = vmatprep.mubr.bf16.mxu0 0
  %634 = vmatmul.mubr.bf16.gmra.mrb[0].mxu0 %v361
  %v635 = vpop.f32.mrb[0].mxu0
  %v636 = vadd.f32 %v98, %v635
  %v637 = vpop.f32.mrb[0].mxu0
  %v638 = vpop.f32.mrb[0].mxu0
  %v639 = vadd.f32 %v98, %v638
  %v640 = vpop.f32.mrb[0].mxu0
  %641 = vmatprep.mubr.bf16.mxu0 0
  %642 = vmatmul.mubr.bf16.gmra.mrb[0].mxu0 %v364
  %v643 = vpop.f32.mrb[0].mxu0
  %v644 = vadd.f32 %v98, %v643
  %v645 = vpop.f32.mrb[0].mxu0
  %v646 = vpop.f32.mrb[0].mxu0
  %v647 = vadd.f32 %v98, %v646
  %v648 = vpop.f32.mrb[0].mxu0
  %649 = vmatprep.mubr.bf16.mxu0 0
  %650 = vmatmul.mubr.bf16.gmra.mrb[0].mxu0 %v367
  %v651 = vpop.f32.mrb[0].mxu0
  %v652 = vadd.f32 %v98, %v651
  %v653 = vpop.f32.mrb[0].mxu0
  %v654 = vpop.f32.mrb[0].mxu0
  %v655 = vadd.f32 %v98, %v654
  %v656 = vpop.f32.mrb[0].mxu0
  %657 = vdwg.mxu0
  %v658 = vxor.u32 %v404, 2147483648
  %v659 = vxor.u32 %v407, 2147483648
  %v660 = vxor.u32 %v412, 2147483648
  %v661 = vxor.u32 %v415, 2147483648
  %v662 = vxor.u32 %v420, 2147483648
  %v663 = vxor.u32 %v423, 2147483648
  %v664 = vxor.u32 %v428, 2147483648
  %v665 = vxor.u32 %v431, 2147483648
  %v666 = vxor.u32 %v436, 2147483648
  %v667 = vxor.u32 %v439, 2147483648
  %v668 = vxor.u32 %v444, 2147483648
  %v669 = vxor.u32 %v447, 2147483648
  %v670 = vxor.u32 %v452, 2147483648
  %v671 = vxor.u32 %v455, 2147483648
  %v672 = vxor.u32 %v460, 2147483648
  %v673 = vxor.u32 %v463, 2147483648
  %v674 = vxor.u32 %v468, 2147483648
  %v675 = vxor.u32 %v471, 2147483648
  %v676 = vxor.u32 %v476, 2147483648
  %v677 = vxor.u32 %v479, 2147483648
  %v678 = vxor.u32 %v484, 2147483648
  %v679 = vxor.u32 %v487, 2147483648
  %v680 = vxor.u32 %v492, 2147483648
  %v681 = vxor.u32 %v495, 2147483648
  %v682 = vxor.u32 %v500, 2147483648
  %v683 = vxor.u32 %v503, 2147483648
  %v684 = vxor.u32 %v508, 2147483648
  %v685 = vxor.u32 %v511, 2147483648
  %v686 = vxor.u32 %v516, 2147483648
  %v687 = vxor.u32 %v519, 2147483648
  %v688 = vxor.u32 %v524, 2147483648
  %v689 = vxor.u32 %v527, 2147483648
  %v690 = vxor.u32 %v532, 2147483648
  %v691 = vxor.u32 %v535, 2147483648
  %v692 = vxor.u32 %v540, 2147483648
  %v693 = vxor.u32 %v543, 2147483648
  %v694 = vxor.u32 %v548, 2147483648
  %v695 = vxor.u32 %v551, 2147483648
  %v696 = vxor.u32 %v556, 2147483648
  %v697 = vxor.u32 %v559, 2147483648
  %v698 = vxor.u32 %v564, 2147483648
  %v699 = vxor.u32 %v567, 2147483648
  %v700 = vxor.u32 %v572, 2147483648
  %v701 = vxor.u32 %v575, 2147483648
  %v702 = vxor.u32 %v580, 2147483648
  %v703 = vxor.u32 %v583, 2147483648
  %v704 = vxor.u32 %v588, 2147483648
  %v705 = vxor.u32 %v591, 2147483648
  %v706 = vxor.u32 %v596, 2147483648
  %v707 = vxor.u32 %v599, 2147483648
  %v708 = vxor.u32 %v604, 2147483648
  %v709 = vxor.u32 %v607, 2147483648
  %v710 = vxor.u32 %v612, 2147483648
  %v711 = vxor.u32 %v615, 2147483648
  %v712 = vxor.u32 %v620, 2147483648
  %v713 = vxor.u32 %v623, 2147483648
  %v714 = vxor.u32 %v628, 2147483648
  %v715 = vxor.u32 %v631, 2147483648
  %v716 = vxor.u32 %v636, 2147483648
  %v717 = vxor.u32 %v639, 2147483648
  %v718 = vxor.u32 %v644, 2147483648
  %v719 = vxor.u32 %v647, 2147483648
  %v720 = vxor.u32 %v652, 2147483648
  %v721 = vxor.u32 %v655, 2147483648
  %v722 = vmul.f32 %v658, 1.442695
  %v723 = vpow.pop %v722
  %v724 = vmul.f32 %v659, 1.442695
  %v725 = vpow.pop %v724
  %v726 = vmul.f32 %v660, 1.442695
  %v727 = vpow.pop %v726
  %v728 = vmul.f32 %v661, 1.442695
  %v729 = vpow.pop %v728
  %v730 = vmul.f32 %v662, 1.442695
  %v731 = vpow.pop %v730
  %v732 = vmul.f32 %v663, 1.442695
  %v733 = vpow.pop %v732
  %v734 = vmul.f32 %v664, 1.442695
  %v735 = vpow.pop %v734
  %v736 = vmul.f32 %v665, 1.442695
  %v737 = vpow.pop %v736
  %v738 = vmul.f32 %v666, 1.442695
  %v739 = vpow.pop %v738
  %v740 = vmul.f32 %v667, 1.442695
  %v741 = vpow.pop %v740
  %v742 = vmul.f32 %v668, 1.442695
  %v743 = vpow.pop %v742
  %v744 = vmul.f32 %v669, 1.442695
  %v745 = vpow.pop %v744
  %v746 = vmul.f32 %v670, 1.442695
  %v747 = vpow.pop %v746
  %v748 = vmul.f32 %v671, 1.442695
  %v749 = vpow.pop %v748
  %v750 = vmul.f32 %v672, 1.442695
  %v751 = vpow.pop %v750
  %v752 = vmul.f32 %v673, 1.442695
  %v753 = vpow.pop %v752
  %v754 = vmul.f32 %v674, 1.442695
  %v755 = vpow.pop %v754
  %v756 = vmul.f32 %v675, 1.442695
  %v757 = vpow.pop %v756
  %v758 = vmul.f32 %v676, 1.442695
  %v759 = vpow.pop %v758
  %v760 = vmul.f32 %v677, 1.442695
  %v761 = vpow.pop %v760
  %v762 = vmul.f32 %v678, 1.442695
  %v763 = vpow.pop %v762
  %v764 = vmul.f32 %v679, 1.442695
  %v765 = vpow.pop %v764
  %v766 = vmul.f32 %v680, 1.442695
  %v767 = vpow.pop %v766
  %v768 = vmul.f32 %v681, 1.442695
  %v769 = vpow.pop %v768
  %v770 = vmul.f32 %v682, 1.442695
  %v771 = vpow.pop %v770
  %v772 = vmul.f32 %v683, 1.442695
  %v773 = vpow.pop %v772
  %v774 = vmul.f32 %v684, 1.442695
  %v775 = vpow.pop %v774
  %v776 = vmul.f32 %v685, 1.442695
  %v777 = vpow.pop %v776
  %v778 = vmul.f32 %v686, 1.442695
  %v779 = vpow.pop %v778
  %v780 = vmul.f32 %v687, 1.442695
  %v781 = vpow.pop %v780
  %v782 = vmul.f32 %v688, 1.442695
  %v783 = vpow.pop %v782
  %v784 = vmul.f32 %v689, 1.442695
  %v785 = vpow.pop %v784
  %v786 = vmul.f32 %v690, 1.442695
  %v787 = vpow.pop %v786
  %v788 = vmul.f32 %v691, 1.442695
  %v789 = vpow.pop %v788
  %v790 = vmul.f32 %v692, 1.442695
  %v791 = vpow.pop %v790
  %v792 = vmul.f32 %v693, 1.442695
  %v793 = vpow.pop %v792
  %v794 = vmul.f32 %v694, 1.442695
  %v795 = vpow.pop %v794
  %v796 = vmul.f32 %v695, 1.442695
  %v797 = vpow.pop %v796
  %v798 = vmul.f32 %v696, 1.442695
  %v799 = vpow.pop %v798
  %v800 = vmul.f32 %v697, 1.442695
  %v801 = vpow.pop %v800
  %v802 = vmul.f32 %v698, 1.442695
  %v803 = vpow.pop %v802
  %v804 = vmul.f32 %v699, 1.442695
  %v805 = vpow.pop %v804
  %v806 = vmul.f32 %v700, 1.442695
  %v807 = vpow.pop %v806
  %v808 = vmul.f32 %v701, 1.442695
  %v809 = vpow.pop %v808
  %v810 = vmul.f32 %v702, 1.442695
  %v811 = vpow.pop %v810
  %v812 = vmul.f32 %v703, 1.442695
  %v813 = vpow.pop %v812
  %v814 = vmul.f32 %v704, 1.442695
  %v815 = vpow.pop %v814
  %v816 = vmul.f32 %v705, 1.442695
  %v817 = vpow.pop %v816
  %v818 = vmul.f32 %v706, 1.442695
  %v819 = vpow.pop %v818
  %v820 = vmul.f32 %v707, 1.442695
  %v821 = vpow.pop %v820
  %v822 = vmul.f32 %v708, 1.442695
  %v823 = vpow.pop %v822
  %v824 = vmul.f32 %v709, 1.442695
  %v825 = vpow.pop %v824
  %v826 = vmul.f32 %v710, 1.442695
  %v827 = vpow.pop %v826
  %v828 = vmul.f32 %v711, 1.442695
  %v829 = vpow.pop %v828
  %v830 = vmul.f32 %v712, 1.442695
  %v831 = vpow.pop %v830
  %v832 = vmul.f32 %v713, 1.442695
  %v833 = vpow.pop %v832
  %v834 = vmul.f32 %v714, 1.442695
  %v835 = vpow.pop %v834
  %v836 = vmul.f32 %v715, 1.442695
  %v837 = vpow.pop %v836
  %v838 = vmul.f32 %v716, 1.442695
  %v839 = vpow.pop %v838
  %v840 = vmul.f32 %v717, 1.442695
  %v841 = vpow.pop %v840
  %v842 = vmul.f32 %v718, 1.442695
  %v843 = vpow.pop %v842
  %v844 = vmul.f32 %v719, 1.442695
  %v845 = vpow.pop %v844
  %v846 = vmul.f32 %v720, 1.442695
  %v847 = vpow.pop %v846
  %v848 = vmul.f32 %v721, 1.442695
  %v849 = vpow.pop %v848
  %v850 = vadd.f32 %v723, 1.0
  %v851 = vadd.f32 %v725, 1.0
  %v852 = vadd.f32 %v727, 1.0
  %v853 = vadd.f32 %v729, 1.0
  %v854 = vadd.f32 %v731, 1.0
  %v855 = vadd.f32 %v733, 1.0
  %v856 = vadd.f32 %v735, 1.0
  %v857 = vadd.f32 %v737, 1.0
  %v858 = vadd.f32 %v739, 1.0
  %v859 = vadd.f32 %v741, 1.0
  %v860 = vadd.f32 %v743, 1.0
  %v861 = vadd.f32 %v745, 1.0
  %v862 = vadd.f32 %v747, 1.0
  %v863 = vadd.f32 %v749, 1.0
  %v864 = vadd.f32 %v751, 1.0
  %v865 = vadd.f32 %v753, 1.0
  %v866 = vadd.f32 %v755, 1.0
  %v867 = vadd.f32 %v757, 1.0
  %v868 = vadd.f32 %v759, 1.0
  %v869 = vadd.f32 %v761, 1.0
  %v870 = vadd.f32 %v763, 1.0
  %v871 = vadd.f32 %v765, 1.0
  %v872 = vadd.f32 %v767, 1.0
  %v873 = vadd.f32 %v769, 1.0
  %v874 = vadd.f32 %v771, 1.0
  %v875 = vadd.f32 %v773, 1.0
  %v876 = vadd.f32 %v775, 1.0
  %v877 = vadd.f32 %v777, 1.0
  %v878 = vadd.f32 %v779, 1.0
  %v879 = vadd.f32 %v781, 1.0
  %v880 = vadd.f32 %v783, 1.0
  %v881 = vadd.f32 %v785, 1.0
  %v882 = vadd.f32 %v787, 1.0
  %v883 = vadd.f32 %v789, 1.0
  %v884 = vadd.f32 %v791, 1.0
  %v885 = vadd.f32 %v793, 1.0
  %v886 = vadd.f32 %v795, 1.0
  %v887 = vadd.f32 %v797, 1.0
  %v888 = vadd.f32 %v799, 1.0
  %v889 = vadd.f32 %v801, 1.0
  %v890 = vadd.f32 %v803, 1.0
  %v891 = vadd.f32 %v805, 1.0
  %v892 = vadd.f32 %v807, 1.0
  %v893 = vadd.f32 %v809, 1.0
  %v894 = vadd.f32 %v811, 1.0
  %v895 = vadd.f32 %v813, 1.0
  %v896 = vadd.f32 %v815, 1.0
  %v897 = vadd.f32 %v817, 1.0
  %v898 = vadd.f32 %v819, 1.0
  %v899 = vadd.f32 %v821, 1.0
  %v900 = vadd.f32 %v823, 1.0
  %v901 = vadd.f32 %v825, 1.0
  %v902 = vadd.f32 %v827, 1.0
  %v903 = vadd.f32 %v829, 1.0
  %v904 = vadd.f32 %v831, 1.0
  %v905 = vadd.f32 %v833, 1.0
  %v906 = vadd.f32 %v835, 1.0
  %v907 = vadd.f32 %v837, 1.0
  %v908 = vadd.f32 %v839, 1.0
  %v909 = vadd.f32 %v841, 1.0
  %v910 = vadd.f32 %v843, 1.0
  %v911 = vadd.f32 %v845, 1.0
  %v912 = vadd.f32 %v847, 1.0
  %v913 = vadd.f32 %v849, 1.0
  %v914 = vrcp.pop %v850
  %v915 = vmul.f32 1.0, %v914
  %v916 = vrcp.pop %v851
  %v917 = vmul.f32 1.0, %v916
  %v918 = vrcp.pop %v852
  %v919 = vmul.f32 1.0, %v918
  %v920 = vrcp.pop %v853
  %v921 = vmul.f32 1.0, %v920
  %v922 = vrcp.pop %v854
  %v923 = vmul.f32 1.0, %v922
  %v924 = vrcp.pop %v855
  %v925 = vmul.f32 1.0, %v924
  %v926 = vrcp.pop %v856
  %v927 = vmul.f32 1.0, %v926
  %v928 = vrcp.pop %v857
  %v929 = vmul.f32 1.0, %v928
  %v930 = vrcp.pop %v858
  %v931 = vmul.f32 1.0, %v930
  %v932 = vrcp.pop %v859
  %v933 = vmul.f32 1.0, %v932
  %v934 = vrcp.pop %v860
  %v935 = vmul.f32 1.0, %v934
  %v936 = vrcp.pop %v861
  %v937 = vmul.f32 1.0, %v936
  %v938 = vrcp.pop %v862
  %v939 = vmul.f32 1.0, %v938
  %v940 = vrcp.pop %v863
  %v941 = vmul.f32 1.0, %v940
  %v942 = vrcp.pop %v864
  %v943 = vmul.f32 1.0, %v942
  %v944 = vrcp.pop %v865
  %v945 = vmul.f32 1.0, %v944
  %v946 = vrcp.pop %v866
  %v947 = vmul.f32 1.0, %v946
  %v948 = vrcp.pop %v867
  %v949 = vmul.f32 1.0, %v948
  %v950 = vrcp.pop %v868
  %v951 = vmul.f32 1.0, %v950
  %v952 = vrcp.pop %v869
  %v953 = vmul.f32 1.0, %v952
  %v954 = vrcp.pop %v870
  %v955 = vmul.f32 1.0, %v954
  %v956 = vrcp.pop %v871
  %v957 = vmul.f32 1.0, %v956
  %v958 = vrcp.pop %v872
  %v959 = vmul.f32 1.0, %v958
  %v960 = vrcp.pop %v873
  %v961 = vmul.f32 1.0, %v960
  %v962 = vrcp.pop %v874
  %v963 = vmul.f32 1.0, %v962
  %v964 = vrcp.pop %v875
  %v965 = vmul.f32 1.0, %v964
  %v966 = vrcp.pop %v876
  %v967 = vmul.f32 1.0, %v966
  %v968 = vrcp.pop %v877
  %v969 = vmul.f32 1.0, %v968
  %v970 = vrcp.pop %v878
  %v971 = vmul.f32 1.0, %v970
  %v972 = vrcp.pop %v879
  %v973 = vmul.f32 1.0, %v972
  %v974 = vrcp.pop %v880
  %v975 = vmul.f32 1.0, %v974
  %v976 = vrcp.pop %v881
  %v977 = vmul.f32 1.0, %v976
  %v978 = vrcp.pop %v882
  %v979 = vmul.f32 1.0, %v978
  %v980 = vrcp.pop %v883
  %v981 = vmul.f32 1.0, %v980
  %v982 = vrcp.pop %v884
  %v983 = vmul.f32 1.0, %v982
  %v984 = vrcp.pop %v885
  %v985 = vmul.f32 1.0, %v984
  %v986 = vrcp.pop %v886
  %v987 = vmul.f32 1.0, %v986
  %v988 = vrcp.pop %v887
  %v989 = vmul.f32 1.0, %v988
  %v990 = vrcp.pop %v888
  %v991 = vmul.f32 1.0, %v990
  %v992 = vrcp.pop %v889
  %v993 = vmul.f32 1.0, %v992
  %v994 = vrcp.pop %v890
  %v995 = vmul.f32 1.0, %v994
  %v996 = vrcp.pop %v891
  %v997 = vmul.f32 1.0, %v996
  %v998 = vrcp.pop %v892
  %v999 = vmul.f32 1.0, %v998
  %v1000 = vrcp.pop %v893
  %v1001 = vmul.f32 1.0, %v1000
  %v1002 = vrcp.pop %v894
  %v1003 = vmul.f32 1.0, %v1002
  %v1004 = vrcp.pop %v895
  %v1005 = vmul.f32 1.0, %v1004
  %v1006 = vrcp.pop %v896
  %v1007 = vmul.f32 1.0, %v1006
  %v1008 = vrcp.pop %v897
  %v1009 = vmul.f32 1.0, %v1008
  %v1010 = vrcp.pop %v898
  %v1011 = vmul.f32 1.0, %v1010
  %v1012 = vrcp.pop %v899
  %v1013 = vmul.f32 1.0, %v1012
  %v1014 = vrcp.pop %v900
  %v1015 = vmul.f32 1.0, %v1014
  %v1016 = vrcp.pop %v901
  %v1017 = vmul.f32 1.0, %v1016
  %v1018 = vrcp.pop %v902
  %v1019 = vmul.f32 1.0, %v1018
  %v1020 = vrcp.pop %v903
  %v1021 = vmul.f32 1.0, %v1020
  %v1022 = vrcp.pop %v904
  %v1023 = vmul.f32 1.0, %v1022
  %v1024 = vrcp.pop %v905
  %v1025 = vmul.f32 1.0, %v1024
  %v1026 = vrcp.pop %v906
  %v1027 = vmul.f32 1.0, %v1026
  %v1028 = vrcp.pop %v907
  %v1029 = vmul.f32 1.0, %v1028
  %v1030 = vrcp.pop %v908
  %v1031 = vmul.f32 1.0, %v1030
  %v1032 = vrcp.pop %v909
  %v1033 = vmul.f32 1.0, %v1032
  %v1034 = vrcp.pop %v910
  %v1035 = vmul.f32 1.0, %v1034
  %v1036 = vrcp.pop %v911
  %v1037 = vmul.f32 1.0, %v1036
  %v1038 = vrcp.pop %v912
  %v1039 = vmul.f32 1.0, %v1038
  %v1040 = vrcp.pop %v913
  %v1041 = vmul.f32 1.0, %v1040
  %v1042 = vmul.f32 %v915, 16.0
  %v1043 = vmul.f32 %v917, 16.0
  %v1044 = vmul.f32 %v919, 16.0
  %v1045 = vmul.f32 %v921, 16.0
  %v1046 = vmul.f32 %v923, 16.0
  %v1047 = vmul.f32 %v925, 16.0
  %v1048 = vmul.f32 %v927, 16.0
  %v1049 = vmul.f32 %v929, 16.0
  %v1050 = vmul.f32 %v931, 16.0
  %v1051 = vmul.f32 %v933, 16.0
  %v1052 = vmul.f32 %v935, 16.0
  %v1053 = vmul.f32 %v937, 16.0
  %v1054 = vmul.f32 %v939, 16.0
  %v1055 = vmul.f32 %v941, 16.0
  %v1056 = vmul.f32 %v943, 16.0
  %v1057 = vmul.f32 %v945, 16.0
  %v1058 = vmul.f32 %v947, 16.0
  %v1059 = vmul.f32 %v949, 16.0
  %v1060 = vmul.f32 %v951, 16.0
  %v1061 = vmul.f32 %v953, 16.0
  %v1062 = vmul.f32 %v955, 16.0
  %v1063 = vmul.f32 %v957, 16.0
  %v1064 = vmul.f32 %v959, 16.0
  %v1065 = vmul.f32 %v961, 16.0
  %v1066 = vmul.f32 %v963, 16.0
  %v1067 = vmul.f32 %v965, 16.0
  %v1068 = vmul.f32 %v967, 16.0
  %v1069 = vmul.f32 %v969, 16.0
  %v1070 = vmul.f32 %v971, 16.0
  %v1071 = vmul.f32 %v973, 16.0
  %v1072 = vmul.f32 %v975, 16.0
  %v1073 = vmul.f32 %v977, 16.0
  %v1074 = vmul.f32 %v979, 16.0
  %v1075 = vmul.f32 %v981, 16.0
  %v1076 = vmul.f32 %v983, 16.0
  %v1077 = vmul.f32 %v985, 16.0
  %v1078 = vmul.f32 %v987, 16.0
  %v1079 = vmul.f32 %v989, 16.0
  %v1080 = vmul.f32 %v991, 16.0
  %v1081 = vmul.f32 %v993, 16.0
  %v1082 = vmul.f32 %v995, 16.0
  %v1083 = vmul.f32 %v997, 16.0
  %v1084 = vmul.f32 %v999, 16.0
  %v1085 = vmul.f32 %v1001, 16.0
  %v1086 = vmul.f32 %v1003, 16.0
  %v1087 = vmul.f32 %v1005, 16.0
  %v1088 = vmul.f32 %v1007, 16.0
  %v1089 = vmul.f32 %v1009, 16.0
  %v1090 = vmul.f32 %v1011, 16.0
  %v1091 = vmul.f32 %v1013, 16.0
  %v1092 = vmul.f32 %v1015, 16.0
  %v1093 = vmul.f32 %v1017, 16.0
  %v1094 = vmul.f32 %v1019, 16.0
  %v1095 = vmul.f32 %v1021, 16.0
  %v1096 = vmul.f32 %v1023, 16.0
  %v1097 = vmul.f32 %v1025, 16.0
  %v1098 = vmul.f32 %v1027, 16.0
  %v1099 = vmul.f32 %v1029, 16.0
  %v1100 = vmul.f32 %v1031, 16.0
  %v1101 = vmul.f32 %v1033, 16.0
  %v1102 = vmul.f32 %v1035, 16.0
  %v1103 = vmul.f32 %v1037, 16.0
  %v1104 = vmul.f32 %v1039, 16.0
  %v1105 = vmul.f32 %v1041, 16.0
  %v1106 = vld [vmem:[%s3] sm:$0xff]
  %v1107 = vld [vmem:[%s3 + $0x8] sm:$0xff]
  %v1108 = vld [vmem:[%s3 + $0x10] sm:$0xff]
  %v1109 = vld [vmem:[%s3 + $0x18] sm:$0xff]
  %v1110 = vld [vmem:[%s3 + $0x20] sm:$0xff]
  %v1111 = vld [vmem:[%s3 + $0x28] sm:$0xff]
  %v1112 = vld [vmem:[%s3 + $0x30] sm:$0xff]
  %v1113 = vld [vmem:[%s3 + $0x38] sm:$0xff]
  %v1114 = vld [vmem:[%s3 + $0x40] sm:$0xff]
  %v1115 = vld [vmem:[%s3 + $0x48] sm:$0xff]
  %v1116 = vld [vmem:[%s3 + $0x50] sm:$0xff]
  %v1117 = vld [vmem:[%s3 + $0x58] sm:$0xff]
  %v1118 = vld [vmem:[%s3 + $0x60] sm:$0xff]
  %v1119 = vld [vmem:[%s3 + $0x68] sm:$0xff]
  %v1120 = vld [vmem:[%s3 + $0x70] sm:$0xff]
  %v1121 = vld [vmem:[%s3 + $0x78] sm:$0xff]
  %v1122 = vld [vmem:[%s3 + $0x80] sm:$0xff]
  %v1123 = vld [vmem:[%s3 + $0x88] sm:$0xff]
  %v1124 = vld [vmem:[%s3 + $0x90] sm:$0xff]
  %v1125 = vld [vmem:[%s3 + $0x98] sm:$0xff]
  %v1126 = vld [vmem:[%s3 + $0xa0] sm:$0xff]
  %v1127 = vld [vmem:[%s3 + $0xa8] sm:$0xff]
  %v1128 = vld [vmem:[%s3 + $0xb0] sm:$0xff]
  %v1129 = vld [vmem:[%s3 + $0xb8] sm:$0xff]
  %v1130 = vld [vmem:[%s3 + $0xc0] sm:$0xff]
  %v1131 = vld [vmem:[%s3 + $0xc8] sm:$0xff]
  %v1132 = vld [vmem:[%s3 + $0xd0] sm:$0xff]
  %v1133 = vld [vmem:[%s3 + $0xd8] sm:$0xff]
  %v1134 = vld [vmem:[%s3 + $0xe0] sm:$0xff]
  %v1135 = vld [vmem:[%s3 + $0xe8] sm:$0xff]
  %v1136 = vld [vmem:[%s3 + $0xf0] sm:$0xff]
  %v1137 = vld [vmem:[%s3 + $0xf8] sm:$0xff]
  %v1138 = vld [vmem:[%s3 + $0x100] sm:$0xff]
  %v1139 = vld [vmem:[%s3 + $0x108] sm:$0xff]
  %v1140 = vld [vmem:[%s3 + $0x110] sm:$0xff]
  %v1141 = vld [vmem:[%s3 + $0x118] sm:$0xff]
  %v1142 = vld [vmem:[%s3 + $0x120] sm:$0xff]
  %v1143 = vld [vmem:[%s3 + $0x128] sm:$0xff]
  %v1144 = vld [vmem:[%s3 + $0x130] sm:$0xff]
  %v1145 = vld [vmem:[%s3 + $0x138] sm:$0xff]
  %v1146 = vld [vmem:[%s3 + $0x140] sm:$0xff]
  %v1147 = vld [vmem:[%s3 + $0x148] sm:$0xff]
  %v1148 = vld [vmem:[%s3 + $0x150] sm:$0xff]
  %v1149 = vld [vmem:[%s3 + $0x158] sm:$0xff]
  %v1150 = vld [vmem:[%s3 + $0x160] sm:$0xff]
  %v1151 = vld [vmem:[%s3 + $0x168] sm:$0xff]
  %v1152 = vld [vmem:[%s3 + $0x170] sm:$0xff]
  %v1153 = vld [vmem:[%s3 + $0x178] sm:$0xff]
  %v1154 = vld [vmem:[%s3 + $0x180] sm:$0xff]
  %v1155 = vld [vmem:[%s3 + $0x188] sm:$0xff]
  %v1156 = vld [vmem:[%s3 + $0x190] sm:$0xff]
  %v1157 = vld [vmem:[%s3 + $0x198] sm:$0xff]
  %v1158 = vld [vmem:[%s3 + $0x1a0] sm:$0xff]
  %v1159 = vld [vmem:[%s3 + $0x1a8] sm:$0xff]
  %v1160 = vld [vmem:[%s3 + $0x1b0] sm:$0xff]
  %v1161 = vld [vmem:[%s3 + $0x1b8] sm:$0xff]
  %v1162 = vld [vmem:[%s3 + $0x1c0] sm:$0xff]
  %v1163 = vld [vmem:[%s3 + $0x1c8] sm:$0xff]
  %v1164 = vld [vmem:[%s3 + $0x1d0] sm:$0xff]
  %v1165 = vld [vmem:[%s3 + $0x1d8] sm:$0xff]
  %v1166 = vld [vmem:[%s3 + $0x1e0] sm:$0xff]
  %v1167 = vld [vmem:[%s3 + $0x1e8] sm:$0xff]
  %v1168 = vld [vmem:[%s3 + $0x1f0] sm:$0xff]
  %v1169 = vld [vmem:[%s3 + $0x1f8] sm:$0xff]
  %v1170 = vadd.f32 %v1042, %v1106
  %v1171 = vadd.f32 %v1043, %v1107
  %v1172 = vadd.f32 %v1044, %v1108
  %v1173 = vadd.f32 %v1045, %v1109
  %v1174 = vadd.f32 %v1046, %v1110
  %v1175 = vadd.f32 %v1047, %v1111
  %v1176 = vadd.f32 %v1048, %v1112
  %v1177 = vadd.f32 %v1049, %v1113
  %v1178 = vadd.f32 %v1050, %v1114
  %v1179 = vadd.f32 %v1051, %v1115
  %v1180 = vadd.f32 %v1052, %v1116
  %v1181 = vadd.f32 %v1053, %v1117
  %v1182 = vadd.f32 %v1054, %v1118
  %v1183 = vadd.f32 %v1055, %v1119
  %v1184 = vadd.f32 %v1056, %v1120
  %v1185 = vadd.f32 %v1057, %v1121
  %v1186 = vadd.f32 %v1058, %v1122
  %v1187 = vadd.f32 %v1059, %v1123
  %v1188 = vadd.f32 %v1060, %v1124
  %v1189 = vadd.f32 %v1061, %v1125
  %v1190 = vadd.f32 %v1062, %v1126
  %v1191 = vadd.f32 %v1063, %v1127
  %v1192 = vadd.f32 %v1064, %v1128
  %v1193 = vadd.f32 %v1065, %v1129
  %v1194 = vadd.f32 %v1066, %v1130
  %v1195 = vadd.f32 %v1067, %v1131
  %v1196 = vadd.f32 %v1068, %v1132
  %v1197 = vadd.f32 %v1069, %v1133
  %v1198 = vadd.f32 %v1070, %v1134
  %v1199 = vadd.f32 %v1071, %v1135
  %v1200 = vadd.f32 %v1072, %v1136
  %v1201 = vadd.f32 %v1073, %v1137
  %v1202 = vadd.f32 %v1074, %v1138
  %v1203 = vadd.f32 %v1075, %v1139
  %v1204 = vadd.f32 %v1076, %v1140
  %v1205 = vadd.f32 %v1077, %v1141
  %v1206 = vadd.f32 %v1078, %v1142
  %v1207 = vadd.f32 %v1079, %v1143
  %v1208 = vadd.f32 %v1080, %v1144
  %v1209 = vadd.f32 %v1081, %v1145
  %v1210 = vadd.f32 %v1082, %v1146
  %v1211 = vadd.f32 %v1083, %v1147
  %v1212 = vadd.f32 %v1084, %v1148
  %v1213 = vadd.f32 %v1085, %v1149
  %v1214 = vadd.f32 %v1086, %v1150
  %v1215 = vadd.f32 %v1087, %v1151
  %v1216 = vadd.f32 %v1088, %v1152
  %v1217 = vadd.f32 %v1089, %v1153
  %v1218 = vadd.f32 %v1090, %v1154
  %v1219 = vadd.f32 %v1091, %v1155
  %v1220 = vadd.f32 %v1092, %v1156
  %v1221 = vadd.f32 %v1093, %v1157
  %v1222 = vadd.f32 %v1094, %v1158
  %v1223 = vadd.f32 %v1095, %v1159
  %v1224 = vadd.f32 %v1096, %v1160
  %v1225 = vadd.f32 %v1097, %v1161
  %v1226 = vadd.f32 %v1098, %v1162
  %v1227 = vadd.f32 %v1099, %v1163
  %v1228 = vadd.f32 %v1100, %v1164
  %v1229 = vadd.f32 %v1101, %v1165
  %v1230 = vadd.f32 %v1102, %v1166
  %v1231 = vadd.f32 %v1103, %v1167
  %v1232 = vadd.f32 %v1104, %v1168
  %v1233 = vadd.f32 %v1105, %v1169
  %v1234 = vmul.f32 %v915, 2.0
  %v1235 = vmul.f32 %v917, 2.0
  %v1236 = vmul.f32 %v919, 2.0
  %v1237 = vmul.f32 %v921, 2.0
  %v1238 = vmul.f32 %v923, 2.0
  %v1239 = vmul.f32 %v925, 2.0
  %v1240 = vmul.f32 %v927, 2.0
  %v1241 = vmul.f32 %v929, 2.0
  %v1242 = vmul.f32 %v931, 2.0
  %v1243 = vmul.f32 %v933, 2.0
  %v1244 = vmul.f32 %v935, 2.0
  %v1245 = vmul.f32 %v937, 2.0
  %v1246 = vmul.f32 %v939, 2.0
  %v1247 = vmul.f32 %v941, 2.0
  %v1248 = vmul.f32 %v943, 2.0
  %v1249 = vmul.f32 %v945, 2.0
  %v1250 = vmul.f32 %v947, 2.0
  %v1251 = vmul.f32 %v949, 2.0
  %v1252 = vmul.f32 %v951, 2.0
  %v1253 = vmul.f32 %v953, 2.0
  %v1254 = vmul.f32 %v955, 2.0
  %v1255 = vmul.f32 %v957, 2.0
  %v1256 = vmul.f32 %v959, 2.0
  %v1257 = vmul.f32 %v961, 2.0
  %v1258 = vmul.f32 %v963, 2.0
  %v1259 = vmul.f32 %v965, 2.0
  %v1260 = vmul.f32 %v967, 2.0
  %v1261 = vmul.f32 %v969, 2.0
  %v1262 = vmul.f32 %v971, 2.0
  %v1263 = vmul.f32 %v973, 2.0
  %v1264 = vmul.f32 %v975, 2.0
  %v1265 = vmul.f32 %v977, 2.0
  %v1266 = vmul.f32 %v979, 2.0
  %v1267 = vmul.f32 %v981, 2.0
  %v1268 = vmul.f32 %v983, 2.0
  %v1269 = vmul.f32 %v985, 2.0
  %v1270 = vmul.f32 %v987, 2.0
  %v1271 = vmul.f32 %v989, 2.0
  %v1272 = vmul.f32 %v991, 2.0
  %v1273 = vmul.f32 %v993, 2.0
  %v1274 = vmul.f32 %v995, 2.0
  %v1275 = vmul.f32 %v997, 2.0
  %v1276 = vmul.f32 %v999, 2.0
  %v1277 = vmul.f32 %v1001, 2.0
  %v1278 = vmul.f32 %v1003, 2.0
  %v1279 = vmul.f32 %v1005, 2.0
  %v1280 = vmul.f32 %v1007, 2.0
  %v1281 = vmul.f32 %v1009, 2.0
  %v1282 = vmul.f32 %v1011, 2.0
  %v1283 = vmul.f32 %v1013, 2.0
  %v1284 = vmul.f32 %v1015, 2.0
  %v1285 = vmul.f32 %v1017, 2.0
  %v1286 = vmul.f32 %v1019, 2.0
  %v1287 = vmul.f32 %v1021, 2.0
  %v1288 = vmul.f32 %v1023, 2.0
  %v1289 = vmul.f32 %v1025, 2.0
  %v1290 = vmul.f32 %v1027, 2.0
  %v1291 = vmul.f32 %v1029, 2.0
  %v1292 = vmul.f32 %v1031, 2.0
  %v1293 = vmul.f32 %v1033, 2.0
  %v1294 = vmul.f32 %v1035, 2.0
  %v1295 = vmul.f32 %v1037, 2.0
  %v1296 = vmul.f32 %v1039, 2.0
  %v1297 = vmul.f32 %v1041, 2.0
  %v1298 = vmul.f32 %v1234, %v1234
  %v1299 = vmul.f32 %v1235, %v1235
  %v1300 = vmul.f32 %v1236, %v1236
  %v1301 = vmul.f32 %v1237, %v1237
  %v1302 = vmul.f32 %v1238, %v1238
  %v1303 = vmul.f32 %v1239, %v1239
  %v1304 = vmul.f32 %v1240, %v1240
  %v1305 = vmul.f32 %v1241, %v1241
  %v1306 = vmul.f32 %v1242, %v1242
  %v1307 = vmul.f32 %v1243, %v1243
  %v1308 = vmul.f32 %v1244, %v1244
  %v1309 = vmul.f32 %v1245, %v1245
  %v1310 = vmul.f32 %v1246, %v1246
  %v1311 = vmul.f32 %v1247, %v1247
  %v1312 = vmul.f32 %v1248, %v1248
  %v1313 = vmul.f32 %v1249, %v1249
  %v1314 = vmul.f32 %v1250, %v1250
  %v1315 = vmul.f32 %v1251, %v1251
  %v1316 = vmul.f32 %v1252, %v1252
  %v1317 = vmul.f32 %v1253, %v1253
  %v1318 = vmul.f32 %v1254, %v1254
  %v1319 = vmul.f32 %v1255, %v1255
  %v1320 = vmul.f32 %v1256, %v1256
  %v1321 = vmul.f32 %v1257, %v1257
  %v1322 = vmul.f32 %v1258, %v1258
  %v1323 = vmul.f32 %v1259, %v1259
  %v1324 = vmul.f32 %v1260, %v1260
  %v1325 = vmul.f32 %v1261, %v1261
  %v1326 = vmul.f32 %v1262, %v1262
  %v1327 = vmul.f32 %v1263, %v1263
  %v1328 = vmul.f32 %v1264, %v1264
  %v1329 = vmul.f32 %v1265, %v1265
  %v1330 = vmul.f32 %v1266, %v1266
  %v1331 = vmul.f32 %v1267, %v1267
  %v1332 = vmul.f32 %v1268, %v1268
  %v1333 = vmul.f32 %v1269, %v1269
  %v1334 = vmul.f32 %v1270, %v1270
  %v1335 = vmul.f32 %v1271, %v1271
  %v1336 = vmul.f32 %v1272, %v1272
  %v1337 = vmul.f32 %v1273, %v1273
  %v1338 = vmul.f32 %v1274, %v1274
  %v1339 = vmul.f32 %v1275, %v1275
  %v1340 = vmul.f32 %v1276, %v1276
  %v1341 = vmul.f32 %v1277, %v1277
  %v1342 = vmul.f32 %v1278, %v1278
  %v1343 = vmul.f32 %v1279, %v1279
  %v1344 = vmul.f32 %v1280, %v1280
  %v1345 = vmul.f32 %v1281, %v1281
  %v1346 = vmul.f32 %v1282, %v1282
  %v1347 = vmul.f32 %v1283, %v1283
  %v1348 = vmul.f32 %v1284, %v1284
  %v1349 = vmul.f32 %v1285, %v1285
  %v1350 = vmul.f32 %v1286, %v1286
  %v1351 = vmul.f32 %v1287, %v1287
  %v1352 = vmul.f32 %v1288, %v1288
  %v1353 = vmul.f32 %v1289, %v1289
  %v1354 = vmul.f32 %v1290, %v1290
  %v1355 = vmul.f32 %v1291, %v1291
  %v1356 = vmul.f32 %v1292, %v1292
  %v1357 = vmul.f32 %v1293, %v1293
  %v1358 = vmul.f32 %v1294, %v1294
  %v1359 = vmul.f32 %v1295, %v1295
  %v1360 = vmul.f32 %v1296, %v1296
  %v1361 = vmul.f32 %v1297, %v1297
  %v1362 = vld [vmem:[%s4] sm:$0x1]
  %v1364 = vlaneseq
  %v1365 = vshrl.u32 %v1364, 7
  %v1366 = vsub.s32 0, %v1365
  %v1367 = vrot.slane %v1362, %v1366
  %1368 = vrot.lane.b32.xlu0 %v1367, 6
  %v1369 = vpop.permute.xlu0 %1368
  %v1371 = vmul.f32 %v1298, %v1369
  %v1372 = vmul.f32 %v1299, %v1369
  %v1373 = vmul.f32 %v1300, %v1369
  %v1374 = vmul.f32 %v1301, %v1369
  %v1375 = vmul.f32 %v1302, %v1369
  %v1376 = vmul.f32 %v1303, %v1369
  %v1377 = vmul.f32 %v1304, %v1369
  %v1378 = vmul.f32 %v1305, %v1369
  %v1379 = vmul.f32 %v1306, %v1369
  %v1380 = vmul.f32 %v1307, %v1369
  %v1381 = vmul.f32 %v1308, %v1369
  %v1382 = vmul.f32 %v1309, %v1369
  %v1383 = vmul.f32 %v1310, %v1369
  %v1384 = vmul.f32 %v1311, %v1369
  %v1385 = vmul.f32 %v1312, %v1369
  %v1386 = vmul.f32 %v1313, %v1369
  %v1387 = vmul.f32 %v1314, %v1369
  %v1388 = vmul.f32 %v1315, %v1369
  %v1389 = vmul.f32 %v1316, %v1369
  %v1390 = vmul.f32 %v1317, %v1369
  %v1391 = vmul.f32 %v1318, %v1369
  %v1392 = vmul.f32 %v1319, %v1369
  %v1393 = vmul.f32 %v1320, %v1369
  %v1394 = vmul.f32 %v1321, %v1369
  %v1395 = vmul.f32 %v1322, %v1369
  %v1396 = vmul.f32 %v1323, %v1369
  %v1397 = vmul.f32 %v1324, %v1369
  %v1398 = vmul.f32 %v1325, %v1369
  %v1399 = vmul.f32 %v1326, %v1369
  %v1400 = vmul.f32 %v1327, %v1369
  %v1401 = vmul.f32 %v1328, %v1369
  %v1402 = vmul.f32 %v1329, %v1369
  %v1403 = vmul.f32 %v1330, %v1369
  %v1404 = vmul.f32 %v1331, %v1369
  %v1405 = vmul.f32 %v1332, %v1369
  %v1406 = vmul.f32 %v1333, %v1369
  %v1407 = vmul.f32 %v1334, %v1369
  %v1408 = vmul.f32 %v1335, %v1369
  %v1409 = vmul.f32 %v1336, %v1369
  %v1410 = vmul.f32 %v1337, %v1369
  %v1411 = vmul.f32 %v1338, %v1369
  %v1412 = vmul.f32 %v1339, %v1369
  %v1413 = vmul.f32 %v1340, %v1369
  %v1414 = vmul.f32 %v1341, %v1369
  %v1415 = vmul.f32 %v1342, %v1369
  %v1416 = vmul.f32 %v1343, %v1369
  %v1417 = vmul.f32 %v1344, %v1369
  %v1418 = vmul.f32 %v1345, %v1369
  %v1419 = vmul.f32 %v1346, %v1369
  %v1420 = vmul.f32 %v1347, %v1369
  %v1421 = vmul.f32 %v1348, %v1369
  %v1422 = vmul.f32 %v1349, %v1369
  %v1423 = vmul.f32 %v1350, %v1369
  %v1424 = vmul.f32 %v1351, %v1369
  %v1425 = vmul.f32 %v1352, %v1369
  %v1426 = vmul.f32 %v1353, %v1369
  %v1427 = vmul.f32 %v1354, %v1369
  %v1428 = vmul.f32 %v1355, %v1369
  %v1429 = vmul.f32 %v1356, %v1369
  %v1430 = vmul.f32 %v1357, %v1369
  %v1431 = vmul.f32 %v1358, %v1369
  %v1432 = vmul.f32 %v1359, %v1369
  %v1433 = vmul.f32 %v1360, %v1369
  %v1434 = vmul.f32 %v1361, %v1369
  %v1435 = vmul.f32 %v1371, 0.5
  %v1436 = vmul.f32 %v1372, 0.5
  %v1437 = vmul.f32 %v1373, 0.5
  %v1438 = vmul.f32 %v1374, 0.5
  %v1439 = vmul.f32 %v1375, 0.5
  %v1440 = vmul.f32 %v1376, 0.5
  %v1441 = vmul.f32 %v1377, 0.5
  %v1442 = vmul.f32 %v1378, 0.5
  %v1443 = vmul.f32 %v1379, 0.5
  %v1444 = vmul.f32 %v1380, 0.5
  %v1445 = vmul.f32 %v1381, 0.5
  %v1446 = vmul.f32 %v1382, 0.5
  %v1447 = vmul.f32 %v1383, 0.5
  %v1448 = vmul.f32 %v1384, 0.5
  %v1449 = vmul.f32 %v1385, 0.5
  %v1450 = vmul.f32 %v1386, 0.5
  %v1451 = vmul.f32 %v1387, 0.5
  %v1452 = vmul.f32 %v1388, 0.5
  %v1453 = vmul.f32 %v1389, 0.5
  %v1454 = vmul.f32 %v1390, 0.5
  %v1455 = vmul.f32 %v1391, 0.5
  %v1456 = vmul.f32 %v1392, 0.5
  %v1457 = vmul.f32 %v1393, 0.5
  %v1458 = vmul.f32 %v1394, 0.5
  %v1459 = vmul.f32 %v1395, 0.5
  %v1460 = vmul.f32 %v1396, 0.5
  %v1461 = vmul.f32 %v1397, 0.5
  %v1462 = vmul.f32 %v1398, 0.5
  %v1463 = vmul.f32 %v1399, 0.5
  %v1464 = vmul.f32 %v1400, 0.5
  %v1465 = vmul.f32 %v1401, 0.5
  %v1466 = vmul.f32 %v1402, 0.5
  %v1467 = vmul.f32 %v1403, 0.5
  %v1468 = vmul.f32 %v1404, 0.5
  %v1469 = vmul.f32 %v1405, 0.5
  %v1470 = vmul.f32 %v1406, 0.5
  %v1471 = vmul.f32 %v1407, 0.5
  %v1472 = vmul.f32 %v1408, 0.5
  %v1473 = vmul.f32 %v1409, 0.5
  %v1474 = vmul.f32 %v1410, 0.5
  %v1475 = vmul.f32 %v1411, 0.5
  %v1476 = vmul.f32 %v1412, 0.5
  %v1477 = vmul.f32 %v1413, 0.5
  %v1478 = vmul.f32 %v1414, 0.5
  %v1479 = vmul.f32 %v1415, 0.5
  %v1480 = vmul.f32 %v1416, 0.5
  %v1481 = vmul.f32 %v1417, 0.5
  %v1482 = vmul.f32 %v1418, 0.5
  %v1483 = vmul.f32 %v1419, 0.5
  %v1484 = vmul.f32 %v1420, 0.5
  %v1485 = vmul.f32 %v1421, 0.5
  %v1486 = vmul.f32 %v1422, 0.5
  %v1487 = vmul.f32 %v1423, 0.5
  %v1488 = vmul.f32 %v1424, 0.5
  %v1489 = vmul.f32 %v1425, 0.5
  %v1490 = vmul.f32 %v1426, 0.5
  %v1491 = vmul.f32 %v1427, 0.5
  %v1492 = vmul.f32 %v1428, 0.5
  %v1493 = vmul.f32 %v1429, 0.5
  %v1494 = vmul.f32 %v1430, 0.5
  %v1495 = vmul.f32 %v1431, 0.5
  %v1496 = vmul.f32 %v1432, 0.5
  %v1497 = vmul.f32 %v1433, 0.5
  %v1498 = vmul.f32 %v1434, 0.5
  %1563 = vrot.lane.b32.xlu0 %v1435, 122
  %v1564 = vpop.permute.xlu0 %1563
  %1565 = vrot.lane.b32.xlu0 %v1436, 122
  %v1566 = vpop.permute.xlu0 %1565
  %1567 = vrot.lane.b32.xlu0 %v1437, 122
  %v1568 = vpop.permute.xlu0 %1567
  %1569 = vrot.lane.b32.xlu0 %v1438, 122
  %v1570 = vpop.permute.xlu0 %1569
  %1571 = vrot.lane.b32.xlu0 %v1439, 122
  %v1572 = vpop.permute.xlu0 %1571
  %1573 = vrot.lane.b32.xlu0 %v1440, 122
  %v1574 = vpop.permute.xlu0 %1573
  %1575 = vrot.lane.b32.xlu0 %v1441, 122
  %v1576 = vpop.permute.xlu0 %1575
  %1577 = vrot.lane.b32.xlu0 %v1442, 122
  %v1578 = vpop.permute.xlu0 %1577
  %1579 = vrot.lane.b32.xlu0 %v1443, 122
  %v1580 = vpop.permute.xlu0 %1579
  %1581 = vrot.lane.b32.xlu0 %v1444, 122
  %v1582 = vpop.permute.xlu0 %1581
  %1583 = vrot.lane.b32.xlu0 %v1445, 122
  %v1584 = vpop.permute.xlu0 %1583
  %1585 = vrot.lane.b32.xlu0 %v1446, 122
  %v1586 = vpop.permute.xlu0 %1585
  %1587 = vrot.lane.b32.xlu0 %v1447, 122
  %v1588 = vpop.permute.xlu0 %1587
  %1589 = vrot.lane.b32.xlu0 %v1448, 122
  %v1590 = vpop.permute.xlu0 %1589
  %1591 = vrot.lane.b32.xlu0 %v1449, 122
  %v1592 = vpop.permute.xlu0 %1591
  %1593 = vrot.lane.b32.xlu0 %v1450, 122
  %v1594 = vpop.permute.xlu0 %1593
  %1595 = vrot.lane.b32.xlu0 %v1451, 122
  %v1596 = vpop.permute.xlu0 %1595
  %1597 = vrot.lane.b32.xlu0 %v1452, 122
  %v1598 = vpop.permute.xlu0 %1597
  %1599 = vrot.lane.b32.xlu0 %v1453, 122
  %v1600 = vpop.permute.xlu0 %1599
  %1601 = vrot.lane.b32.xlu0 %v1454, 122
  %v1602 = vpop.permute.xlu0 %1601
  %1603 = vrot.lane.b32.xlu0 %v1455, 122
  %v1604 = vpop.permute.xlu0 %1603
  %1605 = vrot.lane.b32.xlu0 %v1456, 122
  %v1606 = vpop.permute.xlu0 %1605
  %1607 = vrot.lane.b32.xlu0 %v1457, 122
  %v1608 = vpop.permute.xlu0 %1607
  %1609 = vrot.lane.b32.xlu0 %v1458, 122
  %v1610 = vpop.permute.xlu0 %1609
  %1611 = vrot.lane.b32.xlu0 %v1459, 122
  %v1612 = vpop.permute.xlu0 %1611
  %1613 = vrot.lane.b32.xlu0 %v1460, 122
  %v1614 = vpop.permute.xlu0 %1613
  %1615 = vrot.lane.b32.xlu0 %v1461, 122
  %v1616 = vpop.permute.xlu0 %1615
  %1617 = vrot.lane.b32.xlu0 %v1462, 122
  %v1618 = vpop.permute.xlu0 %1617
  %1619 = vrot.lane.b32.xlu0 %v1463, 122
  %v1620 = vpop.permute.xlu0 %1619
  %1621 = vrot.lane.b32.xlu0 %v1464, 122
  %v1622 = vpop.permute.xlu0 %1621
  %1623 = vrot.lane.b32.xlu0 %v1465, 122
  %v1624 = vpop.permute.xlu0 %1623
  %1625 = vrot.lane.b32.xlu0 %v1466, 122
  %v1626 = vpop.permute.xlu0 %1625
  %1627 = vrot.lane.b32.xlu0 %v1467, 122
  %v1628 = vpop.permute.xlu0 %1627
  %1629 = vrot.lane.b32.xlu0 %v1468, 122
  %v1630 = vpop.permute.xlu0 %1629
  %1631 = vrot.lane.b32.xlu0 %v1469, 122
  %v1632 = vpop.permute.xlu0 %1631
  %1633 = vrot.lane.b32.xlu0 %v1470, 122
  %v1634 = vpop.permute.xlu0 %1633
  %1635 = vrot.lane.b32.xlu0 %v1471, 122
  %v1636 = vpop.permute.xlu0 %1635
  %1637 = vrot.lane.b32.xlu0 %v1472, 122
  %v1638 = vpop.permute.xlu0 %1637
  %1639 = vrot.lane.b32.xlu0 %v1473, 122
  %v1640 = vpop.permute.xlu0 %1639
  %1641 = vrot.lane.b32.xlu0 %v1474, 122
  %v1642 = vpop.permute.xlu0 %1641
  %1643 = vrot.lane.b32.xlu0 %v1475, 122
  %v1644 = vpop.permute.xlu0 %1643
  %1645 = vrot.lane.b32.xlu0 %v1476, 122
  %v1646 = vpop.permute.xlu0 %1645
  %1647 = vrot.lane.b32.xlu0 %v1477, 122
  %v1648 = vpop.permute.xlu0 %1647
  %1649 = vrot.lane.b32.xlu0 %v1478, 122
  %v1650 = vpop.permute.xlu0 %1649
  %1651 = vrot.lane.b32.xlu0 %v1479, 122
  %v1652 = vpop.permute.xlu0 %1651
  %1653 = vrot.lane.b32.xlu0 %v1480, 122
  %v1654 = vpop.permute.xlu0 %1653
  %1655 = vrot.lane.b32.xlu0 %v1481, 122
  %v1656 = vpop.permute.xlu0 %1655
  %1657 = vrot.lane.b32.xlu0 %v1482, 122
  %v1658 = vpop.permute.xlu0 %1657
  %1659 = vrot.lane.b32.xlu0 %v1483, 122
  %v1660 = vpop.permute.xlu0 %1659
  %1661 = vrot.lane.b32.xlu0 %v1484, 122
  %v1662 = vpop.permute.xlu0 %1661
  %1663 = vrot.lane.b32.xlu0 %v1485, 122
  %v1664 = vpop.permute.xlu0 %1663
  %1665 = vrot.lane.b32.xlu0 %v1486, 122
  %v1666 = vpop.permute.xlu0 %1665
  %1667 = vrot.lane.b32.xlu0 %v1487, 122
  %v1668 = vpop.permute.xlu0 %1667
  %1669 = vrot.lane.b32.xlu0 %v1488, 122
  %v1670 = vpop.permute.xlu0 %1669
  %1671 = vrot.lane.b32.xlu0 %v1489, 122
  %v1672 = vpop.permute.xlu0 %1671
  %1673 = vrot.lane.b32.xlu0 %v1490, 122
  %v1674 = vpop.permute.xlu0 %1673
  %1675 = vrot.lane.b32.xlu0 %v1491, 122
  %v1676 = vpop.permute.xlu0 %1675
  %1677 = vrot.lane.b32.xlu0 %v1492, 122
  %v1678 = vpop.permute.xlu0 %1677
  %1679 = vrot.lane.b32.xlu0 %v1493, 122
  %v1680 = vpop.permute.xlu0 %1679
  %1681 = vrot.lane.b32.xlu0 %v1494, 122
  %v1682 = vpop.permute.xlu0 %1681
  %1683 = vrot.lane.b32.xlu0 %v1495, 122
  %v1684 = vpop.permute.xlu0 %1683
  %1685 = vrot.lane.b32.xlu0 %v1496, 122
  %v1686 = vpop.permute.xlu0 %1685
  %1687 = vrot.lane.b32.xlu0 %v1497, 122
  %v1688 = vpop.permute.xlu0 %1687
  %1689 = vrot.lane.b32.xlu0 %v1498, 122
  %v1690 = vpop.permute.xlu0 %1689
  %v1755 = vsub.f32 %v1170, %v1564
  %v1756 = vsub.f32 %v1171, %v1566
  %v1757 = vsub.f32 %v1172, %v1568
  %v1758 = vsub.f32 %v1173, %v1570
  %v1759 = vsub.f32 %v1174, %v1572
  %v1760 = vsub.f32 %v1175, %v1574
  %v1761 = vsub.f32 %v1176, %v1576
  %v1762 = vsub.f32 %v1177, %v1578
  %v1763 = vsub.f32 %v1178, %v1580
  %v1764 = vsub.f32 %v1179, %v1582
  %v1765 = vsub.f32 %v1180, %v1584
  %v1766 = vsub.f32 %v1181, %v1586
  %v1767 = vsub.f32 %v1182, %v1588
  %v1768 = vsub.f32 %v1183, %v1590
  %v1769 = vsub.f32 %v1184, %v1592
  %v1770 = vsub.f32 %v1185, %v1594
  %v1771 = vsub.f32 %v1186, %v1596
  %v1772 = vsub.f32 %v1187, %v1598
  %v1773 = vsub.f32 %v1188, %v1600
  %v1774 = vsub.f32 %v1189, %v1602
  %v1775 = vsub.f32 %v1190, %v1604
  %v1776 = vsub.f32 %v1191, %v1606
  %v1777 = vsub.f32 %v1192, %v1608
  %v1778 = vsub.f32 %v1193, %v1610
  %v1779 = vsub.f32 %v1194, %v1612
  %v1780 = vsub.f32 %v1195, %v1614
  %v1781 = vsub.f32 %v1196, %v1616
  %v1782 = vsub.f32 %v1197, %v1618
  %v1783 = vsub.f32 %v1198, %v1620
  %v1784 = vsub.f32 %v1199, %v1622
  %v1785 = vsub.f32 %v1200, %v1624
  %v1786 = vsub.f32 %v1201, %v1626
  %v1787 = vsub.f32 %v1202, %v1628
  %v1788 = vsub.f32 %v1203, %v1630
  %v1789 = vsub.f32 %v1204, %v1632
  %v1790 = vsub.f32 %v1205, %v1634
  %v1791 = vsub.f32 %v1206, %v1636
  %v1792 = vsub.f32 %v1207, %v1638
  %v1793 = vsub.f32 %v1208, %v1640
  %v1794 = vsub.f32 %v1209, %v1642
  %v1795 = vsub.f32 %v1210, %v1644
  %v1796 = vsub.f32 %v1211, %v1646
  %v1797 = vsub.f32 %v1212, %v1648
  %v1798 = vsub.f32 %v1213, %v1650
  %v1799 = vsub.f32 %v1214, %v1652
  %v1800 = vsub.f32 %v1215, %v1654
  %v1801 = vsub.f32 %v1216, %v1656
  %v1802 = vsub.f32 %v1217, %v1658
  %v1803 = vsub.f32 %v1218, %v1660
  %v1804 = vsub.f32 %v1219, %v1662
  %v1805 = vsub.f32 %v1220, %v1664
  %v1806 = vsub.f32 %v1221, %v1666
  %v1807 = vsub.f32 %v1222, %v1668
  %v1808 = vsub.f32 %v1223, %v1670
  %v1809 = vsub.f32 %v1224, %v1672
  %v1810 = vsub.f32 %v1225, %v1674
  %v1811 = vsub.f32 %v1226, %v1676
  %v1812 = vsub.f32 %v1227, %v1678
  %v1813 = vsub.f32 %v1228, %v1680
  %v1814 = vsub.f32 %v1229, %v1682
  %v1815 = vsub.f32 %v1230, %v1684
  %v1816 = vsub.f32 %v1231, %v1686
  %v1817 = vsub.f32 %v1232, %v1688
  %v1818 = vsub.f32 %v1233, %v1690
  %v1819 = vadd.f32 %v1170, %v1564
  %v1820 = vadd.f32 %v1171, %v1566
  %v1821 = vadd.f32 %v1172, %v1568
  %v1822 = vadd.f32 %v1173, %v1570
  %v1823 = vadd.f32 %v1174, %v1572
  %v1824 = vadd.f32 %v1175, %v1574
  %v1825 = vadd.f32 %v1176, %v1576
  %v1826 = vadd.f32 %v1177, %v1578
  %v1827 = vadd.f32 %v1178, %v1580
  %v1828 = vadd.f32 %v1179, %v1582
  %v1829 = vadd.f32 %v1180, %v1584
  %v1830 = vadd.f32 %v1181, %v1586
  %v1831 = vadd.f32 %v1182, %v1588
  %v1832 = vadd.f32 %v1183, %v1590
  %v1833 = vadd.f32 %v1184, %v1592
  %v1834 = vadd.f32 %v1185, %v1594
  %v1835 = vadd.f32 %v1186, %v1596
  %v1836 = vadd.f32 %v1187, %v1598
  %v1837 = vadd.f32 %v1188, %v1600
  %v1838 = vadd.f32 %v1189, %v1602
  %v1839 = vadd.f32 %v1190, %v1604
  %v1840 = vadd.f32 %v1191, %v1606
  %v1841 = vadd.f32 %v1192, %v1608
  %v1842 = vadd.f32 %v1193, %v1610
  %v1843 = vadd.f32 %v1194, %v1612
  %v1844 = vadd.f32 %v1195, %v1614
  %v1845 = vadd.f32 %v1196, %v1616
  %v1846 = vadd.f32 %v1197, %v1618
  %v1847 = vadd.f32 %v1198, %v1620
  %v1848 = vadd.f32 %v1199, %v1622
  %v1849 = vadd.f32 %v1200, %v1624
  %v1850 = vadd.f32 %v1201, %v1626
  %v1851 = vadd.f32 %v1202, %v1628
  %v1852 = vadd.f32 %v1203, %v1630
  %v1853 = vadd.f32 %v1204, %v1632
  %v1854 = vadd.f32 %v1205, %v1634
  %v1855 = vadd.f32 %v1206, %v1636
  %v1856 = vadd.f32 %v1207, %v1638
  %v1857 = vadd.f32 %v1208, %v1640
  %v1858 = vadd.f32 %v1209, %v1642
  %v1859 = vadd.f32 %v1210, %v1644
  %v1860 = vadd.f32 %v1211, %v1646
  %v1861 = vadd.f32 %v1212, %v1648
  %v1862 = vadd.f32 %v1213, %v1650
  %v1863 = vadd.f32 %v1214, %v1652
  %v1864 = vadd.f32 %v1215, %v1654
  %v1865 = vadd.f32 %v1216, %v1656
  %v1866 = vadd.f32 %v1217, %v1658
  %v1867 = vadd.f32 %v1218, %v1660
  %v1868 = vadd.f32 %v1219, %v1662
  %v1869 = vadd.f32 %v1220, %v1664
  %v1870 = vadd.f32 %v1221, %v1666
  %v1871 = vadd.f32 %v1222, %v1668
  %v1872 = vadd.f32 %v1223, %v1670
  %v1873 = vadd.f32 %v1224, %v1672
  %v1874 = vadd.f32 %v1225, %v1674
  %v1875 = vadd.f32 %v1226, %v1676
  %v1876 = vadd.f32 %v1227, %v1678
  %v1877 = vadd.f32 %v1228, %v1680
  %v1878 = vadd.f32 %v1229, %v1682
  %v1879 = vadd.f32 %v1230, %v1684
  %v1880 = vadd.f32 %v1231, %v1686
  %v1881 = vadd.f32 %v1232, %v1688
  %v1882 = vadd.f32 %v1233, %v1690
  %1947 = vrot.lane.b32.xlu0 %v1819, 2
  %v1948 = vpop.permute.xlu0 %1947
  %1949 = vrot.lane.b32.xlu0 %v1820, 2
  %v1950 = vpop.permute.xlu0 %1949
  %1951 = vrot.lane.b32.xlu0 %v1821, 2
  %v1952 = vpop.permute.xlu0 %1951
  %1953 = vrot.lane.b32.xlu0 %v1822, 2
  %v1954 = vpop.permute.xlu0 %1953
  %1955 = vrot.lane.b32.xlu0 %v1823, 2
  %v1956 = vpop.permute.xlu0 %1955
  %1957 = vrot.lane.b32.xlu0 %v1824, 2
  %v1958 = vpop.permute.xlu0 %1957
  %1959 = vrot.lane.b32.xlu0 %v1825, 2
  %v1960 = vpop.permute.xlu0 %1959
  %1961 = vrot.lane.b32.xlu0 %v1826, 2
  %v1962 = vpop.permute.xlu0 %1961
  %1963 = vrot.lane.b32.xlu0 %v1827, 2
  %v1964 = vpop.permute.xlu0 %1963
  %1965 = vrot.lane.b32.xlu0 %v1828, 2
  %v1966 = vpop.permute.xlu0 %1965
  %1967 = vrot.lane.b32.xlu0 %v1829, 2
  %v1968 = vpop.permute.xlu0 %1967
  %1969 = vrot.lane.b32.xlu0 %v1830, 2
  %v1970 = vpop.permute.xlu0 %1969
  %1971 = vrot.lane.b32.xlu0 %v1831, 2
  %v1972 = vpop.permute.xlu0 %1971
  %1973 = vrot.lane.b32.xlu0 %v1832, 2
  %v1974 = vpop.permute.xlu0 %1973
  %1975 = vrot.lane.b32.xlu0 %v1833, 2
  %v1976 = vpop.permute.xlu0 %1975
  %1977 = vrot.lane.b32.xlu0 %v1834, 2
  %v1978 = vpop.permute.xlu0 %1977
  %1979 = vrot.lane.b32.xlu0 %v1835, 2
  %v1980 = vpop.permute.xlu0 %1979
  %1981 = vrot.lane.b32.xlu0 %v1836, 2
  %v1982 = vpop.permute.xlu0 %1981
  %1983 = vrot.lane.b32.xlu0 %v1837, 2
  %v1984 = vpop.permute.xlu0 %1983
  %1985 = vrot.lane.b32.xlu0 %v1838, 2
  %v1986 = vpop.permute.xlu0 %1985
  %1987 = vrot.lane.b32.xlu0 %v1839, 2
  %v1988 = vpop.permute.xlu0 %1987
  %1989 = vrot.lane.b32.xlu0 %v1840, 2
  %v1990 = vpop.permute.xlu0 %1989
  %1991 = vrot.lane.b32.xlu0 %v1841, 2
  %v1992 = vpop.permute.xlu0 %1991
  %1993 = vrot.lane.b32.xlu0 %v1842, 2
  %v1994 = vpop.permute.xlu0 %1993
  %1995 = vrot.lane.b32.xlu0 %v1843, 2
  %v1996 = vpop.permute.xlu0 %1995
  %1997 = vrot.lane.b32.xlu0 %v1844, 2
  %v1998 = vpop.permute.xlu0 %1997
  %1999 = vrot.lane.b32.xlu0 %v1845, 2
  %v2000 = vpop.permute.xlu0 %1999
  %2001 = vrot.lane.b32.xlu0 %v1846, 2
  %v2002 = vpop.permute.xlu0 %2001
  %2003 = vrot.lane.b32.xlu0 %v1847, 2
  %v2004 = vpop.permute.xlu0 %2003
  %2005 = vrot.lane.b32.xlu0 %v1848, 2
  %v2006 = vpop.permute.xlu0 %2005
  %2007 = vrot.lane.b32.xlu0 %v1849, 2
  %v2008 = vpop.permute.xlu0 %2007
  %2009 = vrot.lane.b32.xlu0 %v1850, 2
  %v2010 = vpop.permute.xlu0 %2009
  %2011 = vrot.lane.b32.xlu0 %v1851, 2
  %v2012 = vpop.permute.xlu0 %2011
  %2013 = vrot.lane.b32.xlu0 %v1852, 2
  %v2014 = vpop.permute.xlu0 %2013
  %2015 = vrot.lane.b32.xlu0 %v1853, 2
  %v2016 = vpop.permute.xlu0 %2015
  %2017 = vrot.lane.b32.xlu0 %v1854, 2
  %v2018 = vpop.permute.xlu0 %2017
  %2019 = vrot.lane.b32.xlu0 %v1855, 2
  %v2020 = vpop.permute.xlu0 %2019
  %2021 = vrot.lane.b32.xlu0 %v1856, 2
  %v2022 = vpop.permute.xlu0 %2021
  %2023 = vrot.lane.b32.xlu0 %v1857, 2
  %v2024 = vpop.permute.xlu0 %2023
  %2025 = vrot.lane.b32.xlu0 %v1858, 2
  %v2026 = vpop.permute.xlu0 %2025
  %2027 = vrot.lane.b32.xlu0 %v1859, 2
  %v2028 = vpop.permute.xlu0 %2027
  %2029 = vrot.lane.b32.xlu0 %v1860, 2
  %v2030 = vpop.permute.xlu0 %2029
  %2031 = vrot.lane.b32.xlu0 %v1861, 2
  %v2032 = vpop.permute.xlu0 %2031
  %2033 = vrot.lane.b32.xlu0 %v1862, 2
  %v2034 = vpop.permute.xlu0 %2033
  %2035 = vrot.lane.b32.xlu0 %v1863, 2
  %v2036 = vpop.permute.xlu0 %2035
  %2037 = vrot.lane.b32.xlu0 %v1864, 2
  %v2038 = vpop.permute.xlu0 %2037
  %2039 = vrot.lane.b32.xlu0 %v1865, 2
  %v2040 = vpop.permute.xlu0 %2039
  %2041 = vrot.lane.b32.xlu0 %v1866, 2
  %v2042 = vpop.permute.xlu0 %2041
  %2043 = vrot.lane.b32.xlu0 %v1867, 2
  %v2044 = vpop.permute.xlu0 %2043
  %2045 = vrot.lane.b32.xlu0 %v1868, 2
  %v2046 = vpop.permute.xlu0 %2045
  %2047 = vrot.lane.b32.xlu0 %v1869, 2
  %v2048 = vpop.permute.xlu0 %2047
  %2049 = vrot.lane.b32.xlu0 %v1870, 2
  %v2050 = vpop.permute.xlu0 %2049
  %2051 = vrot.lane.b32.xlu0 %v1871, 2
  %v2052 = vpop.permute.xlu0 %2051
  %2053 = vrot.lane.b32.xlu0 %v1872, 2
  %v2054 = vpop.permute.xlu0 %2053
  %2055 = vrot.lane.b32.xlu0 %v1873, 2
  %v2056 = vpop.permute.xlu0 %2055
  %2057 = vrot.lane.b32.xlu0 %v1874, 2
  %v2058 = vpop.permute.xlu0 %2057
  %2059 = vrot.lane.b32.xlu0 %v1875, 2
  %v2060 = vpop.permute.xlu0 %2059
  %2061 = vrot.lane.b32.xlu0 %v1876, 2
  %v2062 = vpop.permute.xlu0 %2061
  %2063 = vrot.lane.b32.xlu0 %v1877, 2
  %v2064 = vpop.permute.xlu0 %2063
  %2065 = vrot.lane.b32.xlu0 %v1878, 2
  %v2066 = vpop.permute.xlu0 %2065
  %2067 = vrot.lane.b32.xlu0 %v1879, 2
  %v2068 = vpop.permute.xlu0 %2067
  %2069 = vrot.lane.b32.xlu0 %v1880, 2
  %v2070 = vpop.permute.xlu0 %2069
  %2071 = vrot.lane.b32.xlu0 %v1881, 2
  %v2072 = vpop.permute.xlu0 %2071
  %2073 = vrot.lane.b32.xlu0 %v1882, 2
  %v2074 = vpop.permute.xlu0 %2073
  %2203 = vrot.lane.b32.xlu0 %v1755, 2
  %v2204 = vpop.permute.xlu0 %2203
  %2205 = vrot.lane.b32.xlu0 %v1756, 2
  %v2206 = vpop.permute.xlu0 %2205
  %2207 = vrot.lane.b32.xlu0 %v1757, 2
  %v2208 = vpop.permute.xlu0 %2207
  %2209 = vrot.lane.b32.xlu0 %v1758, 2
  %v2210 = vpop.permute.xlu0 %2209
  %2211 = vrot.lane.b32.xlu0 %v1759, 2
  %v2212 = vpop.permute.xlu0 %2211
  %2213 = vrot.lane.b32.xlu0 %v1760, 2
  %v2214 = vpop.permute.xlu0 %2213
  %2215 = vrot.lane.b32.xlu0 %v1761, 2
  %v2216 = vpop.permute.xlu0 %2215
  %2217 = vrot.lane.b32.xlu0 %v1762, 2
  %v2218 = vpop.permute.xlu0 %2217
  %2219 = vrot.lane.b32.xlu0 %v1763, 2
  %v2220 = vpop.permute.xlu0 %2219
  %2221 = vrot.lane.b32.xlu0 %v1764, 2
  %v2222 = vpop.permute.xlu0 %2221
  %2223 = vrot.lane.b32.xlu0 %v1765, 2
  %v2224 = vpop.permute.xlu0 %2223
  %2225 = vrot.lane.b32.xlu0 %v1766, 2
  %v2226 = vpop.permute.xlu0 %2225
  %2227 = vrot.lane.b32.xlu0 %v1767, 2
  %v2228 = vpop.permute.xlu0 %2227
  %2229 = vrot.lane.b32.xlu0 %v1768, 2
  %v2230 = vpop.permute.xlu0 %2229
  %2231 = vrot.lane.b32.xlu0 %v1769, 2
  %v2232 = vpop.permute.xlu0 %2231
  %2233 = vrot.lane.b32.xlu0 %v1770, 2
  %v2234 = vpop.permute.xlu0 %2233
  %2235 = vrot.lane.b32.xlu0 %v1771, 2
  %v2236 = vpop.permute.xlu0 %2235
  %2237 = vrot.lane.b32.xlu0 %v1772, 2
  %v2238 = vpop.permute.xlu0 %2237
  %2239 = vrot.lane.b32.xlu0 %v1773, 2
  %v2240 = vpop.permute.xlu0 %2239
  %2241 = vrot.lane.b32.xlu0 %v1774, 2
  %v2242 = vpop.permute.xlu0 %2241
  %2243 = vrot.lane.b32.xlu0 %v1775, 2
  %v2244 = vpop.permute.xlu0 %2243
  %2245 = vrot.lane.b32.xlu0 %v1776, 2
  %v2246 = vpop.permute.xlu0 %2245
  %2247 = vrot.lane.b32.xlu0 %v1777, 2
  %v2248 = vpop.permute.xlu0 %2247
  %2249 = vrot.lane.b32.xlu0 %v1778, 2
  %v2250 = vpop.permute.xlu0 %2249
  %2251 = vrot.lane.b32.xlu0 %v1779, 2
  %v2252 = vpop.permute.xlu0 %2251
  %2253 = vrot.lane.b32.xlu0 %v1780, 2
  %v2254 = vpop.permute.xlu0 %2253
  %2255 = vrot.lane.b32.xlu0 %v1781, 2
  %v2256 = vpop.permute.xlu0 %2255
  %2257 = vrot.lane.b32.xlu0 %v1782, 2
  %v2258 = vpop.permute.xlu0 %2257
  %2259 = vrot.lane.b32.xlu0 %v1783, 2
  %v2260 = vpop.permute.xlu0 %2259
  %2261 = vrot.lane.b32.xlu0 %v1784, 2
  %v2262 = vpop.permute.xlu0 %2261
  %2263 = vrot.lane.b32.xlu0 %v1785, 2
  %v2264 = vpop.permute.xlu0 %2263
  %2265 = vrot.lane.b32.xlu0 %v1786, 2
  %v2266 = vpop.permute.xlu0 %2265
  %2267 = vrot.lane.b32.xlu0 %v1787, 2
  %v2268 = vpop.permute.xlu0 %2267
  %2269 = vrot.lane.b32.xlu0 %v1788, 2
  %v2270 = vpop.permute.xlu0 %2269
  %2271 = vrot.lane.b32.xlu0 %v1789, 2
  %v2272 = vpop.permute.xlu0 %2271
  %2273 = vrot.lane.b32.xlu0 %v1790, 2
  %v2274 = vpop.permute.xlu0 %2273
  %2275 = vrot.lane.b32.xlu0 %v1791, 2
  %v2276 = vpop.permute.xlu0 %2275
  %2277 = vrot.lane.b32.xlu0 %v1792, 2
  %v2278 = vpop.permute.xlu0 %2277
  %2279 = vrot.lane.b32.xlu0 %v1793, 2
  %v2280 = vpop.permute.xlu0 %2279
  %2281 = vrot.lane.b32.xlu0 %v1794, 2
  %v2282 = vpop.permute.xlu0 %2281
  %2283 = vrot.lane.b32.xlu0 %v1795, 2
  %v2284 = vpop.permute.xlu0 %2283
  %2285 = vrot.lane.b32.xlu0 %v1796, 2
  %v2286 = vpop.permute.xlu0 %2285
  %2287 = vrot.lane.b32.xlu0 %v1797, 2
  %v2288 = vpop.permute.xlu0 %2287
  %2289 = vrot.lane.b32.xlu0 %v1798, 2
  %v2290 = vpop.permute.xlu0 %2289
  %2291 = vrot.lane.b32.xlu0 %v1799, 2
  %v2292 = vpop.permute.xlu0 %2291
  %2293 = vrot.lane.b32.xlu0 %v1800, 2
  %v2294 = vpop.permute.xlu0 %2293
  %2295 = vrot.lane.b32.xlu0 %v1801, 2
  %v2296 = vpop.permute.xlu0 %2295
  %2297 = vrot.lane.b32.xlu0 %v1802, 2
  %v2298 = vpop.permute.xlu0 %2297
  %2299 = vrot.lane.b32.xlu0 %v1803, 2
  %v2300 = vpop.permute.xlu0 %2299
  %2301 = vrot.lane.b32.xlu0 %v1804, 2
  %v2302 = vpop.permute.xlu0 %2301
  %2303 = vrot.lane.b32.xlu0 %v1805, 2
  %v2304 = vpop.permute.xlu0 %2303
  %2305 = vrot.lane.b32.xlu0 %v1806, 2
  %v2306 = vpop.permute.xlu0 %2305
  %2307 = vrot.lane.b32.xlu0 %v1807, 2
  %v2308 = vpop.permute.xlu0 %2307
  %2309 = vrot.lane.b32.xlu0 %v1808, 2
  %v2310 = vpop.permute.xlu0 %2309
  %2311 = vrot.lane.b32.xlu0 %v1809, 2
  %v2312 = vpop.permute.xlu0 %2311
  %2313 = vrot.lane.b32.xlu0 %v1810, 2
  %v2314 = vpop.permute.xlu0 %2313
  %2315 = vrot.lane.b32.xlu0 %v1811, 2
  %v2316 = vpop.permute.xlu0 %2315
  %2317 = vrot.lane.b32.xlu0 %v1812, 2
  %v2318 = vpop.permute.xlu0 %2317
  %2319 = vrot.lane.b32.xlu0 %v1813, 2
  %v2320 = vpop.permute.xlu0 %2319
  %2321 = vrot.lane.b32.xlu0 %v1814, 2
  %v2322 = vpop.permute.xlu0 %2321
  %2323 = vrot.lane.b32.xlu0 %v1815, 2
  %v2324 = vpop.permute.xlu0 %2323
  %2325 = vrot.lane.b32.xlu0 %v1816, 2
  %v2326 = vpop.permute.xlu0 %2325
  %2327 = vrot.lane.b32.xlu0 %v1817, 2
  %v2328 = vpop.permute.xlu0 %2327
  %2329 = vrot.lane.b32.xlu0 %v1818, 2
  %v2330 = vpop.permute.xlu0 %2329
  %2395 = vrot.lane.b32.xlu0 %v1819, 4
  %v2396 = vpop.permute.xlu0 %2395
  %2397 = vrot.lane.b32.xlu0 %v1820, 4
  %v2398 = vpop.permute.xlu0 %2397
  %2399 = vrot.lane.b32.xlu0 %v1821, 4
  %v2400 = vpop.permute.xlu0 %2399
  %2401 = vrot.lane.b32.xlu0 %v1822, 4
  %v2402 = vpop.permute.xlu0 %2401
  %2403 = vrot.lane.b32.xlu0 %v1823, 4
  %v2404 = vpop.permute.xlu0 %2403
  %2405 = vrot.lane.b32.xlu0 %v1824, 4
  %v2406 = vpop.permute.xlu0 %2405
  %2407 = vrot.lane.b32.xlu0 %v1825, 4
  %v2408 = vpop.permute.xlu0 %2407
  %2409 = vrot.lane.b32.xlu0 %v1826, 4
  %v2410 = vpop.permute.xlu0 %2409
  %2411 = vrot.lane.b32.xlu0 %v1827, 4
  %v2412 = vpop.permute.xlu0 %2411
  %2413 = vrot.lane.b32.xlu0 %v1828, 4
  %v2414 = vpop.permute.xlu0 %2413
  %2415 = vrot.lane.b32.xlu0 %v1829, 4
  %v2416 = vpop.permute.xlu0 %2415
  %2417 = vrot.lane.b32.xlu0 %v1830, 4
  %v2418 = vpop.permute.xlu0 %2417
  %2419 = vrot.lane.b32.xlu0 %v1831, 4
  %v2420 = vpop.permute.xlu0 %2419
  %2421 = vrot.lane.b32.xlu0 %v1832, 4
  %v2422 = vpop.permute.xlu0 %2421
  %2423 = vrot.lane.b32.xlu0 %v1833, 4
  %v2424 = vpop.permute.xlu0 %2423
  %2425 = vrot.lane.b32.xlu0 %v1834, 4
  %v2426 = vpop.permute.xlu0 %2425
  %2427 = vrot.lane.b32.xlu0 %v1835, 4
  %v2428 = vpop.permute.xlu0 %2427
  %2429 = vrot.lane.b32.xlu0 %v1836, 4
  %v2430 = vpop.permute.xlu0 %2429
  %2431 = vrot.lane.b32.xlu0 %v1837, 4
  %v2432 = vpop.permute.xlu0 %2431
  %2433 = vrot.lane.b32.xlu0 %v1838, 4
  %v2434 = vpop.permute.xlu0 %2433
  %2435 = vrot.lane.b32.xlu0 %v1839, 4
  %v2436 = vpop.permute.xlu0 %2435
  %2437 = vrot.lane.b32.xlu0 %v1840, 4
  %v2438 = vpop.permute.xlu0 %2437
  %2439 = vrot.lane.b32.xlu0 %v1841, 4
  %v2440 = vpop.permute.xlu0 %2439
  %2441 = vrot.lane.b32.xlu0 %v1842, 4
  %v2442 = vpop.permute.xlu0 %2441
  %2443 = vrot.lane.b32.xlu0 %v1843, 4
  %v2444 = vpop.permute.xlu0 %2443
  %2445 = vrot.lane.b32.xlu0 %v1844, 4
  %v2446 = vpop.permute.xlu0 %2445
  %2447 = vrot.lane.b32.xlu0 %v1845, 4
  %v2448 = vpop.permute.xlu0 %2447
  %2449 = vrot.lane.b32.xlu0 %v1846, 4
  %v2450 = vpop.permute.xlu0 %2449
  %2451 = vrot.lane.b32.xlu0 %v1847, 4
  %v2452 = vpop.permute.xlu0 %2451
  %2453 = vrot.lane.b32.xlu0 %v1848, 4
  %v2454 = vpop.permute.xlu0 %2453
  %2455 = vrot.lane.b32.xlu0 %v1849, 4
  %v2456 = vpop.permute.xlu0 %2455
  %2457 = vrot.lane.b32.xlu0 %v1850, 4
  %v2458 = vpop.permute.xlu0 %2457
  %2459 = vrot.lane.b32.xlu0 %v1851, 4
  %v2460 = vpop.permute.xlu0 %2459
  %2461 = vrot.lane.b32.xlu0 %v1852, 4
  %v2462 = vpop.permute.xlu0 %2461
  %2463 = vrot.lane.b32.xlu0 %v1853, 4
  %v2464 = vpop.permute.xlu0 %2463
  %2465 = vrot.lane.b32.xlu0 %v1854, 4
  %v2466 = vpop.permute.xlu0 %2465
  %2467 = vrot.lane.b32.xlu0 %v1855, 4
  %v2468 = vpop.permute.xlu0 %2467
  %2469 = vrot.lane.b32.xlu0 %v1856, 4
  %v2470 = vpop.permute.xlu0 %2469
  %2471 = vrot.lane.b32.xlu0 %v1857, 4
  %v2472 = vpop.permute.xlu0 %2471
  %2473 = vrot.lane.b32.xlu0 %v1858, 4
  %v2474 = vpop.permute.xlu0 %2473
  %2475 = vrot.lane.b32.xlu0 %v1859, 4
  %v2476 = vpop.permute.xlu0 %2475
  %2477 = vrot.lane.b32.xlu0 %v1860, 4
  %v2478 = vpop.permute.xlu0 %2477
  %2479 = vrot.lane.b32.xlu0 %v1861, 4
  %v2480 = vpop.permute.xlu0 %2479
  %2481 = vrot.lane.b32.xlu0 %v1862, 4
  %v2482 = vpop.permute.xlu0 %2481
  %2483 = vrot.lane.b32.xlu0 %v1863, 4
  %v2484 = vpop.permute.xlu0 %2483
  %2485 = vrot.lane.b32.xlu0 %v1864, 4
  %v2486 = vpop.permute.xlu0 %2485
  %2487 = vrot.lane.b32.xlu0 %v1865, 4
  %v2488 = vpop.permute.xlu0 %2487
  %2489 = vrot.lane.b32.xlu0 %v1866, 4
  %v2490 = vpop.permute.xlu0 %2489
  %2491 = vrot.lane.b32.xlu0 %v1867, 4
  %v2492 = vpop.permute.xlu0 %2491
  %2493 = vrot.lane.b32.xlu0 %v1868, 4
  %v2494 = vpop.permute.xlu0 %2493
  %2495 = vrot.lane.b32.xlu0 %v1869, 4
  %v2496 = vpop.permute.xlu0 %2495
  %2497 = vrot.lane.b32.xlu0 %v1870, 4
  %v2498 = vpop.permute.xlu0 %2497
  %2499 = vrot.lane.b32.xlu0 %v1871, 4
  %v2500 = vpop.permute.xlu0 %2499
  %2501 = vrot.lane.b32.xlu0 %v1872, 4
  %v2502 = vpop.permute.xlu0 %2501
  %2503 = vrot.lane.b32.xlu0 %v1873, 4
  %v2504 = vpop.permute.xlu0 %2503
  %2505 = vrot.lane.b32.xlu0 %v1874, 4
  %v2506 = vpop.permute.xlu0 %2505
  %2507 = vrot.lane.b32.xlu0 %v1875, 4
  %v2508 = vpop.permute.xlu0 %2507
  %2509 = vrot.lane.b32.xlu0 %v1876, 4
  %v2510 = vpop.permute.xlu0 %2509
  %2511 = vrot.lane.b32.xlu0 %v1877, 4
  %v2512 = vpop.permute.xlu0 %2511
  %2513 = vrot.lane.b32.xlu0 %v1878, 4
  %v2514 = vpop.permute.xlu0 %2513
  %2515 = vrot.lane.b32.xlu0 %v1879, 4
  %v2516 = vpop.permute.xlu0 %2515
  %2517 = vrot.lane.b32.xlu0 %v1880, 4
  %v2518 = vpop.permute.xlu0 %2517
  %2519 = vrot.lane.b32.xlu0 %v1881, 4
  %v2520 = vpop.permute.xlu0 %2519
  %2521 = vrot.lane.b32.xlu0 %v1882, 4
  %v2522 = vpop.permute.xlu0 %2521
  %2587 = vrot.lane.b32.xlu0 %v1755, 4
  %v2588 = vpop.permute.xlu0 %2587
  %2589 = vrot.lane.b32.xlu0 %v1756, 4
  %v2590 = vpop.permute.xlu0 %2589
  %2591 = vrot.lane.b32.xlu0 %v1757, 4
  %v2592 = vpop.permute.xlu0 %2591
  %2593 = vrot.lane.b32.xlu0 %v1758, 4
  %v2594 = vpop.permute.xlu0 %2593
  %2595 = vrot.lane.b32.xlu0 %v1759, 4
  %v2596 = vpop.permute.xlu0 %2595
  %2597 = vrot.lane.b32.xlu0 %v1760, 4
  %v2598 = vpop.permute.xlu0 %2597
  %2599 = vrot.lane.b32.xlu0 %v1761, 4
  %v2600 = vpop.permute.xlu0 %2599
  %2601 = vrot.lane.b32.xlu0 %v1762, 4
  %v2602 = vpop.permute.xlu0 %2601
  %2603 = vrot.lane.b32.xlu0 %v1763, 4
  %v2604 = vpop.permute.xlu0 %2603
  %2605 = vrot.lane.b32.xlu0 %v1764, 4
  %v2606 = vpop.permute.xlu0 %2605
  %2607 = vrot.lane.b32.xlu0 %v1765, 4
  %v2608 = vpop.permute.xlu0 %2607
  %2609 = vrot.lane.b32.xlu0 %v1766, 4
  %v2610 = vpop.permute.xlu0 %2609
  %2611 = vrot.lane.b32.xlu0 %v1767, 4
  %v2612 = vpop.permute.xlu0 %2611
  %2613 = vrot.lane.b32.xlu0 %v1768, 4
  %v2614 = vpop.permute.xlu0 %2613
  %2615 = vrot.lane.b32.xlu0 %v1769, 4
  %v2616 = vpop.permute.xlu0 %2615
  %2617 = vrot.lane.b32.xlu0 %v1770, 4
  %v2618 = vpop.permute.xlu0 %2617
  %2619 = vrot.lane.b32.xlu0 %v1771, 4
  %v2620 = vpop.permute.xlu0 %2619
  %2621 = vrot.lane.b32.xlu0 %v1772, 4
  %v2622 = vpop.permute.xlu0 %2621
  %2623 = vrot.lane.b32.xlu0 %v1773, 4
  %v2624 = vpop.permute.xlu0 %2623
  %2625 = vrot.lane.b32.xlu0 %v1774, 4
  %v2626 = vpop.permute.xlu0 %2625
  %2627 = vrot.lane.b32.xlu0 %v1775, 4
  %v2628 = vpop.permute.xlu0 %2627
  %2629 = vrot.lane.b32.xlu0 %v1776, 4
  %v2630 = vpop.permute.xlu0 %2629
  %2631 = vrot.lane.b32.xlu0 %v1777, 4
  %v2632 = vpop.permute.xlu0 %2631
  %2633 = vrot.lane.b32.xlu0 %v1778, 4
  %v2634 = vpop.permute.xlu0 %2633
  %2635 = vrot.lane.b32.xlu0 %v1779, 4
  %v2636 = vpop.permute.xlu0 %2635
  %2637 = vrot.lane.b32.xlu0 %v1780, 4
  %v2638 = vpop.permute.xlu0 %2637
  %2639 = vrot.lane.b32.xlu0 %v1781, 4
  %v2640 = vpop.permute.xlu0 %2639
  %2641 = vrot.lane.b32.xlu0 %v1782, 4
  %v2642 = vpop.permute.xlu0 %2641
  %2643 = vrot.lane.b32.xlu0 %v1783, 4
  %v2644 = vpop.permute.xlu0 %2643
  %2645 = vrot.lane.b32.xlu0 %v1784, 4
  %v2646 = vpop.permute.xlu0 %2645
  %2647 = vrot.lane.b32.xlu0 %v1785, 4
  %v2648 = vpop.permute.xlu0 %2647
  %2649 = vrot.lane.b32.xlu0 %v1786, 4
  %v2650 = vpop.permute.xlu0 %2649
  %2651 = vrot.lane.b32.xlu0 %v1787, 4
  %v2652 = vpop.permute.xlu0 %2651
  %2653 = vrot.lane.b32.xlu0 %v1788, 4
  %v2654 = vpop.permute.xlu0 %2653
  %2655 = vrot.lane.b32.xlu0 %v1789, 4
  %v2656 = vpop.permute.xlu0 %2655
  %2657 = vrot.lane.b32.xlu0 %v1790, 4
  %v2658 = vpop.permute.xlu0 %2657
  %2659 = vrot.lane.b32.xlu0 %v1791, 4
  %v2660 = vpop.permute.xlu0 %2659
  %2661 = vrot.lane.b32.xlu0 %v1792, 4
  %v2662 = vpop.permute.xlu0 %2661
  %2663 = vrot.lane.b32.xlu0 %v1793, 4
  %v2664 = vpop.permute.xlu0 %2663
  %2665 = vrot.lane.b32.xlu0 %v1794, 4
  %v2666 = vpop.permute.xlu0 %2665
  %2667 = vrot.lane.b32.xlu0 %v1795, 4
  %v2668 = vpop.permute.xlu0 %2667
  %2669 = vrot.lane.b32.xlu0 %v1796, 4
  %v2670 = vpop.permute.xlu0 %2669
  %2671 = vrot.lane.b32.xlu0 %v1797, 4
  %v2672 = vpop.permute.xlu0 %2671
  %2673 = vrot.lane.b32.xlu0 %v1798, 4
  %v2674 = vpop.permute.xlu0 %2673
  %2675 = vrot.lane.b32.xlu0 %v1799, 4
  %v2676 = vpop.permute.xlu0 %2675
  %2677 = vrot.lane.b32.xlu0 %v1800, 4
  %v2678 = vpop.permute.xlu0 %2677
  %2679 = vrot.lane.b32.xlu0 %v1801, 4
  %v2680 = vpop.permute.xlu0 %2679
  %2681 = vrot.lane.b32.xlu0 %v1802, 4
  %v2682 = vpop.permute.xlu0 %2681
  %2683 = vrot.lane.b32.xlu0 %v1803, 4
  %v2684 = vpop.permute.xlu0 %2683
  %2685 = vrot.lane.b32.xlu0 %v1804, 4
  %v2686 = vpop.permute.xlu0 %2685
  %2687 = vrot.lane.b32.xlu0 %v1805, 4
  %v2688 = vpop.permute.xlu0 %2687
  %2689 = vrot.lane.b32.xlu0 %v1806, 4
  %v2690 = vpop.permute.xlu0 %2689
  %2691 = vrot.lane.b32.xlu0 %v1807, 4
  %v2692 = vpop.permute.xlu0 %2691
  %2693 = vrot.lane.b32.xlu0 %v1808, 4
  %v2694 = vpop.permute.xlu0 %2693
  %2695 = vrot.lane.b32.xlu0 %v1809, 4
  %v2696 = vpop.permute.xlu0 %2695
  %2697 = vrot.lane.b32.xlu0 %v1810, 4
  %v2698 = vpop.permute.xlu0 %2697
  %2699 = vrot.lane.b32.xlu0 %v1811, 4
  %v2700 = vpop.permute.xlu0 %2699
  %2701 = vrot.lane.b32.xlu0 %v1812, 4
  %v2702 = vpop.permute.xlu0 %2701
  %2703 = vrot.lane.b32.xlu0 %v1813, 4
  %v2704 = vpop.permute.xlu0 %2703
  %2705 = vrot.lane.b32.xlu0 %v1814, 4
  %v2706 = vpop.permute.xlu0 %2705
  %2707 = vrot.lane.b32.xlu0 %v1815, 4
  %v2708 = vpop.permute.xlu0 %2707
  %2709 = vrot.lane.b32.xlu0 %v1816, 4
  %v2710 = vpop.permute.xlu0 %2709
  %2711 = vrot.lane.b32.xlu0 %v1817, 4
  %v2712 = vpop.permute.xlu0 %2711
  %2713 = vrot.lane.b32.xlu0 %v1818, 4
  %v2714 = vpop.permute.xlu0 %2713
  %2779 = vrot.lane.b32.xlu0 %v1819, 6
  %v2780 = vpop.permute.xlu0 %2779
  %2781 = vrot.lane.b32.xlu0 %v1820, 6
  %v2782 = vpop.permute.xlu0 %2781
  %2783 = vrot.lane.b32.xlu0 %v1821, 6
  %v2784 = vpop.permute.xlu0 %2783
  %2785 = vrot.lane.b32.xlu0 %v1822, 6
  %v2786 = vpop.permute.xlu0 %2785
  %2787 = vrot.lane.b32.xlu0 %v1823, 6
  %v2788 = vpop.permute.xlu0 %2787
  %2789 = vrot.lane.b32.xlu0 %v1824, 6
  %v2790 = vpop.permute.xlu0 %2789
  %2791 = vrot.lane.b32.xlu0 %v1825, 6
  %v2792 = vpop.permute.xlu0 %2791
  %2793 = vrot.lane.b32.xlu0 %v1826, 6
  %v2794 = vpop.permute.xlu0 %2793
  %2795 = vrot.lane.b32.xlu0 %v1827, 6
  %v2796 = vpop.permute.xlu0 %2795
  %2797 = vrot.lane.b32.xlu0 %v1828, 6
  %v2798 = vpop.permute.xlu0 %2797
  %2799 = vrot.lane.b32.xlu0 %v1829, 6
  %v2800 = vpop.permute.xlu0 %2799
  %2801 = vrot.lane.b32.xlu0 %v1830, 6
  %v2802 = vpop.permute.xlu0 %2801
  %2803 = vrot.lane.b32.xlu0 %v1831, 6
  %v2804 = vpop.permute.xlu0 %2803
  %2805 = vrot.lane.b32.xlu0 %v1832, 6
  %v2806 = vpop.permute.xlu0 %2805
  %2807 = vrot.lane.b32.xlu0 %v1833, 6
  %v2808 = vpop.permute.xlu0 %2807
  %2809 = vrot.lane.b32.xlu0 %v1834, 6
  %v2810 = vpop.permute.xlu0 %2809
  %2811 = vrot.lane.b32.xlu0 %v1835, 6
  %v2812 = vpop.permute.xlu0 %2811
  %2813 = vrot.lane.b32.xlu0 %v1836, 6
  %v2814 = vpop.permute.xlu0 %2813
  %2815 = vrot.lane.b32.xlu0 %v1837, 6
  %v2816 = vpop.permute.xlu0 %2815
  %2817 = vrot.lane.b32.xlu0 %v1838, 6
  %v2818 = vpop.permute.xlu0 %2817
  %2819 = vrot.lane.b32.xlu0 %v1839, 6
  %v2820 = vpop.permute.xlu0 %2819
  %2821 = vrot.lane.b32.xlu0 %v1840, 6
  %v2822 = vpop.permute.xlu0 %2821
  %2823 = vrot.lane.b32.xlu0 %v1841, 6
  %v2824 = vpop.permute.xlu0 %2823
  %2825 = vrot.lane.b32.xlu0 %v1842, 6
  %v2826 = vpop.permute.xlu0 %2825
  %2827 = vrot.lane.b32.xlu0 %v1843, 6
  %v2828 = vpop.permute.xlu0 %2827
  %2829 = vrot.lane.b32.xlu0 %v1844, 6
  %v2830 = vpop.permute.xlu0 %2829
  %2831 = vrot.lane.b32.xlu0 %v1845, 6
  %v2832 = vpop.permute.xlu0 %2831
  %2833 = vrot.lane.b32.xlu0 %v1846, 6
  %v2834 = vpop.permute.xlu0 %2833
  %2835 = vrot.lane.b32.xlu0 %v1847, 6
  %v2836 = vpop.permute.xlu0 %2835
  %2837 = vrot.lane.b32.xlu0 %v1848, 6
  %v2838 = vpop.permute.xlu0 %2837
  %2839 = vrot.lane.b32.xlu0 %v1849, 6
  %v2840 = vpop.permute.xlu0 %2839
  %2841 = vrot.lane.b32.xlu0 %v1850, 6
  %v2842 = vpop.permute.xlu0 %2841
  %2843 = vrot.lane.b32.xlu0 %v1851, 6
  %v2844 = vpop.permute.xlu0 %2843
  %2845 = vrot.lane.b32.xlu0 %v1852, 6
  %v2846 = vpop.permute.xlu0 %2845
  %2847 = vrot.lane.b32.xlu0 %v1853, 6
  %v2848 = vpop.permute.xlu0 %2847
  %2849 = vrot.lane.b32.xlu0 %v1854, 6
  %v2850 = vpop.permute.xlu0 %2849
  %2851 = vrot.lane.b32.xlu0 %v1855, 6
  %v2852 = vpop.permute.xlu0 %2851
  %2853 = vrot.lane.b32.xlu0 %v1856, 6
  %v2854 = vpop.permute.xlu0 %2853
  %2855 = vrot.lane.b32.xlu0 %v1857, 6
  %v2856 = vpop.permute.xlu0 %2855
  %2857 = vrot.lane.b32.xlu0 %v1858, 6
  %v2858 = vpop.permute.xlu0 %2857
  %2859 = vrot.lane.b32.xlu0 %v1859, 6
  %v2860 = vpop.permute.xlu0 %2859
  %2861 = vrot.lane.b32.xlu0 %v1860, 6
  %v2862 = vpop.permute.xlu0 %2861
  %2863 = vrot.lane.b32.xlu0 %v1861, 6
  %v2864 = vpop.permute.xlu0 %2863
  %2865 = vrot.lane.b32.xlu0 %v1862, 6
  %v2866 = vpop.permute.xlu0 %2865
  %2867 = vrot.lane.b32.xlu0 %v1863, 6
  %v2868 = vpop.permute.xlu0 %2867
  %2869 = vrot.lane.b32.xlu0 %v1864, 6
  %v2870 = vpop.permute.xlu0 %2869
  %2871 = vrot.lane.b32.xlu0 %v1865, 6
  %v2872 = vpop.permute.xlu0 %2871
  %2873 = vrot.lane.b32.xlu0 %v1866, 6
  %v2874 = vpop.permute.xlu0 %2873
  %2875 = vrot.lane.b32.xlu0 %v1867, 6
  %v2876 = vpop.permute.xlu0 %2875
  %2877 = vrot.lane.b32.xlu0 %v1868, 6
  %v2878 = vpop.permute.xlu0 %2877
  %2879 = vrot.lane.b32.xlu0 %v1869, 6
  %v2880 = vpop.permute.xlu0 %2879
  %2881 = vrot.lane.b32.xlu0 %v1870, 6
  %v2882 = vpop.permute.xlu0 %2881
  %2883 = vrot.lane.b32.xlu0 %v1871, 6
  %v2884 = vpop.permute.xlu0 %2883
  %2885 = vrot.lane.b32.xlu0 %v1872, 6
  %v2886 = vpop.permute.xlu0 %2885
  %2887 = vrot.lane.b32.xlu0 %v1873, 6
  %v2888 = vpop.permute.xlu0 %2887
  %2889 = vrot.lane.b32.xlu0 %v1874, 6
  %v2890 = vpop.permute.xlu0 %2889
  %2891 = vrot.lane.b32.xlu0 %v1875, 6
  %v2892 = vpop.permute.xlu0 %2891
  %2893 = vrot.lane.b32.xlu0 %v1876, 6
  %v2894 = vpop.permute.xlu0 %2893
  %2895 = vrot.lane.b32.xlu0 %v1877, 6
  %v2896 = vpop.permute.xlu0 %2895
  %2897 = vrot.lane.b32.xlu0 %v1878, 6
  %v2898 = vpop.permute.xlu0 %2897
  %2899 = vrot.lane.b32.xlu0 %v1879, 6
  %v2900 = vpop.permute.xlu0 %2899
  %2901 = vrot.lane.b32.xlu0 %v1880, 6
  %v2902 = vpop.permute.xlu0 %2901
  %2903 = vrot.lane.b32.xlu0 %v1881, 6
  %v2904 = vpop.permute.xlu0 %2903
  %2905 = vrot.lane.b32.xlu0 %v1882, 6
  %v2906 = vpop.permute.xlu0 %2905
  %vm2971 = vcmask 15360
  %v2972 = vsel %vm2971, %v1755, %v1948
  %v2973 = vsel %vm2971, %v1756, %v1950
  %v2974 = vsel %vm2971, %v1757, %v1952
  %v2975 = vsel %vm2971, %v1758, %v1954
  %v2976 = vsel %vm2971, %v1759, %v1956
  %v2977 = vsel %vm2971, %v1760, %v1958
  %v2978 = vsel %vm2971, %v1761, %v1960
  %v2979 = vsel %vm2971, %v1762, %v1962
  %v2980 = vsel %vm2971, %v1763, %v1964
  %v2981 = vsel %vm2971, %v1764, %v1966
  %v2982 = vsel %vm2971, %v1765, %v1968
  %v2983 = vsel %vm2971, %v1766, %v1970
  %v2984 = vsel %vm2971, %v1767, %v1972
  %v2985 = vsel %vm2971, %v1768, %v1974
  %v2986 = vsel %vm2971, %v1769, %v1976
  %v2987 = vsel %vm2971, %v1770, %v1978
  %v2988 = vsel %vm2971, %v1771, %v1980
  %v2989 = vsel %vm2971, %v1772, %v1982
  %v2990 = vsel %vm2971, %v1773, %v1984
  %v2991 = vsel %vm2971, %v1774, %v1986
  %v2992 = vsel %vm2971, %v1775, %v1988
  %v2993 = vsel %vm2971, %v1776, %v1990
  %v2994 = vsel %vm2971, %v1777, %v1992
  %v2995 = vsel %vm2971, %v1778, %v1994
  %v2996 = vsel %vm2971, %v1779, %v1996
  %v2997 = vsel %vm2971, %v1780, %v1998
  %v2998 = vsel %vm2971, %v1781, %v2000
  %v2999 = vsel %vm2971, %v1782, %v2002
  %v3000 = vsel %vm2971, %v1783, %v2004
  %v3001 = vsel %vm2971, %v1784, %v2006
  %v3002 = vsel %vm2971, %v1785, %v2008
  %v3003 = vsel %vm2971, %v1786, %v2010
  %v3004 = vsel %vm2971, %v1787, %v2012
  %v3005 = vsel %vm2971, %v1788, %v2014
  %v3006 = vsel %vm2971, %v1789, %v2016
  %v3007 = vsel %vm2971, %v1790, %v2018
  %v3008 = vsel %vm2971, %v1791, %v2020
  %v3009 = vsel %vm2971, %v1792, %v2022
  %v3010 = vsel %vm2971, %v1793, %v2024
  %v3011 = vsel %vm2971, %v1794, %v2026
  %v3012 = vsel %vm2971, %v1795, %v2028
  %v3013 = vsel %vm2971, %v1796, %v2030
  %v3014 = vsel %vm2971, %v1797, %v2032
  %v3015 = vsel %vm2971, %v1798, %v2034
  %v3016 = vsel %vm2971, %v1799, %v2036
  %v3017 = vsel %vm2971, %v1800, %v2038
  %v3018 = vsel %vm2971, %v1801, %v2040
  %v3019 = vsel %vm2971, %v1802, %v2042
  %v3020 = vsel %vm2971, %v1803, %v2044
  %v3021 = vsel %vm2971, %v1804, %v2046
  %v3022 = vsel %vm2971, %v1805, %v2048
  %v3023 = vsel %vm2971, %v1806, %v2050
  %v3024 = vsel %vm2971, %v1807, %v2052
  %v3025 = vsel %vm2971, %v1808, %v2054
  %v3026 = vsel %vm2971, %v1809, %v2056
  %v3027 = vsel %vm2971, %v1810, %v2058
  %v3028 = vsel %vm2971, %v1811, %v2060
  %v3029 = vsel %vm2971, %v1812, %v2062
  %v3030 = vsel %vm2971, %v1813, %v2064
  %v3031 = vsel %vm2971, %v1814, %v2066
  %v3032 = vsel %vm2971, %v1815, %v2068
  %v3033 = vsel %vm2971, %v1816, %v2070
  %v3034 = vsel %vm2971, %v1817, %v2072
  %v3035 = vsel %vm2971, %v1818, %v2074
  %vm3036 = vcmask 31744
  %v3037 = vsel %vm3036, %v2972, %v2204
  %v3038 = vsel %vm3036, %v2973, %v2206
  %v3039 = vsel %vm3036, %v2974, %v2208
  %v3040 = vsel %vm3036, %v2975, %v2210
  %v3041 = vsel %vm3036, %v2976, %v2212
  %v3042 = vsel %vm3036, %v2977, %v2214
  %v3043 = vsel %vm3036, %v2978, %v2216
  %v3044 = vsel %vm3036, %v2979, %v2218
  %v3045 = vsel %vm3036, %v2980, %v2220
  %v3046 = vsel %vm3036, %v2981, %v2222
  %v3047 = vsel %vm3036, %v2982, %v2224
  %v3048 = vsel %vm3036, %v2983, %v2226
  %v3049 = vsel %vm3036, %v2984, %v2228
  %v3050 = vsel %vm3036, %v2985, %v2230
  %v3051 = vsel %vm3036, %v2986, %v2232
  %v3052 = vsel %vm3036, %v2987, %v2234
  %v3053 = vsel %vm3036, %v2988, %v2236
  %v3054 = vsel %vm3036, %v2989, %v2238
  %v3055 = vsel %vm3036, %v2990, %v2240
  %v3056 = vsel %vm3036, %v2991, %v2242
  %v3057 = vsel %vm3036, %v2992, %v2244
  %v3058 = vsel %vm3036, %v2993, %v2246
  %v3059 = vsel %vm3036, %v2994, %v2248
  %v3060 = vsel %vm3036, %v2995, %v2250
  %v3061 = vsel %vm3036, %v2996, %v2252
  %v3062 = vsel %vm3036, %v2997, %v2254
  %v3063 = vsel %vm3036, %v2998, %v2256
  %v3064 = vsel %vm3036, %v2999, %v2258
  %v3065 = vsel %vm3036, %v3000, %v2260
  %v3066 = vsel %vm3036, %v3001, %v2262
  %v3067 = vsel %vm3036, %v3002, %v2264
  %v3068 = vsel %vm3036, %v3003, %v2266
  %v3069 = vsel %vm3036, %v3004, %v2268
  %v3070 = vsel %vm3036, %v3005, %v2270
  %v3071 = vsel %vm3036, %v3006, %v2272
  %v3072 = vsel %vm3036, %v3007, %v2274
  %v3073 = vsel %vm3036, %v3008, %v2276
  %v3074 = vsel %vm3036, %v3009, %v2278
  %v3075 = vsel %vm3036, %v3010, %v2280
  %v3076 = vsel %vm3036, %v3011, %v2282
  %v3077 = vsel %vm3036, %v3012, %v2284
  %v3078 = vsel %vm3036, %v3013, %v2286
  %v3079 = vsel %vm3036, %v3014, %v2288
  %v3080 = vsel %vm3036, %v3015, %v2290
  %v3081 = vsel %vm3036, %v3016, %v2292
  %v3082 = vsel %vm3036, %v3017, %v2294
  %v3083 = vsel %vm3036, %v3018, %v2296
  %v3084 = vsel %vm3036, %v3019, %v2298
  %v3085 = vsel %vm3036, %v3020, %v2300
  %v3086 = vsel %vm3036, %v3021, %v2302
  %v3087 = vsel %vm3036, %v3022, %v2304
  %v3088 = vsel %vm3036, %v3023, %v2306
  %v3089 = vsel %vm3036, %v3024, %v2308
  %v3090 = vsel %vm3036, %v3025, %v2310
  %v3091 = vsel %vm3036, %v3026, %v2312
  %v3092 = vsel %vm3036, %v3027, %v2314
  %v3093 = vsel %vm3036, %v3028, %v2316
  %v3094 = vsel %vm3036, %v3029, %v2318
  %v3095 = vsel %vm3036, %v3030, %v2320
  %v3096 = vsel %vm3036, %v3031, %v2322
  %v3097 = vsel %vm3036, %v3032, %v2324
  %v3098 = vsel %vm3036, %v3033, %v2326
  %v3099 = vsel %vm3036, %v3034, %v2328
  %v3100 = vsel %vm3036, %v3035, %v2330
  %vm3101 = vcmask 48128
  %v3102 = vsel %vm3101, %v3037, %v2396
  %v3103 = vsel %vm3101, %v3038, %v2398
  %v3104 = vsel %vm3101, %v3039, %v2400
  %v3105 = vsel %vm3101, %v3040, %v2402
  %v3106 = vsel %vm3101, %v3041, %v2404
  %v3107 = vsel %vm3101, %v3042, %v2406
  %v3108 = vsel %vm3101, %v3043, %v2408
  %v3109 = vsel %vm3101, %v3044, %v2410
  %v3110 = vsel %vm3101, %v3045, %v2412
  %v3111 = vsel %vm3101, %v3046, %v2414
  %v3112 = vsel %vm3101, %v3047, %v2416
  %v3113 = vsel %vm3101, %v3048, %v2418
  %v3114 = vsel %vm3101, %v3049, %v2420
  %v3115 = vsel %vm3101, %v3050, %v2422
  %v3116 = vsel %vm3101, %v3051, %v2424
  %v3117 = vsel %vm3101, %v3052, %v2426
  %v3118 = vsel %vm3101, %v3053, %v2428
  %v3119 = vsel %vm3101, %v3054, %v2430
  %v3120 = vsel %vm3101, %v3055, %v2432
  %v3121 = vsel %vm3101, %v3056, %v2434
  %v3122 = vsel %vm3101, %v3057, %v2436
  %v3123 = vsel %vm3101, %v3058, %v2438
  %v3124 = vsel %vm3101, %v3059, %v2440
  %v3125 = vsel %vm3101, %v3060, %v2442
  %v3126 = vsel %vm3101, %v3061, %v2444
  %v3127 = vsel %vm3101, %v3062, %v2446
  %v3128 = vsel %vm3101, %v3063, %v2448
  %v3129 = vsel %vm3101, %v3064, %v2450
  %v3130 = vsel %vm3101, %v3065, %v2452
  %v3131 = vsel %vm3101, %v3066, %v2454
  %v3132 = vsel %vm3101, %v3067, %v2456
  %v3133 = vsel %vm3101, %v3068, %v2458
  %v3134 = vsel %vm3101, %v3069, %v2460
  %v3135 = vsel %vm3101, %v3070, %v2462
  %v3136 = vsel %vm3101, %v3071, %v2464
  %v3137 = vsel %vm3101, %v3072, %v2466
  %v3138 = vsel %vm3101, %v3073, %v2468
  %v3139 = vsel %vm3101, %v3074, %v2470
  %v3140 = vsel %vm3101, %v3075, %v2472
  %v3141 = vsel %vm3101, %v3076, %v2474
  %v3142 = vsel %vm3101, %v3077, %v2476
  %v3143 = vsel %vm3101, %v3078, %v2478
  %v3144 = vsel %vm3101, %v3079, %v2480
  %v3145 = vsel %vm3101, %v3080, %v2482
  %v3146 = vsel %vm3101, %v3081, %v2484
  %v3147 = vsel %vm3101, %v3082, %v2486
  %v3148 = vsel %vm3101, %v3083, %v2488
  %v3149 = vsel %vm3101, %v3084, %v2490
  %v3150 = vsel %vm3101, %v3085, %v2492
  %v3151 = vsel %vm3101, %v3086, %v2494
  %v3152 = vsel %vm3101, %v3087, %v2496
  %v3153 = vsel %vm3101, %v3088, %v2498
  %v3154 = vsel %vm3101, %v3089, %v2500
  %v3155 = vsel %vm3101, %v3090, %v2502
  %v3156 = vsel %vm3101, %v3091, %v2504
  %v3157 = vsel %vm3101, %v3092, %v2506
  %v3158 = vsel %vm3101, %v3093, %v2508
  %v3159 = vsel %vm3101, %v3094, %v2510
  %v3160 = vsel %vm3101, %v3095, %v2512
  %v3161 = vsel %vm3101, %v3096, %v2514
  %v3162 = vsel %vm3101, %v3097, %v2516
  %v3163 = vsel %vm3101, %v3098, %v2518
  %v3164 = vsel %vm3101, %v3099, %v2520
  %v3165 = vsel %vm3101, %v3100, %v2522
  %vm3166 = vcmask 64512
  %v3167 = vsel %vm3166, %v3102, %v2588
  %v3168 = vsel %vm3166, %v3103, %v2590
  %v3169 = vsel %vm3166, %v3104, %v2592
  %v3170 = vsel %vm3166, %v3105, %v2594
  %v3171 = vsel %vm3166, %v3106, %v2596
  %v3172 = vsel %vm3166, %v3107, %v2598
  %v3173 = vsel %vm3166, %v3108, %v2600
  %v3174 = vsel %vm3166, %v3109, %v2602
  %v3175 = vsel %vm3166, %v3110, %v2604
  %v3176 = vsel %vm3166, %v3111, %v2606
  %v3177 = vsel %vm3166, %v3112, %v2608
  %v3178 = vsel %vm3166, %v3113, %v2610
  %v3179 = vsel %vm3166, %v3114, %v2612
  %v3180 = vsel %vm3166, %v3115, %v2614
  %v3181 = vsel %vm3166, %v3116, %v2616
  %v3182 = vsel %vm3166, %v3117, %v2618
  %v3183 = vsel %vm3166, %v3118, %v2620
  %v3184 = vsel %vm3166, %v3119, %v2622
  %v3185 = vsel %vm3166, %v3120, %v2624
  %v3186 = vsel %vm3166, %v3121, %v2626
  %v3187 = vsel %vm3166, %v3122, %v2628
  %v3188 = vsel %vm3166, %v3123, %v2630
  %v3189 = vsel %vm3166, %v3124, %v2632
  %v3190 = vsel %vm3166, %v3125, %v2634
  %v3191 = vsel %vm3166, %v3126, %v2636
  %v3192 = vsel %vm3166, %v3127, %v2638
  %v3193 = vsel %vm3166, %v3128, %v2640
  %v3194 = vsel %vm3166, %v3129, %v2642
  %v3195 = vsel %vm3166, %v3130, %v2644
  %v3196 = vsel %vm3166, %v3131, %v2646
  %v3197 = vsel %vm3166, %v3132, %v2648
  %v3198 = vsel %vm3166, %v3133, %v2650
  %v3199 = vsel %vm3166, %v3134, %v2652
  %v3200 = vsel %vm3166, %v3135, %v2654
  %v3201 = vsel %vm3166, %v3136, %v2656
  %v3202 = vsel %vm3166, %v3137, %v2658
  %v3203 = vsel %vm3166, %v3138, %v2660
  %v3204 = vsel %vm3166, %v3139, %v2662
  %v3205 = vsel %vm3166, %v3140, %v2664
  %v3206 = vsel %vm3166, %v3141, %v2666
  %v3207 = vsel %vm3166, %v3142, %v2668
  %v3208 = vsel %vm3166, %v3143, %v2670
  %v3209 = vsel %vm3166, %v3144, %v2672
  %v3210 = vsel %vm3166, %v3145, %v2674
  %v3211 = vsel %vm3166, %v3146, %v2676
  %v3212 = vsel %vm3166, %v3147, %v2678
  %v3213 = vsel %vm3166, %v3148, %v2680
  %v3214 = vsel %vm3166, %v3149, %v2682
  %v3215 = vsel %vm3166, %v3150, %v2684
  %v3216 = vsel %vm3166, %v3151, %v2686
  %v3217 = vsel %vm3166, %v3152, %v2688
  %v3218 = vsel %vm3166, %v3153, %v2690
  %v3219 = vsel %vm3166, %v3154, %v2692
  %v3220 = vsel %vm3166, %v3155, %v2694
  %v3221 = vsel %vm3166, %v3156, %v2696
  %v3222 = vsel %vm3166, %v3157, %v2698
  %v3223 = vsel %vm3166, %v3158, %v2700
  %v3224 = vsel %vm3166, %v3159, %v2702
  %v3225 = vsel %vm3166, %v3160, %v2704
  %v3226 = vsel %vm3166, %v3161, %v2706
  %v3227 = vsel %vm3166, %v3162, %v2708
  %v3228 = vsel %vm3166, %v3163, %v2710
  %v3229 = vsel %vm3166, %v3164, %v2712
  %v3230 = vsel %vm3166, %v3165, %v2714
  %vm3231 = vcmask 80896
  %v3232 = vsel %vm3231, %v3167, %v2780
  %v3233 = vsel %vm3231, %v3168, %v2782
  %v3234 = vsel %vm3231, %v3169, %v2784
  %v3235 = vsel %vm3231, %v3170, %v2786
  %v3236 = vsel %vm3231, %v3171, %v2788
  %v3237 = vsel %vm3231, %v3172, %v2790
  %v3238 = vsel %vm3231, %v3173, %v2792
  %v3239 = vsel %vm3231, %v3174, %v2794
  %v3240 = vsel %vm3231, %v3175, %v2796
  %v3241 = vsel %vm3231, %v3176, %v2798
  %v3242 = vsel %vm3231, %v3177, %v2800
  %v3243 = vsel %vm3231, %v3178, %v2802
  %v3244 = vsel %vm3231, %v3179, %v2804
  %v3245 = vsel %vm3231, %v3180, %v2806
  %v3246 = vsel %vm3231, %v3181, %v2808
  %v3247 = vsel %vm3231, %v3182, %v2810
  %v3248 = vsel %vm3231, %v3183, %v2812
  %v3249 = vsel %vm3231, %v3184, %v2814
  %v3250 = vsel %vm3231, %v3185, %v2816
  %v3251 = vsel %vm3231, %v3186, %v2818
  %v3252 = vsel %vm3231, %v3187, %v2820
  %v3253 = vsel %vm3231, %v3188, %v2822
  %v3254 = vsel %vm3231, %v3189, %v2824
  %v3255 = vsel %vm3231, %v3190, %v2826
  %v3256 = vsel %vm3231, %v3191, %v2828
  %v3257 = vsel %vm3231, %v3192, %v2830
  %v3258 = vsel %vm3231, %v3193, %v2832
  %v3259 = vsel %vm3231, %v3194, %v2834
  %v3260 = vsel %vm3231, %v3195, %v2836
  %v3261 = vsel %vm3231, %v3196, %v2838
  %v3262 = vsel %vm3231, %v3197, %v2840
  %v3263 = vsel %vm3231, %v3198, %v2842
  %v3264 = vsel %vm3231, %v3199, %v2844
  %v3265 = vsel %vm3231, %v3200, %v2846
  %v3266 = vsel %vm3231, %v3201, %v2848
  %v3267 = vsel %vm3231, %v3202, %v2850
  %v3268 = vsel %vm3231, %v3203, %v2852
  %v3269 = vsel %vm3231, %v3204, %v2854
  %v3270 = vsel %vm3231, %v3205, %v2856
  %v3271 = vsel %vm3231, %v3206, %v2858
  %v3272 = vsel %vm3231, %v3207, %v2860
  %v3273 = vsel %vm3231, %v3208, %v2862
  %v3274 = vsel %vm3231, %v3209, %v2864
  %v3275 = vsel %vm3231, %v3210, %v2866
  %v3276 = vsel %vm3231, %v3211, %v2868
  %v3277 = vsel %vm3231, %v3212, %v2870
  %v3278 = vsel %vm3231, %v3213, %v2872
  %v3279 = vsel %vm3231, %v3214, %v2874
  %v3280 = vsel %vm3231, %v3215, %v2876
  %v3281 = vsel %vm3231, %v3216, %v2878
  %v3282 = vsel %vm3231, %v3217, %v2880
  %v3283 = vsel %vm3231, %v3218, %v2882
  %v3284 = vsel %vm3231, %v3219, %v2884
  %v3285 = vsel %vm3231, %v3220, %v2886
  %v3286 = vsel %vm3231, %v3221, %v2888
  %v3287 = vsel %vm3231, %v3222, %v2890
  %v3288 = vsel %vm3231, %v3223, %v2892
  %v3289 = vsel %vm3231, %v3224, %v2894
  %v3290 = vsel %vm3231, %v3225, %v2896
  %v3291 = vsel %vm3231, %v3226, %v2898
  %v3292 = vsel %vm3231, %v3227, %v2900
  %v3293 = vsel %vm3231, %v3228, %v2902
  %v3294 = vsel %vm3231, %v3229, %v2904
  %v3295 = vsel %vm3231, %v3230, %v2906
  %vm3296 = vcmask 97280
  %3297 = vst.msk [vmem:[%s5] sm:$0xff] %vm3296, %v3232
  %3298 = vst.msk [vmem:[%s5 + $0x8] sm:$0xff] %vm3296, %v3233
  %3299 = vst.msk [vmem:[%s5 + $0x10] sm:$0xff] %vm3296, %v3234
  %3300 = vst.msk [vmem:[%s5 + $0x18] sm:$0xff] %vm3296, %v3235
  %3301 = vst.msk [vmem:[%s5 + $0x20] sm:$0xff] %vm3296, %v3236
  %3302 = vst.msk [vmem:[%s5 + $0x28] sm:$0xff] %vm3296, %v3237
  %3303 = vst.msk [vmem:[%s5 + $0x30] sm:$0xff] %vm3296, %v3238
  %3304 = vst.msk [vmem:[%s5 + $0x38] sm:$0xff] %vm3296, %v3239
  %3305 = vst.msk [vmem:[%s5 + $0x40] sm:$0xff] %vm3296, %v3240
  %3306 = vst.msk [vmem:[%s5 + $0x48] sm:$0xff] %vm3296, %v3241
  %3307 = vst.msk [vmem:[%s5 + $0x50] sm:$0xff] %vm3296, %v3242
  %3308 = vst.msk [vmem:[%s5 + $0x58] sm:$0xff] %vm3296, %v3243
  %3309 = vst.msk [vmem:[%s5 + $0x60] sm:$0xff] %vm3296, %v3244
  %3310 = vst.msk [vmem:[%s5 + $0x68] sm:$0xff] %vm3296, %v3245
  %3311 = vst.msk [vmem:[%s5 + $0x70] sm:$0xff] %vm3296, %v3246
  %3312 = vst.msk [vmem:[%s5 + $0x78] sm:$0xff] %vm3296, %v3247
  %3313 = vst.msk [vmem:[%s5 + $0x80] sm:$0xff] %vm3296, %v3248
  %3314 = vst.msk [vmem:[%s5 + $0x88] sm:$0xff] %vm3296, %v3249
  %3315 = vst.msk [vmem:[%s5 + $0x90] sm:$0xff] %vm3296, %v3250
  %3316 = vst.msk [vmem:[%s5 + $0x98] sm:$0xff] %vm3296, %v3251
  %3317 = vst.msk [vmem:[%s5 + $0xa0] sm:$0xff] %vm3296, %v3252
  %3318 = vst.msk [vmem:[%s5 + $0xa8] sm:$0xff] %vm3296, %v3253
  %3319 = vst.msk [vmem:[%s5 + $0xb0] sm:$0xff] %vm3296, %v3254
  %3320 = vst.msk [vmem:[%s5 + $0xb8] sm:$0xff] %vm3296, %v3255
  %3321 = vst.msk [vmem:[%s5 + $0xc0] sm:$0xff] %vm3296, %v3256
  %3322 = vst.msk [vmem:[%s5 + $0xc8] sm:$0xff] %vm3296, %v3257
  %3323 = vst.msk [vmem:[%s5 + $0xd0] sm:$0xff] %vm3296, %v3258
  %3324 = vst.msk [vmem:[%s5 + $0xd8] sm:$0xff] %vm3296, %v3259
  %3325 = vst.msk [vmem:[%s5 + $0xe0] sm:$0xff] %vm3296, %v3260
  %3326 = vst.msk [vmem:[%s5 + $0xe8] sm:$0xff] %vm3296, %v3261
  %3327 = vst.msk [vmem:[%s5 + $0xf0] sm:$0xff] %vm3296, %v3262
  %3328 = vst.msk [vmem:[%s5 + $0xf8] sm:$0xff] %vm3296, %v3263
  %3329 = vst.msk [vmem:[%s5 + $0x100] sm:$0xff] %vm3296, %v3264
  %3330 = vst.msk [vmem:[%s5 + $0x108] sm:$0xff] %vm3296, %v3265
  %3331 = vst.msk [vmem:[%s5 + $0x110] sm:$0xff] %vm3296, %v3266
  %3332 = vst.msk [vmem:[%s5 + $0x118] sm:$0xff] %vm3296, %v3267
  %3333 = vst.msk [vmem:[%s5 + $0x120] sm:$0xff] %vm3296, %v3268
  %3334 = vst.msk [vmem:[%s5 + $0x128] sm:$0xff] %vm3296, %v3269
  %3335 = vst.msk [vmem:[%s5 + $0x130] sm:$0xff] %vm3296, %v3270
  %3336 = vst.msk [vmem:[%s5 + $0x138] sm:$0xff] %vm3296, %v3271
  %3337 = vst.msk [vmem:[%s5 + $0x140] sm:$0xff] %vm3296, %v3272
  %3338 = vst.msk [vmem:[%s5 + $0x148] sm:$0xff] %vm3296, %v3273
  %3339 = vst.msk [vmem:[%s5 + $0x150] sm:$0xff] %vm3296, %v3274
  %3340 = vst.msk [vmem:[%s5 + $0x158] sm:$0xff] %vm3296, %v3275
  %3341 = vst.msk [vmem:[%s5 + $0x160] sm:$0xff] %vm3296, %v3276
  %3342 = vst.msk [vmem:[%s5 + $0x168] sm:$0xff] %vm3296, %v3277
  %3343 = vst.msk [vmem:[%s5 + $0x170] sm:$0xff] %vm3296, %v3278
  %3344 = vst.msk [vmem:[%s5 + $0x178] sm:$0xff] %vm3296, %v3279
  %3345 = vst.msk [vmem:[%s5 + $0x180] sm:$0xff] %vm3296, %v3280
  %3346 = vst.msk [vmem:[%s5 + $0x188] sm:$0xff] %vm3296, %v3281
  %3347 = vst.msk [vmem:[%s5 + $0x190] sm:$0xff] %vm3296, %v3282
  %3348 = vst.msk [vmem:[%s5 + $0x198] sm:$0xff] %vm3296, %v3283
  %3349 = vst.msk [vmem:[%s5 + $0x1a0] sm:$0xff] %vm3296, %v3284
  %3350 = vst.msk [vmem:[%s5 + $0x1a8] sm:$0xff] %vm3296, %v3285
  %3351 = vst.msk [vmem:[%s5 + $0x1b0] sm:$0xff] %vm3296, %v3286
  %3352 = vst.msk [vmem:[%s5 + $0x1b8] sm:$0xff] %vm3296, %v3287
  %3353 = vst.msk [vmem:[%s5 + $0x1c0] sm:$0xff] %vm3296, %v3288
  %3354 = vst.msk [vmem:[%s5 + $0x1c8] sm:$0xff] %vm3296, %v3289
  %3355 = vst.msk [vmem:[%s5 + $0x1d0] sm:$0xff] %vm3296, %v3290
  %3356 = vst.msk [vmem:[%s5 + $0x1d8] sm:$0xff] %vm3296, %v3291
  %3357 = vst.msk [vmem:[%s5 + $0x1e0] sm:$0xff] %vm3296, %v3292
  %3358 = vst.msk [vmem:[%s5 + $0x1e8] sm:$0xff] %vm3296, %v3293
  %3359 = vst.msk [vmem:[%s5 + $0x1f0] sm:$0xff] %vm3296, %v3294
  %3360 = vst.msk [vmem:[%s5 + $0x1f8] sm:$0xff] %vm3296, %v3295
  %3362 = vset.pattern.permute.xlu0 12
  %3363 = vperm.xlu0 %3362, %v915
  %v3364 = vpop.permute.xlu0 %3363
  %3367 = vset.pattern.permute.xlu0 12
  %3368 = vperm.xlu0 %3367, %v917
  %v3369 = vpop.permute.xlu0 %3368
  %3372 = vset.pattern.permute.xlu0 12
  %3373 = vperm.xlu0 %3372, %v919
  %v3374 = vpop.permute.xlu0 %3373
  %3377 = vset.pattern.permute.xlu0 12
  %3378 = vperm.xlu0 %3377, %v921
  %v3379 = vpop.permute.xlu0 %3378
  %3382 = vset.pattern.permute.xlu0 12
  %3383 = vperm.xlu0 %3382, %v923
  %v3384 = vpop.permute.xlu0 %3383
  %3387 = vset.pattern.permute.xlu0 12
  %3388 = vperm.xlu0 %3387, %v925
  %v3389 = vpop.permute.xlu0 %3388
  %3392 = vset.pattern.permute.xlu0 12
  %3393 = vperm.xlu0 %3392, %v927
  %v3394 = vpop.permute.xlu0 %3393
  %3397 = vset.pattern.permute.xlu0 12
  %3398 = vperm.xlu0 %3397, %v929
  %v3399 = vpop.permute.xlu0 %3398
  %3402 = vset.pattern.permute.xlu0 12
  %3403 = vperm.xlu0 %3402, %v931
  %v3404 = vpop.permute.xlu0 %3403
  %3407 = vset.pattern.permute.xlu0 12
  %3408 = vperm.xlu0 %3407, %v933
  %v3409 = vpop.permute.xlu0 %3408
  %3412 = vset.pattern.permute.xlu0 12
  %3413 = vperm.xlu0 %3412, %v935
  %v3414 = vpop.permute.xlu0 %3413
  %3417 = vset.pattern.permute.xlu0 12
  %3418 = vperm.xlu0 %3417, %v937
  %v3419 = vpop.permute.xlu0 %3418
  %3422 = vset.pattern.permute.xlu0 12
  %3423 = vperm.xlu0 %3422, %v939
  %v3424 = vpop.permute.xlu0 %3423
  %3427 = vset.pattern.permute.xlu0 12
  %3428 = vperm.xlu0 %3427, %v941
  %v3429 = vpop.permute.xlu0 %3428
  %3432 = vset.pattern.permute.xlu0 12
  %3433 = vperm.xlu0 %3432, %v943
  %v3434 = vpop.permute.xlu0 %3433
  %3437 = vset.pattern.permute.xlu0 12
  %3438 = vperm.xlu0 %3437, %v945
  %v3439 = vpop.permute.xlu0 %3438
  %3442 = vset.pattern.permute.xlu0 12
  %3443 = vperm.xlu0 %3442, %v947
  %v3444 = vpop.permute.xlu0 %3443
  %3447 = vset.pattern.permute.xlu0 12
  %3448 = vperm.xlu0 %3447, %v949
  %v3449 = vpop.permute.xlu0 %3448
  %3452 = vset.pattern.permute.xlu0 12
  %3453 = vperm.xlu0 %3452, %v951
  %v3454 = vpop.permute.xlu0 %3453
  %3457 = vset.pattern.permute.xlu0 12
  %3458 = vperm.xlu0 %3457, %v953
  %v3459 = vpop.permute.xlu0 %3458
  %3462 = vset.pattern.permute.xlu0 12
  %3463 = vperm.xlu0 %3462, %v955
  %v3464 = vpop.permute.xlu0 %3463
  %3467 = vset.pattern.permute.xlu0 12
  %3468 = vperm.xlu0 %3467, %v957
  %v3469 = vpop.permute.xlu0 %3468
  %3472 = vset.pattern.permute.xlu0 12
  %3473 = vperm.xlu0 %3472, %v959
  %v3474 = vpop.permute.xlu0 %3473
  %3477 = vset.pattern.permute.xlu0 12
  %3478 = vperm.xlu0 %3477, %v961
  %v3479 = vpop.permute.xlu0 %3478
  %3482 = vset.pattern.permute.xlu0 12
  %3483 = vperm.xlu0 %3482, %v963
  %v3484 = vpop.permute.xlu0 %3483
  %3487 = vset.pattern.permute.xlu0 12
  %3488 = vperm.xlu0 %3487, %v965
  %v3489 = vpop.permute.xlu0 %3488
  %3492 = vset.pattern.permute.xlu0 12
  %3493 = vperm.xlu0 %3492, %v967
  %v3494 = vpop.permute.xlu0 %3493
  %3497 = vset.pattern.permute.xlu0 12
  %3498 = vperm.xlu0 %3497, %v969
  %v3499 = vpop.permute.xlu0 %3498
  %3502 = vset.pattern.permute.xlu0 12
  %3503 = vperm.xlu0 %3502, %v971
  %v3504 = vpop.permute.xlu0 %3503
  %3507 = vset.pattern.permute.xlu0 12
  %3508 = vperm.xlu0 %3507, %v973
  %v3509 = vpop.permute.xlu0 %3508
  %3512 = vset.pattern.permute.xlu0 12
  %3513 = vperm.xlu0 %3512, %v975
  %v3514 = vpop.permute.xlu0 %3513
  %3517 = vset.pattern.permute.xlu0 12
  %3518 = vperm.xlu0 %3517, %v977
  %v3519 = vpop.permute.xlu0 %3518
  %3522 = vset.pattern.permute.xlu0 12
  %3523 = vperm.xlu0 %3522, %v979
  %v3524 = vpop.permute.xlu0 %3523
  %3527 = vset.pattern.permute.xlu0 12
  %3528 = vperm.xlu0 %3527, %v981
  %v3529 = vpop.permute.xlu0 %3528
  %3532 = vset.pattern.permute.xlu0 12
  %3533 = vperm.xlu0 %3532, %v983
  %v3534 = vpop.permute.xlu0 %3533
  %3537 = vset.pattern.permute.xlu0 12
  %3538 = vperm.xlu0 %3537, %v985
  %v3539 = vpop.permute.xlu0 %3538
  %3542 = vset.pattern.permute.xlu0 12
  %3543 = vperm.xlu0 %3542, %v987
  %v3544 = vpop.permute.xlu0 %3543
  %3547 = vset.pattern.permute.xlu0 12
  %3548 = vperm.xlu0 %3547, %v989
  %v3549 = vpop.permute.xlu0 %3548
  %3552 = vset.pattern.permute.xlu0 12
  %3553 = vperm.xlu0 %3552, %v991
  %v3554 = vpop.permute.xlu0 %3553
  %3557 = vset.pattern.permute.xlu0 12
  %3558 = vperm.xlu0 %3557, %v993
  %v3559 = vpop.permute.xlu0 %3558
  %3562 = vset.pattern.permute.xlu0 12
  %3563 = vperm.xlu0 %3562, %v995
  %v3564 = vpop.permute.xlu0 %3563
  %3567 = vset.pattern.permute.xlu0 12
  %3568 = vperm.xlu0 %3567, %v997
  %v3569 = vpop.permute.xlu0 %3568
  %3572 = vset.pattern.permute.xlu0 12
  %3573 = vperm.xlu0 %3572, %v999
  %v3574 = vpop.permute.xlu0 %3573
  %3577 = vset.pattern.permute.xlu0 12
  %3578 = vperm.xlu0 %3577, %v1001
  %v3579 = vpop.permute.xlu0 %3578
  %3582 = vset.pattern.permute.xlu0 12
  %3583 = vperm.xlu0 %3582, %v1003
  %v3584 = vpop.permute.xlu0 %3583
  %3587 = vset.pattern.permute.xlu0 12
  %3588 = vperm.xlu0 %3587, %v1005
  %v3589 = vpop.permute.xlu0 %3588
  %3592 = vset.pattern.permute.xlu0 12
  %3593 = vperm.xlu0 %3592, %v1007
  %v3594 = vpop.permute.xlu0 %3593
  %3597 = vset.pattern.permute.xlu0 12
  %3598 = vperm.xlu0 %3597, %v1009
  %v3599 = vpop.permute.xlu0 %3598
  %3602 = vset.pattern.permute.xlu0 12
  %3603 = vperm.xlu0 %3602, %v1011
  %v3604 = vpop.permute.xlu0 %3603
  %3607 = vset.pattern.permute.xlu0 12
  %3608 = vperm.xlu0 %3607, %v1013
  %v3609 = vpop.permute.xlu0 %3608
  %3612 = vset.pattern.permute.xlu0 12
  %3613 = vperm.xlu0 %3612, %v1015
  %v3614 = vpop.permute.xlu0 %3613
  %3617 = vset.pattern.permute.xlu0 12
  %3618 = vperm.xlu0 %3617, %v1017
  %v3619 = vpop.permute.xlu0 %3618
  %3622 = vset.pattern.permute.xlu0 12
  %3623 = vperm.xlu0 %3622, %v1019
  %v3624 = vpop.permute.xlu0 %3623
  %3627 = vset.pattern.permute.xlu0 12
  %3628 = vperm.xlu0 %3627, %v1021
  %v3629 = vpop.permute.xlu0 %3628
  %3632 = vset.pattern.permute.xlu0 12
  %3633 = vperm.xlu0 %3632, %v1023
  %v3634 = vpop.permute.xlu0 %3633
  %3637 = vset.pattern.permute.xlu0 12
  %3638 = vperm.xlu0 %3637, %v1025
  %v3639 = vpop.permute.xlu0 %3638
  %3642 = vset.pattern.permute.xlu0 12
  %3643 = vperm.xlu0 %3642, %v1027
  %v3644 = vpop.permute.xlu0 %3643
  %3647 = vset.pattern.permute.xlu0 12
  %3648 = vperm.xlu0 %3647, %v1029
  %v3649 = vpop.permute.xlu0 %3648
  %3652 = vset.pattern.permute.xlu0 12
  %3653 = vperm.xlu0 %3652, %v1031
  %v3654 = vpop.permute.xlu0 %3653
  %3657 = vset.pattern.permute.xlu0 12
  %3658 = vperm.xlu0 %3657, %v1033
  %v3659 = vpop.permute.xlu0 %3658
  %3662 = vset.pattern.permute.xlu0 12
  %3663 = vperm.xlu0 %3662, %v1035
  %v3664 = vpop.permute.xlu0 %3663
  %3667 = vset.pattern.permute.xlu0 12
  %3668 = vperm.xlu0 %3667, %v1037
  %v3669 = vpop.permute.xlu0 %3668
  %3672 = vset.pattern.permute.xlu0 12
  %3673 = vperm.xlu0 %3672, %v1039
  %v3674 = vpop.permute.xlu0 %3673
  %3677 = vset.pattern.permute.xlu0 12
  %3678 = vperm.xlu0 %3677, %v1041
  %v3679 = vpop.permute.xlu0 %3678
  %v3681 = vmul.f32 %v915, %v3364
  %v3682 = vmul.f32 %v917, %v3369
  %v3683 = vmul.f32 %v919, %v3374
  %v3684 = vmul.f32 %v921, %v3379
  %v3685 = vmul.f32 %v923, %v3384
  %v3686 = vmul.f32 %v925, %v3389
  %v3687 = vmul.f32 %v927, %v3394
  %v3688 = vmul.f32 %v929, %v3399
  %v3689 = vmul.f32 %v931, %v3404
  %v3690 = vmul.f32 %v933, %v3409
  %v3691 = vmul.f32 %v935, %v3414
  %v3692 = vmul.f32 %v937, %v3419
  %v3693 = vmul.f32 %v939, %v3424
  %v3694 = vmul.f32 %v941, %v3429
  %v3695 = vmul.f32 %v943, %v3434
  %v3696 = vmul.f32 %v945, %v3439
  %v3697 = vmul.f32 %v947, %v3444
  %v3698 = vmul.f32 %v949, %v3449
  %v3699 = vmul.f32 %v951, %v3454
  %v3700 = vmul.f32 %v953, %v3459
  %v3701 = vmul.f32 %v955, %v3464
  %v3702 = vmul.f32 %v957, %v3469
  %v3703 = vmul.f32 %v959, %v3474
  %v3704 = vmul.f32 %v961, %v3479
  %v3705 = vmul.f32 %v963, %v3484
  %v3706 = vmul.f32 %v965, %v3489
  %v3707 = vmul.f32 %v967, %v3494
  %v3708 = vmul.f32 %v969, %v3499
  %v3709 = vmul.f32 %v971, %v3504
  %v3710 = vmul.f32 %v973, %v3509
  %v3711 = vmul.f32 %v975, %v3514
  %v3712 = vmul.f32 %v977, %v3519
  %v3713 = vmul.f32 %v979, %v3524
  %v3714 = vmul.f32 %v981, %v3529
  %v3715 = vmul.f32 %v983, %v3534
  %v3716 = vmul.f32 %v985, %v3539
  %v3717 = vmul.f32 %v987, %v3544
  %v3718 = vmul.f32 %v989, %v3549
  %v3719 = vmul.f32 %v991, %v3554
  %v3720 = vmul.f32 %v993, %v3559
  %v3721 = vmul.f32 %v995, %v3564
  %v3722 = vmul.f32 %v997, %v3569
  %v3723 = vmul.f32 %v999, %v3574
  %v3724 = vmul.f32 %v1001, %v3579
  %v3725 = vmul.f32 %v1003, %v3584
  %v3726 = vmul.f32 %v1005, %v3589
  %v3727 = vmul.f32 %v1007, %v3594
  %v3728 = vmul.f32 %v1009, %v3599
  %v3729 = vmul.f32 %v1011, %v3604
  %v3730 = vmul.f32 %v1013, %v3609
  %v3731 = vmul.f32 %v1015, %v3614
  %v3732 = vmul.f32 %v1017, %v3619
  %v3733 = vmul.f32 %v1019, %v3624
  %v3734 = vmul.f32 %v1021, %v3629
  %v3735 = vmul.f32 %v1023, %v3634
  %v3736 = vmul.f32 %v1025, %v3639
  %v3737 = vmul.f32 %v1027, %v3644
  %v3738 = vmul.f32 %v1029, %v3649
  %v3739 = vmul.f32 %v1031, %v3654
  %v3740 = vmul.f32 %v1033, %v3659
  %v3741 = vmul.f32 %v1035, %v3664
  %v3742 = vmul.f32 %v1037, %v3669
  %v3743 = vmul.f32 %v1039, %v3674
  %v3744 = vmul.f32 %v1041, %v3679
  %3745 = vset.pattern.permute.xlu0 13
  %3746 = vperm.xlu0 %3745, %v915
  %v3747 = vpop.permute.xlu0 %3746
  %3749 = vset.pattern.permute.xlu0 13
  %3750 = vperm.xlu0 %3749, %v917
  %v3751 = vpop.permute.xlu0 %3750
  %3753 = vset.pattern.permute.xlu0 13
  %3754 = vperm.xlu0 %3753, %v919
  %v3755 = vpop.permute.xlu0 %3754
  %3757 = vset.pattern.permute.xlu0 13
  %3758 = vperm.xlu0 %3757, %v921
  %v3759 = vpop.permute.xlu0 %3758
  %3761 = vset.pattern.permute.xlu0 13
  %3762 = vperm.xlu0 %3761, %v923
  %v3763 = vpop.permute.xlu0 %3762
  %3765 = vset.pattern.permute.xlu0 13
  %3766 = vperm.xlu0 %3765, %v925
  %v3767 = vpop.permute.xlu0 %3766
  %3769 = vset.pattern.permute.xlu0 13
  %3770 = vperm.xlu0 %3769, %v927
  %v3771 = vpop.permute.xlu0 %3770
  %3773 = vset.pattern.permute.xlu0 13
  %3774 = vperm.xlu0 %3773, %v929
  %v3775 = vpop.permute.xlu0 %3774
  %3777 = vset.pattern.permute.xlu0 13
  %3778 = vperm.xlu0 %3777, %v931
  %v3779 = vpop.permute.xlu0 %3778
  %3781 = vset.pattern.permute.xlu0 13
  %3782 = vperm.xlu0 %3781, %v933
  %v3783 = vpop.permute.xlu0 %3782
  %3785 = vset.pattern.permute.xlu0 13
  %3786 = vperm.xlu0 %3785, %v935
  %v3787 = vpop.permute.xlu0 %3786
  %3789 = vset.pattern.permute.xlu0 13
  %3790 = vperm.xlu0 %3789, %v937
  %v3791 = vpop.permute.xlu0 %3790
  %3793 = vset.pattern.permute.xlu0 13
  %3794 = vperm.xlu0 %3793, %v939
  %v3795 = vpop.permute.xlu0 %3794
  %3797 = vset.pattern.permute.xlu0 13
  %3798 = vperm.xlu0 %3797, %v941
  %v3799 = vpop.permute.xlu0 %3798
  %3801 = vset.pattern.permute.xlu0 13
  %3802 = vperm.xlu0 %3801, %v943
  %v3803 = vpop.permute.xlu0 %3802
  %3805 = vset.pattern.permute.xlu0 13
  %3806 = vperm.xlu0 %3805, %v945
  %v3807 = vpop.permute.xlu0 %3806
  %3809 = vset.pattern.permute.xlu0 13
  %3810 = vperm.xlu0 %3809, %v947
  %v3811 = vpop.permute.xlu0 %3810
  %3813 = vset.pattern.permute.xlu0 13
  %3814 = vperm.xlu0 %3813, %v949
  %v3815 = vpop.permute.xlu0 %3814
  %3817 = vset.pattern.permute.xlu0 13
  %3818 = vperm.xlu0 %3817, %v951
  %v3819 = vpop.permute.xlu0 %3818
  %3821 = vset.pattern.permute.xlu0 13
  %3822 = vperm.xlu0 %3821, %v953
  %v3823 = vpop.permute.xlu0 %3822
  %3825 = vset.pattern.permute.xlu0 13
  %3826 = vperm.xlu0 %3825, %v955
  %v3827 = vpop.permute.xlu0 %3826
  %3829 = vset.pattern.permute.xlu0 13
  %3830 = vperm.xlu0 %3829, %v957
  %v3831 = vpop.permute.xlu0 %3830
  %3833 = vset.pattern.permute.xlu0 13
  %3834 = vperm.xlu0 %3833, %v959
  %v3835 = vpop.permute.xlu0 %3834
  %3837 = vset.pattern.permute.xlu0 13
  %3838 = vperm.xlu0 %3837, %v961
  %v3839 = vpop.permute.xlu0 %3838
  %3841 = vset.pattern.permute.xlu0 13
  %3842 = vperm.xlu0 %3841, %v963
  %v3843 = vpop.permute.xlu0 %3842
  %3845 = vset.pattern.permute.xlu0 13
  %3846 = vperm.xlu0 %3845, %v965
  %v3847 = vpop.permute.xlu0 %3846
  %3849 = vset.pattern.permute.xlu0 13
  %3850 = vperm.xlu0 %3849, %v967
  %v3851 = vpop.permute.xlu0 %3850
  %3853 = vset.pattern.permute.xlu0 13
  %3854 = vperm.xlu0 %3853, %v969
  %v3855 = vpop.permute.xlu0 %3854
  %3857 = vset.pattern.permute.xlu0 13
  %3858 = vperm.xlu0 %3857, %v971
  %v3859 = vpop.permute.xlu0 %3858
  %3861 = vset.pattern.permute.xlu0 13
  %3862 = vperm.xlu0 %3861, %v973
  %v3863 = vpop.permute.xlu0 %3862
  %3865 = vset.pattern.permute.xlu0 13
  %3866 = vperm.xlu0 %3865, %v975
  %v3867 = vpop.permute.xlu0 %3866
  %3869 = vset.pattern.permute.xlu0 13
  %3870 = vperm.xlu0 %3869, %v977
  %v3871 = vpop.permute.xlu0 %3870
  %3873 = vset.pattern.permute.xlu0 13
  %3874 = vperm.xlu0 %3873, %v979
  %v3875 = vpop.permute.xlu0 %3874
  %3877 = vset.pattern.permute.xlu0 13
  %3878 = vperm.xlu0 %3877, %v981
  %v3879 = vpop.permute.xlu0 %3878
  %3881 = vset.pattern.permute.xlu0 13
  %3882 = vperm.xlu0 %3881, %v983
  %v3883 = vpop.permute.xlu0 %3882
  %3885 = vset.pattern.permute.xlu0 13
  %3886 = vperm.xlu0 %3885, %v985
  %v3887 = vpop.permute.xlu0 %3886
  %3889 = vset.pattern.permute.xlu0 13
  %3890 = vperm.xlu0 %3889, %v987
  %v3891 = vpop.permute.xlu0 %3890
  %3893 = vset.pattern.permute.xlu0 13
  %3894 = vperm.xlu0 %3893, %v989
  %v3895 = vpop.permute.xlu0 %3894
  %3897 = vset.pattern.permute.xlu0 13
  %3898 = vperm.xlu0 %3897, %v991
  %v3899 = vpop.permute.xlu0 %3898
  %3901 = vset.pattern.permute.xlu0 13
  %3902 = vperm.xlu0 %3901, %v993
  %v3903 = vpop.permute.xlu0 %3902
  %3905 = vset.pattern.permute.xlu0 13
  %3906 = vperm.xlu0 %3905, %v995
  %v3907 = vpop.permute.xlu0 %3906
  %3909 = vset.pattern.permute.xlu0 13
  %3910 = vperm.xlu0 %3909, %v997
  %v3911 = vpop.permute.xlu0 %3910
  %3913 = vset.pattern.permute.xlu0 13
  %3914 = vperm.xlu0 %3913, %v999
  %v3915 = vpop.permute.xlu0 %3914
  %3917 = vset.pattern.permute.xlu0 13
  %3918 = vperm.xlu0 %3917, %v1001
  %v3919 = vpop.permute.xlu0 %3918
  %3921 = vset.pattern.permute.xlu0 13
  %3922 = vperm.xlu0 %3921, %v1003
  %v3923 = vpop.permute.xlu0 %3922
  %3925 = vset.pattern.permute.xlu0 13
  %3926 = vperm.xlu0 %3925, %v1005
  %v3927 = vpop.permute.xlu0 %3926
  %3929 = vset.pattern.permute.xlu0 13
  %3930 = vperm.xlu0 %3929, %v1007
  %v3931 = vpop.permute.xlu0 %3930
  %3933 = vset.pattern.permute.xlu0 13
  %3934 = vperm.xlu0 %3933, %v1009
  %v3935 = vpop.permute.xlu0 %3934
  %3937 = vset.pattern.permute.xlu0 13
  %3938 = vperm.xlu0 %3937, %v1011
  %v3939 = vpop.permute.xlu0 %3938
  %3941 = vset.pattern.permute.xlu0 13
  %3942 = vperm.xlu0 %3941, %v1013
  %v3943 = vpop.permute.xlu0 %3942
  %3945 = vset.pattern.permute.xlu0 13
  %3946 = vperm.xlu0 %3945, %v1015
  %v3947 = vpop.permute.xlu0 %3946
  %3949 = vset.pattern.permute.xlu0 13
  %3950 = vperm.xlu0 %3949, %v1017
  %v3951 = vpop.permute.xlu0 %3950
  %3953 = vset.pattern.permute.xlu0 13
  %3954 = vperm.xlu0 %3953, %v1019
  %v3955 = vpop.permute.xlu0 %3954
  %3957 = vset.pattern.permute.xlu0 13
  %3958 = vperm.xlu0 %3957, %v1021
  %v3959 = vpop.permute.xlu0 %3958
  %3961 = vset.pattern.permute.xlu0 13
  %3962 = vperm.xlu0 %3961, %v1023
  %v3963 = vpop.permute.xlu0 %3962
  %3965 = vset.pattern.permute.xlu0 13
  %3966 = vperm.xlu0 %3965, %v1025
  %v3967 = vpop.permute.xlu0 %3966
  %3969 = vset.pattern.permute.xlu0 13
  %3970 = vperm.xlu0 %3969, %v1027
  %v3971 = vpop.permute.xlu0 %3970
  %3973 = vset.pattern.permute.xlu0 13
  %3974 = vperm.xlu0 %3973, %v1029
  %v3975 = vpop.permute.xlu0 %3974
  %3977 = vset.pattern.permute.xlu0 13
  %3978 = vperm.xlu0 %3977, %v1031
  %v3979 = vpop.permute.xlu0 %3978
  %3981 = vset.pattern.permute.xlu0 13
  %3982 = vperm.xlu0 %3981, %v1033
  %v3983 = vpop.permute.xlu0 %3982
  %3985 = vset.pattern.permute.xlu0 13
  %3986 = vperm.xlu0 %3985, %v1035
  %v3987 = vpop.permute.xlu0 %3986
  %3989 = vset.pattern.permute.xlu0 13
  %3990 = vperm.xlu0 %3989, %v1037
  %v3991 = vpop.permute.xlu0 %3990
  %3993 = vset.pattern.permute.xlu0 13
  %3994 = vperm.xlu0 %3993, %v1039
  %v3995 = vpop.permute.xlu0 %3994
  %3997 = vset.pattern.permute.xlu0 13
  %3998 = vperm.xlu0 %3997, %v1041
  %v3999 = vpop.permute.xlu0 %3998
  %v4001 = vmul.f32 %v915, %v3747
  %v4002 = vmul.f32 %v917, %v3751
  %v4003 = vmul.f32 %v919, %v3755
  %v4004 = vmul.f32 %v921, %v3759
  %v4005 = vmul.f32 %v923, %v3763
  %v4006 = vmul.f32 %v925, %v3767
  %v4007 = vmul.f32 %v927, %v3771
  %v4008 = vmul.f32 %v929, %v3775
  %v4009 = vmul.f32 %v931, %v3779
  %v4010 = vmul.f32 %v933, %v3783
  %v4011 = vmul.f32 %v935, %v3787
  %v4012 = vmul.f32 %v937, %v3791
  %v4013 = vmul.f32 %v939, %v3795
  %v4014 = vmul.f32 %v941, %v3799
  %v4015 = vmul.f32 %v943, %v3803
  %v4016 = vmul.f32 %v945, %v3807
  %v4017 = vmul.f32 %v947, %v3811
  %v4018 = vmul.f32 %v949, %v3815
  %v4019 = vmul.f32 %v951, %v3819
  %v4020 = vmul.f32 %v953, %v3823
  %v4021 = vmul.f32 %v955, %v3827
  %v4022 = vmul.f32 %v957, %v3831
  %v4023 = vmul.f32 %v959, %v3835
  %v4024 = vmul.f32 %v961, %v3839
  %v4025 = vmul.f32 %v963, %v3843
  %v4026 = vmul.f32 %v965, %v3847
  %v4027 = vmul.f32 %v967, %v3851
  %v4028 = vmul.f32 %v969, %v3855
  %v4029 = vmul.f32 %v971, %v3859
  %v4030 = vmul.f32 %v973, %v3863
  %v4031 = vmul.f32 %v975, %v3867
  %v4032 = vmul.f32 %v977, %v3871
  %v4033 = vmul.f32 %v979, %v3875
  %v4034 = vmul.f32 %v981, %v3879
  %v4035 = vmul.f32 %v983, %v3883
  %v4036 = vmul.f32 %v985, %v3887
  %v4037 = vmul.f32 %v987, %v3891
  %v4038 = vmul.f32 %v989, %v3895
  %v4039 = vmul.f32 %v991, %v3899
  %v4040 = vmul.f32 %v993, %v3903
  %v4041 = vmul.f32 %v995, %v3907
  %v4042 = vmul.f32 %v997, %v3911
  %v4043 = vmul.f32 %v999, %v3915
  %v4044 = vmul.f32 %v1001, %v3919
  %v4045 = vmul.f32 %v1003, %v3923
  %v4046 = vmul.f32 %v1005, %v3927
  %v4047 = vmul.f32 %v1007, %v3931
  %v4048 = vmul.f32 %v1009, %v3935
  %v4049 = vmul.f32 %v1011, %v3939
  %v4050 = vmul.f32 %v1013, %v3943
  %v4051 = vmul.f32 %v1015, %v3947
  %v4052 = vmul.f32 %v1017, %v3951
  %v4053 = vmul.f32 %v1019, %v3955
  %v4054 = vmul.f32 %v1021, %v3959
  %v4055 = vmul.f32 %v1023, %v3963
  %v4056 = vmul.f32 %v1025, %v3967
  %v4057 = vmul.f32 %v1027, %v3971
  %v4058 = vmul.f32 %v1029, %v3975
  %v4059 = vmul.f32 %v1031, %v3979
  %v4060 = vmul.f32 %v1033, %v3983
  %v4061 = vmul.f32 %v1035, %v3987
  %v4062 = vmul.f32 %v1037, %v3991
  %v4063 = vmul.f32 %v1039, %v3995
  %v4064 = vmul.f32 %v1041, %v3999
  %4065 = vset.pattern.permute.xlu0 14
  %4066 = vperm.xlu0 %4065, %v915
  %v4067 = vpop.permute.xlu0 %4066
  %4069 = vset.pattern.permute.xlu0 14
  %4070 = vperm.xlu0 %4069, %v917
  %v4071 = vpop.permute.xlu0 %4070
  %4073 = vset.pattern.permute.xlu0 14
  %4074 = vperm.xlu0 %4073, %v919
  %v4075 = vpop.permute.xlu0 %4074
  %4077 = vset.pattern.permute.xlu0 14
  %4078 = vperm.xlu0 %4077, %v921
  %v4079 = vpop.permute.xlu0 %4078
  %4081 = vset.pattern.permute.xlu0 14
  %4082 = vperm.xlu0 %4081, %v923
  %v4083 = vpop.permute.xlu0 %4082
  %4085 = vset.pattern.permute.xlu0 14
  %4086 = vperm.xlu0 %4085, %v925
  %v4087 = vpop.permute.xlu0 %4086
  %4089 = vset.pattern.permute.xlu0 14
  %4090 = vperm.xlu0 %4089, %v927
  %v4091 = vpop.permute.xlu0 %4090
  %4093 = vset.pattern.permute.xlu0 14
  %4094 = vperm.xlu0 %4093, %v929
  %v4095 = vpop.permute.xlu0 %4094
  %4097 = vset.pattern.permute.xlu0 14
  %4098 = vperm.xlu0 %4097, %v931
  %v4099 = vpop.permute.xlu0 %4098
  %4101 = vset.pattern.permute.xlu0 14
  %4102 = vperm.xlu0 %4101, %v933
  %v4103 = vpop.permute.xlu0 %4102
  %4105 = vset.pattern.permute.xlu0 14
  %4106 = vperm.xlu0 %4105, %v935
  %v4107 = vpop.permute.xlu0 %4106
  %4109 = vset.pattern.permute.xlu0 14
  %4110 = vperm.xlu0 %4109, %v937
  %v4111 = vpop.permute.xlu0 %4110
  %4113 = vset.pattern.permute.xlu0 14
  %4114 = vperm.xlu0 %4113, %v939
  %v4115 = vpop.permute.xlu0 %4114
  %4117 = vset.pattern.permute.xlu0 14
  %4118 = vperm.xlu0 %4117, %v941
  %v4119 = vpop.permute.xlu0 %4118
  %4121 = vset.pattern.permute.xlu0 14
  %4122 = vperm.xlu0 %4121, %v943
  %v4123 = vpop.permute.xlu0 %4122
  %4125 = vset.pattern.permute.xlu0 14
  %4126 = vperm.xlu0 %4125, %v945
  %v4127 = vpop.permute.xlu0 %4126
  %4129 = vset.pattern.permute.xlu0 14
  %4130 = vperm.xlu0 %4129, %v947
  %v4131 = vpop.permute.xlu0 %4130
  %4133 = vset.pattern.permute.xlu0 14
  %4134 = vperm.xlu0 %4133, %v949
  %v4135 = vpop.permute.xlu0 %4134
  %4137 = vset.pattern.permute.xlu0 14
  %4138 = vperm.xlu0 %4137, %v951
  %v4139 = vpop.permute.xlu0 %4138
  %4141 = vset.pattern.permute.xlu0 14
  %4142 = vperm.xlu0 %4141, %v953
  %v4143 = vpop.permute.xlu0 %4142
  %4145 = vset.pattern.permute.xlu0 14
  %4146 = vperm.xlu0 %4145, %v955
  %v4147 = vpop.permute.xlu0 %4146
  %4149 = vset.pattern.permute.xlu0 14
  %4150 = vperm.xlu0 %4149, %v957
  %v4151 = vpop.permute.xlu0 %4150
  %4153 = vset.pattern.permute.xlu0 14
  %4154 = vperm.xlu0 %4153, %v959
  %v4155 = vpop.permute.xlu0 %4154
  %4157 = vset.pattern.permute.xlu0 14
  %4158 = vperm.xlu0 %4157, %v961
  %v4159 = vpop.permute.xlu0 %4158
  %4161 = vset.pattern.permute.xlu0 14
  %4162 = vperm.xlu0 %4161, %v963
  %v4163 = vpop.permute.xlu0 %4162
  %4165 = vset.pattern.permute.xlu0 14
  %4166 = vperm.xlu0 %4165, %v965
  %v4167 = vpop.permute.xlu0 %4166
  %4169 = vset.pattern.permute.xlu0 14
  %4170 = vperm.xlu0 %4169, %v967
  %v4171 = vpop.permute.xlu0 %4170
  %4173 = vset.pattern.permute.xlu0 14
  %4174 = vperm.xlu0 %4173, %v969
  %v4175 = vpop.permute.xlu0 %4174
  %4177 = vset.pattern.permute.xlu0 14
  %4178 = vperm.xlu0 %4177, %v971
  %v4179 = vpop.permute.xlu0 %4178
  %4181 = vset.pattern.permute.xlu0 14
  %4182 = vperm.xlu0 %4181, %v973
  %v4183 = vpop.permute.xlu0 %4182
  %4185 = vset.pattern.permute.xlu0 14
  %4186 = vperm.xlu0 %4185, %v975
  %v4187 = vpop.permute.xlu0 %4186
  %4189 = vset.pattern.permute.xlu0 14
  %4190 = vperm.xlu0 %4189, %v977
  %v4191 = vpop.permute.xlu0 %4190
  %4193 = vset.pattern.permute.xlu0 14
  %4194 = vperm.xlu0 %4193, %v979
  %v4195 = vpop.permute.xlu0 %4194
  %4197 = vset.pattern.permute.xlu0 14
  %4198 = vperm.xlu0 %4197, %v981
  %v4199 = vpop.permute.xlu0 %4198
  %4201 = vset.pattern.permute.xlu0 14
  %4202 = vperm.xlu0 %4201, %v983
  %v4203 = vpop.permute.xlu0 %4202
  %4205 = vset.pattern.permute.xlu0 14
  %4206 = vperm.xlu0 %4205, %v985
  %v4207 = vpop.permute.xlu0 %4206
  %4209 = vset.pattern.permute.xlu0 14
  %4210 = vperm.xlu0 %4209, %v987
  %v4211 = vpop.permute.xlu0 %4210
  %4213 = vset.pattern.permute.xlu0 14
  %4214 = vperm.xlu0 %4213, %v989
  %v4215 = vpop.permute.xlu0 %4214
  %4217 = vset.pattern.permute.xlu0 14
  %4218 = vperm.xlu0 %4217, %v991
  %v4219 = vpop.permute.xlu0 %4218
  %4221 = vset.pattern.permute.xlu0 14
  %4222 = vperm.xlu0 %4221, %v993
  %v4223 = vpop.permute.xlu0 %4222
  %4225 = vset.pattern.permute.xlu0 14
  %4226 = vperm.xlu0 %4225, %v995
  %v4227 = vpop.permute.xlu0 %4226
  %4229 = vset.pattern.permute.xlu0 14
  %4230 = vperm.xlu0 %4229, %v997
  %v4231 = vpop.permute.xlu0 %4230
  %4233 = vset.pattern.permute.xlu0 14
  %4234 = vperm.xlu0 %4233, %v999
  %v4235 = vpop.permute.xlu0 %4234
  %4237 = vset.pattern.permute.xlu0 14
  %4238 = vperm.xlu0 %4237, %v1001
  %v4239 = vpop.permute.xlu0 %4238
  %4241 = vset.pattern.permute.xlu0 14
  %4242 = vperm.xlu0 %4241, %v1003
  %v4243 = vpop.permute.xlu0 %4242
  %4245 = vset.pattern.permute.xlu0 14
  %4246 = vperm.xlu0 %4245, %v1005
  %v4247 = vpop.permute.xlu0 %4246
  %4249 = vset.pattern.permute.xlu0 14
  %4250 = vperm.xlu0 %4249, %v1007
  %v4251 = vpop.permute.xlu0 %4250
  %4253 = vset.pattern.permute.xlu0 14
  %4254 = vperm.xlu0 %4253, %v1009
  %v4255 = vpop.permute.xlu0 %4254
  %4257 = vset.pattern.permute.xlu0 14
  %4258 = vperm.xlu0 %4257, %v1011
  %v4259 = vpop.permute.xlu0 %4258
  %4261 = vset.pattern.permute.xlu0 14
  %4262 = vperm.xlu0 %4261, %v1013
  %v4263 = vpop.permute.xlu0 %4262
  %4265 = vset.pattern.permute.xlu0 14
  %4266 = vperm.xlu0 %4265, %v1015
  %v4267 = vpop.permute.xlu0 %4266
  %4269 = vset.pattern.permute.xlu0 14
  %4270 = vperm.xlu0 %4269, %v1017
  %v4271 = vpop.permute.xlu0 %4270
  %4273 = vset.pattern.permute.xlu0 14
  %4274 = vperm.xlu0 %4273, %v1019
  %v4275 = vpop.permute.xlu0 %4274
  %4277 = vset.pattern.permute.xlu0 14
  %4278 = vperm.xlu0 %4277, %v1021
  %v4279 = vpop.permute.xlu0 %4278
  %4281 = vset.pattern.permute.xlu0 14
  %4282 = vperm.xlu0 %4281, %v1023
  %v4283 = vpop.permute.xlu0 %4282
  %4285 = vset.pattern.permute.xlu0 14
  %4286 = vperm.xlu0 %4285, %v1025
  %v4287 = vpop.permute.xlu0 %4286
  %4289 = vset.pattern.permute.xlu0 14
  %4290 = vperm.xlu0 %4289, %v1027
  %v4291 = vpop.permute.xlu0 %4290
  %4293 = vset.pattern.permute.xlu0 14
  %4294 = vperm.xlu0 %4293, %v1029
  %v4295 = vpop.permute.xlu0 %4294
  %4297 = vset.pattern.permute.xlu0 14
  %4298 = vperm.xlu0 %4297, %v1031
  %v4299 = vpop.permute.xlu0 %4298
  %4301 = vset.pattern.permute.xlu0 14
  %4302 = vperm.xlu0 %4301, %v1033
  %v4303 = vpop.permute.xlu0 %4302
  %4305 = vset.pattern.permute.xlu0 14
  %4306 = vperm.xlu0 %4305, %v1035
  %v4307 = vpop.permute.xlu0 %4306
  %4309 = vset.pattern.permute.xlu0 14
  %4310 = vperm.xlu0 %4309, %v1037
  %v4311 = vpop.permute.xlu0 %4310
  %4313 = vset.pattern.permute.xlu0 14
  %4314 = vperm.xlu0 %4313, %v1039
  %v4315 = vpop.permute.xlu0 %4314
  %4317 = vset.pattern.permute.xlu0 14
  %4318 = vperm.xlu0 %4317, %v1041
  %v4319 = vpop.permute.xlu0 %4318
  %v4321 = vmul.f32 %v915, %v4067
  %v4322 = vmul.f32 %v917, %v4071
  %v4323 = vmul.f32 %v919, %v4075
  %v4324 = vmul.f32 %v921, %v4079
  %v4325 = vmul.f32 %v923, %v4083
  %v4326 = vmul.f32 %v925, %v4087
  %v4327 = vmul.f32 %v927, %v4091
  %v4328 = vmul.f32 %v929, %v4095
  %v4329 = vmul.f32 %v931, %v4099
  %v4330 = vmul.f32 %v933, %v4103
  %v4331 = vmul.f32 %v935, %v4107
  %v4332 = vmul.f32 %v937, %v4111
  %v4333 = vmul.f32 %v939, %v4115
  %v4334 = vmul.f32 %v941, %v4119
  %v4335 = vmul.f32 %v943, %v4123
  %v4336 = vmul.f32 %v945, %v4127
  %v4337 = vmul.f32 %v947, %v4131
  %v4338 = vmul.f32 %v949, %v4135
  %v4339 = vmul.f32 %v951, %v4139
  %v4340 = vmul.f32 %v953, %v4143
  %v4341 = vmul.f32 %v955, %v4147
  %v4342 = vmul.f32 %v957, %v4151
  %v4343 = vmul.f32 %v959, %v4155
  %v4344 = vmul.f32 %v961, %v4159
  %v4345 = vmul.f32 %v963, %v4163
  %v4346 = vmul.f32 %v965, %v4167
  %v4347 = vmul.f32 %v967, %v4171
  %v4348 = vmul.f32 %v969, %v4175
  %v4349 = vmul.f32 %v971, %v4179
  %v4350 = vmul.f32 %v973, %v4183
  %v4351 = vmul.f32 %v975, %v4187
  %v4352 = vmul.f32 %v977, %v4191
  %v4353 = vmul.f32 %v979, %v4195
  %v4354 = vmul.f32 %v981, %v4199
  %v4355 = vmul.f32 %v983, %v4203
  %v4356 = vmul.f32 %v985, %v4207
  %v4357 = vmul.f32 %v987, %v4211
  %v4358 = vmul.f32 %v989, %v4215
  %v4359 = vmul.f32 %v991, %v4219
  %v4360 = vmul.f32 %v993, %v4223
  %v4361 = vmul.f32 %v995, %v4227
  %v4362 = vmul.f32 %v997, %v4231
  %v4363 = vmul.f32 %v999, %v4235
  %v4364 = vmul.f32 %v1001, %v4239
  %v4365 = vmul.f32 %v1003, %v4243
  %v4366 = vmul.f32 %v1005, %v4247
  %v4367 = vmul.f32 %v1007, %v4251
  %v4368 = vmul.f32 %v1009, %v4255
  %v4369 = vmul.f32 %v1011, %v4259
  %v4370 = vmul.f32 %v1013, %v4263
  %v4371 = vmul.f32 %v1015, %v4267
  %v4372 = vmul.f32 %v1017, %v4271
  %v4373 = vmul.f32 %v1019, %v4275
  %v4374 = vmul.f32 %v1021, %v4279
  %v4375 = vmul.f32 %v1023, %v4283
  %v4376 = vmul.f32 %v1025, %v4287
  %v4377 = vmul.f32 %v1027, %v4291
  %v4378 = vmul.f32 %v1029, %v4295
  %v4379 = vmul.f32 %v1031, %v4299
  %v4380 = vmul.f32 %v1033, %v4303
  %v4381 = vmul.f32 %v1035, %v4307
  %v4382 = vmul.f32 %v1037, %v4311
  %v4383 = vmul.f32 %v1039, %v4315
  %v4384 = vmul.f32 %v1041, %v4319
  %4449 = vrot.lane.b32.xlu0 %v3681, 113
  %v4450 = vpop.permute.xlu0 %4449
  %4451 = vrot.lane.b32.xlu0 %v3682, 113
  %v4452 = vpop.permute.xlu0 %4451
  %4453 = vrot.lane.b32.xlu0 %v3683, 113
  %v4454 = vpop.permute.xlu0 %4453
  %4455 = vrot.lane.b32.xlu0 %v3684, 113
  %v4456 = vpop.permute.xlu0 %4455
  %4457 = vrot.lane.b32.xlu0 %v3685, 113
  %v4458 = vpop.permute.xlu0 %4457
  %4459 = vrot.lane.b32.xlu0 %v3686, 113
  %v4460 = vpop.permute.xlu0 %4459
  %4461 = vrot.lane.b32.xlu0 %v3687, 113
  %v4462 = vpop.permute.xlu0 %4461
  %4463 = vrot.lane.b32.xlu0 %v3688, 113
  %v4464 = vpop.permute.xlu0 %4463
  %4465 = vrot.lane.b32.xlu0 %v3689, 113
  %v4466 = vpop.permute.xlu0 %4465
  %4467 = vrot.lane.b32.xlu0 %v3690, 113
  %v4468 = vpop.permute.xlu0 %4467
  %4469 = vrot.lane.b32.xlu0 %v3691, 113
  %v4470 = vpop.permute.xlu0 %4469
  %4471 = vrot.lane.b32.xlu0 %v3692, 113
  %v4472 = vpop.permute.xlu0 %4471
  %4473 = vrot.lane.b32.xlu0 %v3693, 113
  %v4474 = vpop.permute.xlu0 %4473
  %4475 = vrot.lane.b32.xlu0 %v3694, 113
  %v4476 = vpop.permute.xlu0 %4475
  %4477 = vrot.lane.b32.xlu0 %v3695, 113
  %v4478 = vpop.permute.xlu0 %4477
  %4479 = vrot.lane.b32.xlu0 %v3696, 113
  %v4480 = vpop.permute.xlu0 %4479
  %4481 = vrot.lane.b32.xlu0 %v3697, 113
  %v4482 = vpop.permute.xlu0 %4481
  %4483 = vrot.lane.b32.xlu0 %v3698, 113
  %v4484 = vpop.permute.xlu0 %4483
  %4485 = vrot.lane.b32.xlu0 %v3699, 113
  %v4486 = vpop.permute.xlu0 %4485
  %4487 = vrot.lane.b32.xlu0 %v3700, 113
  %v4488 = vpop.permute.xlu0 %4487
  %4489 = vrot.lane.b32.xlu0 %v3701, 113
  %v4490 = vpop.permute.xlu0 %4489
  %4491 = vrot.lane.b32.xlu0 %v3702, 113
  %v4492 = vpop.permute.xlu0 %4491
  %4493 = vrot.lane.b32.xlu0 %v3703, 113
  %v4494 = vpop.permute.xlu0 %4493
  %4495 = vrot.lane.b32.xlu0 %v3704, 113
  %v4496 = vpop.permute.xlu0 %4495
  %4497 = vrot.lane.b32.xlu0 %v3705, 113
  %v4498 = vpop.permute.xlu0 %4497
  %4499 = vrot.lane.b32.xlu0 %v3706, 113
  %v4500 = vpop.permute.xlu0 %4499
  %4501 = vrot.lane.b32.xlu0 %v3707, 113
  %v4502 = vpop.permute.xlu0 %4501
  %4503 = vrot.lane.b32.xlu0 %v3708, 113
  %v4504 = vpop.permute.xlu0 %4503
  %4505 = vrot.lane.b32.xlu0 %v3709, 113
  %v4506 = vpop.permute.xlu0 %4505
  %4507 = vrot.lane.b32.xlu0 %v3710, 113
  %v4508 = vpop.permute.xlu0 %4507
  %4509 = vrot.lane.b32.xlu0 %v3711, 113
  %v4510 = vpop.permute.xlu0 %4509
  %4511 = vrot.lane.b32.xlu0 %v3712, 113
  %v4512 = vpop.permute.xlu0 %4511
  %4513 = vrot.lane.b32.xlu0 %v3713, 113
  %v4514 = vpop.permute.xlu0 %4513
  %4515 = vrot.lane.b32.xlu0 %v3714, 113
  %v4516 = vpop.permute.xlu0 %4515
  %4517 = vrot.lane.b32.xlu0 %v3715, 113
  %v4518 = vpop.permute.xlu0 %4517
  %4519 = vrot.lane.b32.xlu0 %v3716, 113
  %v4520 = vpop.permute.xlu0 %4519
  %4521 = vrot.lane.b32.xlu0 %v3717, 113
  %v4522 = vpop.permute.xlu0 %4521
  %4523 = vrot.lane.b32.xlu0 %v3718, 113
  %v4524 = vpop.permute.xlu0 %4523
  %4525 = vrot.lane.b32.xlu0 %v3719, 113
  %v4526 = vpop.permute.xlu0 %4525
  %4527 = vrot.lane.b32.xlu0 %v3720, 113
  %v4528 = vpop.permute.xlu0 %4527
  %4529 = vrot.lane.b32.xlu0 %v3721, 113
  %v4530 = vpop.permute.xlu0 %4529
  %4531 = vrot.lane.b32.xlu0 %v3722, 113
  %v4532 = vpop.permute.xlu0 %4531
  %4533 = vrot.lane.b32.xlu0 %v3723, 113
  %v4534 = vpop.permute.xlu0 %4533
  %4535 = vrot.lane.b32.xlu0 %v3724, 113
  %v4536 = vpop.permute.xlu0 %4535
  %4537 = vrot.lane.b32.xlu0 %v3725, 113
  %v4538 = vpop.permute.xlu0 %4537
  %4539 = vrot.lane.b32.xlu0 %v3726, 113
  %v4540 = vpop.permute.xlu0 %4539
  %4541 = vrot.lane.b32.xlu0 %v3727, 113
  %v4542 = vpop.permute.xlu0 %4541
  %4543 = vrot.lane.b32.xlu0 %v3728, 113
  %v4544 = vpop.permute.xlu0 %4543
  %4545 = vrot.lane.b32.xlu0 %v3729, 113
  %v4546 = vpop.permute.xlu0 %4545
  %4547 = vrot.lane.b32.xlu0 %v3730, 113
  %v4548 = vpop.permute.xlu0 %4547
  %4549 = vrot.lane.b32.xlu0 %v3731, 113
  %v4550 = vpop.permute.xlu0 %4549
  %4551 = vrot.lane.b32.xlu0 %v3732, 113
  %v4552 = vpop.permute.xlu0 %4551
  %4553 = vrot.lane.b32.xlu0 %v3733, 113
  %v4554 = vpop.permute.xlu0 %4553
  %4555 = vrot.lane.b32.xlu0 %v3734, 113
  %v4556 = vpop.permute.xlu0 %4555
  %4557 = vrot.lane.b32.xlu0 %v3735, 113
  %v4558 = vpop.permute.xlu0 %4557
  %4559 = vrot.lane.b32.xlu0 %v3736, 113
  %v4560 = vpop.permute.xlu0 %4559
  %4561 = vrot.lane.b32.xlu0 %v3737, 113
  %v4562 = vpop.permute.xlu0 %4561
  %4563 = vrot.lane.b32.xlu0 %v3738, 113
  %v4564 = vpop.permute.xlu0 %4563
  %4565 = vrot.lane.b32.xlu0 %v3739, 113
  %v4566 = vpop.permute.xlu0 %4565
  %4567 = vrot.lane.b32.xlu0 %v3740, 113
  %v4568 = vpop.permute.xlu0 %4567
  %4569 = vrot.lane.b32.xlu0 %v3741, 113
  %v4570 = vpop.permute.xlu0 %4569
  %4571 = vrot.lane.b32.xlu0 %v3742, 113
  %v4572 = vpop.permute.xlu0 %4571
  %4573 = vrot.lane.b32.xlu0 %v3743, 113
  %v4574 = vpop.permute.xlu0 %4573
  %4575 = vrot.lane.b32.xlu0 %v3744, 113
  %v4576 = vpop.permute.xlu0 %4575
  %4705 = vrot.lane.b32.xlu0 %v4001, 113
  %v4706 = vpop.permute.xlu0 %4705
  %4707 = vrot.lane.b32.xlu0 %v4002, 113
  %v4708 = vpop.permute.xlu0 %4707
  %4709 = vrot.lane.b32.xlu0 %v4003, 113
  %v4710 = vpop.permute.xlu0 %4709
  %4711 = vrot.lane.b32.xlu0 %v4004, 113
  %v4712 = vpop.permute.xlu0 %4711
  %4713 = vrot.lane.b32.xlu0 %v4005, 113
  %v4714 = vpop.permute.xlu0 %4713
  %4715 = vrot.lane.b32.xlu0 %v4006, 113
  %v4716 = vpop.permute.xlu0 %4715
  %4717 = vrot.lane.b32.xlu0 %v4007, 113
  %v4718 = vpop.permute.xlu0 %4717
  %4719 = vrot.lane.b32.xlu0 %v4008, 113
  %v4720 = vpop.permute.xlu0 %4719
  %4721 = vrot.lane.b32.xlu0 %v4009, 113
  %v4722 = vpop.permute.xlu0 %4721
  %4723 = vrot.lane.b32.xlu0 %v4010, 113
  %v4724 = vpop.permute.xlu0 %4723
  %4725 = vrot.lane.b32.xlu0 %v4011, 113
  %v4726 = vpop.permute.xlu0 %4725
  %4727 = vrot.lane.b32.xlu0 %v4012, 113
  %v4728 = vpop.permute.xlu0 %4727
  %4729 = vrot.lane.b32.xlu0 %v4013, 113
  %v4730 = vpop.permute.xlu0 %4729
  %4731 = vrot.lane.b32.xlu0 %v4014, 113
  %v4732 = vpop.permute.xlu0 %4731
  %4733 = vrot.lane.b32.xlu0 %v4015, 113
  %v4734 = vpop.permute.xlu0 %4733
  %4735 = vrot.lane.b32.xlu0 %v4016, 113
  %v4736 = vpop.permute.xlu0 %4735
  %4737 = vrot.lane.b32.xlu0 %v4017, 113
  %v4738 = vpop.permute.xlu0 %4737
  %4739 = vrot.lane.b32.xlu0 %v4018, 113
  %v4740 = vpop.permute.xlu0 %4739
  %4741 = vrot.lane.b32.xlu0 %v4019, 113
  %v4742 = vpop.permute.xlu0 %4741
  %4743 = vrot.lane.b32.xlu0 %v4020, 113
  %v4744 = vpop.permute.xlu0 %4743
  %4745 = vrot.lane.b32.xlu0 %v4021, 113
  %v4746 = vpop.permute.xlu0 %4745
  %4747 = vrot.lane.b32.xlu0 %v4022, 113
  %v4748 = vpop.permute.xlu0 %4747
  %4749 = vrot.lane.b32.xlu0 %v4023, 113
  %v4750 = vpop.permute.xlu0 %4749
  %4751 = vrot.lane.b32.xlu0 %v4024, 113
  %v4752 = vpop.permute.xlu0 %4751
  %4753 = vrot.lane.b32.xlu0 %v4025, 113
  %v4754 = vpop.permute.xlu0 %4753
  %4755 = vrot.lane.b32.xlu0 %v4026, 113
  %v4756 = vpop.permute.xlu0 %4755
  %4757 = vrot.lane.b32.xlu0 %v4027, 113
  %v4758 = vpop.permute.xlu0 %4757
  %4759 = vrot.lane.b32.xlu0 %v4028, 113
  %v4760 = vpop.permute.xlu0 %4759
  %4761 = vrot.lane.b32.xlu0 %v4029, 113
  %v4762 = vpop.permute.xlu0 %4761
  %4763 = vrot.lane.b32.xlu0 %v4030, 113
  %v4764 = vpop.permute.xlu0 %4763
  %4765 = vrot.lane.b32.xlu0 %v4031, 113
  %v4766 = vpop.permute.xlu0 %4765
  %4767 = vrot.lane.b32.xlu0 %v4032, 113
  %v4768 = vpop.permute.xlu0 %4767
  %4769 = vrot.lane.b32.xlu0 %v4033, 113
  %v4770 = vpop.permute.xlu0 %4769
  %4771 = vrot.lane.b32.xlu0 %v4034, 113
  %v4772 = vpop.permute.xlu0 %4771
  %4773 = vrot.lane.b32.xlu0 %v4035, 113
  %v4774 = vpop.permute.xlu0 %4773
  %4775 = vrot.lane.b32.xlu0 %v4036, 113
  %v4776 = vpop.permute.xlu0 %4775
  %4777 = vrot.lane.b32.xlu0 %v4037, 113
  %v4778 = vpop.permute.xlu0 %4777
  %4779 = vrot.lane.b32.xlu0 %v4038, 113
  %v4780 = vpop.permute.xlu0 %4779
  %4781 = vrot.lane.b32.xlu0 %v4039, 113
  %v4782 = vpop.permute.xlu0 %4781
  %4783 = vrot.lane.b32.xlu0 %v4040, 113
  %v4784 = vpop.permute.xlu0 %4783
  %4785 = vrot.lane.b32.xlu0 %v4041, 113
  %v4786 = vpop.permute.xlu0 %4785
  %4787 = vrot.lane.b32.xlu0 %v4042, 113
  %v4788 = vpop.permute.xlu0 %4787
  %4789 = vrot.lane.b32.xlu0 %v4043, 113
  %v4790 = vpop.permute.xlu0 %4789
  %4791 = vrot.lane.b32.xlu0 %v4044, 113
  %v4792 = vpop.permute.xlu0 %4791
  %4793 = vrot.lane.b32.xlu0 %v4045, 113
  %v4794 = vpop.permute.xlu0 %4793
  %4795 = vrot.lane.b32.xlu0 %v4046, 113
  %v4796 = vpop.permute.xlu0 %4795
  %4797 = vrot.lane.b32.xlu0 %v4047, 113
  %v4798 = vpop.permute.xlu0 %4797
  %4799 = vrot.lane.b32.xlu0 %v4048, 113
  %v4800 = vpop.permute.xlu0 %4799
  %4801 = vrot.lane.b32.xlu0 %v4049, 113
  %v4802 = vpop.permute.xlu0 %4801
  %4803 = vrot.lane.b32.xlu0 %v4050, 113
  %v4804 = vpop.permute.xlu0 %4803
  %4805 = vrot.lane.b32.xlu0 %v4051, 113
  %v4806 = vpop.permute.xlu0 %4805
  %4807 = vrot.lane.b32.xlu0 %v4052, 113
  %v4808 = vpop.permute.xlu0 %4807
  %4809 = vrot.lane.b32.xlu0 %v4053, 113
  %v4810 = vpop.permute.xlu0 %4809
  %4811 = vrot.lane.b32.xlu0 %v4054, 113
  %v4812 = vpop.permute.xlu0 %4811
  %4813 = vrot.lane.b32.xlu0 %v4055, 113
  %v4814 = vpop.permute.xlu0 %4813
  %4815 = vrot.lane.b32.xlu0 %v4056, 113
  %v4816 = vpop.permute.xlu0 %4815
  %4817 = vrot.lane.b32.xlu0 %v4057, 113
  %v4818 = vpop.permute.xlu0 %4817
  %4819 = vrot.lane.b32.xlu0 %v4058, 113
  %v4820 = vpop.permute.xlu0 %4819
  %4821 = vrot.lane.b32.xlu0 %v4059, 113
  %v4822 = vpop.permute.xlu0 %4821
  %4823 = vrot.lane.b32.xlu0 %v4060, 113
  %v4824 = vpop.permute.xlu0 %4823
  %4825 = vrot.lane.b32.xlu0 %v4061, 113
  %v4826 = vpop.permute.xlu0 %4825
  %4827 = vrot.lane.b32.xlu0 %v4062, 113
  %v4828 = vpop.permute.xlu0 %4827
  %4829 = vrot.lane.b32.xlu0 %v4063, 113
  %v4830 = vpop.permute.xlu0 %4829
  %4831 = vrot.lane.b32.xlu0 %v4064, 113
  %v4832 = vpop.permute.xlu0 %4831
  %4961 = vrot.lane.b32.xlu0 %v4321, 113
  %v4962 = vpop.permute.xlu0 %4961
  %4963 = vrot.lane.b32.xlu0 %v4322, 113
  %v4964 = vpop.permute.xlu0 %4963
  %4965 = vrot.lane.b32.xlu0 %v4323, 113
  %v4966 = vpop.permute.xlu0 %4965
  %4967 = vrot.lane.b32.xlu0 %v4324, 113
  %v4968 = vpop.permute.xlu0 %4967
  %4969 = vrot.lane.b32.xlu0 %v4325, 113
  %v4970 = vpop.permute.xlu0 %4969
  %4971 = vrot.lane.b32.xlu0 %v4326, 113
  %v4972 = vpop.permute.xlu0 %4971
  %4973 = vrot.lane.b32.xlu0 %v4327, 113
  %v4974 = vpop.permute.xlu0 %4973
  %4975 = vrot.lane.b32.xlu0 %v4328, 113
  %v4976 = vpop.permute.xlu0 %4975
  %4977 = vrot.lane.b32.xlu0 %v4329, 113
  %v4978 = vpop.permute.xlu0 %4977
  %4979 = vrot.lane.b32.xlu0 %v4330, 113
  %v4980 = vpop.permute.xlu0 %4979
  %4981 = vrot.lane.b32.xlu0 %v4331, 113
  %v4982 = vpop.permute.xlu0 %4981
  %4983 = vrot.lane.b32.xlu0 %v4332, 113
  %v4984 = vpop.permute.xlu0 %4983
  %4985 = vrot.lane.b32.xlu0 %v4333, 113
  %v4986 = vpop.permute.xlu0 %4985
  %4987 = vrot.lane.b32.xlu0 %v4334, 113
  %v4988 = vpop.permute.xlu0 %4987
  %4989 = vrot.lane.b32.xlu0 %v4335, 113
  %v4990 = vpop.permute.xlu0 %4989
  %4991 = vrot.lane.b32.xlu0 %v4336, 113
  %v4992 = vpop.permute.xlu0 %4991
  %4993 = vrot.lane.b32.xlu0 %v4337, 113
  %v4994 = vpop.permute.xlu0 %4993
  %4995 = vrot.lane.b32.xlu0 %v4338, 113
  %v4996 = vpop.permute.xlu0 %4995
  %4997 = vrot.lane.b32.xlu0 %v4339, 113
  %v4998 = vpop.permute.xlu0 %4997
  %4999 = vrot.lane.b32.xlu0 %v4340, 113
  %v5000 = vpop.permute.xlu0 %4999
  %5001 = vrot.lane.b32.xlu0 %v4341, 113
  %v5002 = vpop.permute.xlu0 %5001
  %5003 = vrot.lane.b32.xlu0 %v4342, 113
  %v5004 = vpop.permute.xlu0 %5003
  %5005 = vrot.lane.b32.xlu0 %v4343, 113
  %v5006 = vpop.permute.xlu0 %5005
  %5007 = vrot.lane.b32.xlu0 %v4344, 113
  %v5008 = vpop.permute.xlu0 %5007
  %5009 = vrot.lane.b32.xlu0 %v4345, 113
  %v5010 = vpop.permute.xlu0 %5009
  %5011 = vrot.lane.b32.xlu0 %v4346, 113
  %v5012 = vpop.permute.xlu0 %5011
  %5013 = vrot.lane.b32.xlu0 %v4347, 113
  %v5014 = vpop.permute.xlu0 %5013
  %5015 = vrot.lane.b32.xlu0 %v4348, 113
  %v5016 = vpop.permute.xlu0 %5015
  %5017 = vrot.lane.b32.xlu0 %v4349, 113
  %v5018 = vpop.permute.xlu0 %5017
  %5019 = vrot.lane.b32.xlu0 %v4350, 113
  %v5020 = vpop.permute.xlu0 %5019
  %5021 = vrot.lane.b32.xlu0 %v4351, 113
  %v5022 = vpop.permute.xlu0 %5021
  %5023 = vrot.lane.b32.xlu0 %v4352, 113
  %v5024 = vpop.permute.xlu0 %5023
  %5025 = vrot.lane.b32.xlu0 %v4353, 113
  %v5026 = vpop.permute.xlu0 %5025
  %5027 = vrot.lane.b32.xlu0 %v4354, 113
  %v5028 = vpop.permute.xlu0 %5027
  %5029 = vrot.lane.b32.xlu0 %v4355, 113
  %v5030 = vpop.permute.xlu0 %5029
  %5031 = vrot.lane.b32.xlu0 %v4356, 113
  %v5032 = vpop.permute.xlu0 %5031
  %5033 = vrot.lane.b32.xlu0 %v4357, 113
  %v5034 = vpop.permute.xlu0 %5033
  %5035 = vrot.lane.b32.xlu0 %v4358, 113
  %v5036 = vpop.permute.xlu0 %5035
  %5037 = vrot.lane.b32.xlu0 %v4359, 113
  %v5038 = vpop.permute.xlu0 %5037
  %5039 = vrot.lane.b32.xlu0 %v4360, 113
  %v5040 = vpop.permute.xlu0 %5039
  %5041 = vrot.lane.b32.xlu0 %v4361, 113
  %v5042 = vpop.permute.xlu0 %5041
  %5043 = vrot.lane.b32.xlu0 %v4362, 113
  %v5044 = vpop.permute.xlu0 %5043
  %5045 = vrot.lane.b32.xlu0 %v4363, 113
  %v5046 = vpop.permute.xlu0 %5045
  %5047 = vrot.lane.b32.xlu0 %v4364, 113
  %v5048 = vpop.permute.xlu0 %5047
  %5049 = vrot.lane.b32.xlu0 %v4365, 113
  %v5050 = vpop.permute.xlu0 %5049
  %5051 = vrot.lane.b32.xlu0 %v4366, 113
  %v5052 = vpop.permute.xlu0 %5051
  %5053 = vrot.lane.b32.xlu0 %v4367, 113
  %v5054 = vpop.permute.xlu0 %5053
  %5055 = vrot.lane.b32.xlu0 %v4368, 113
  %v5056 = vpop.permute.xlu0 %5055
  %5057 = vrot.lane.b32.xlu0 %v4369, 113
  %v5058 = vpop.permute.xlu0 %5057
  %5059 = vrot.lane.b32.xlu0 %v4370, 113
  %v5060 = vpop.permute.xlu0 %5059
  %5061 = vrot.lane.b32.xlu0 %v4371, 113
  %v5062 = vpop.permute.xlu0 %5061
  %5063 = vrot.lane.b32.xlu0 %v4372, 113
  %v5064 = vpop.permute.xlu0 %5063
  %5065 = vrot.lane.b32.xlu0 %v4373, 113
  %v5066 = vpop.permute.xlu0 %5065
  %5067 = vrot.lane.b32.xlu0 %v4374, 113
  %v5068 = vpop.permute.xlu0 %5067
  %5069 = vrot.lane.b32.xlu0 %v4375, 113
  %v5070 = vpop.permute.xlu0 %5069
  %5071 = vrot.lane.b32.xlu0 %v4376, 113
  %v5072 = vpop.permute.xlu0 %5071
  %5073 = vrot.lane.b32.xlu0 %v4377, 113
  %v5074 = vpop.permute.xlu0 %5073
  %5075 = vrot.lane.b32.xlu0 %v4378, 113
  %v5076 = vpop.permute.xlu0 %5075
  %5077 = vrot.lane.b32.xlu0 %v4379, 113
  %v5078 = vpop.permute.xlu0 %5077
  %5079 = vrot.lane.b32.xlu0 %v4380, 113
  %v5080 = vpop.permute.xlu0 %5079
  %5081 = vrot.lane.b32.xlu0 %v4381, 113
  %v5082 = vpop.permute.xlu0 %5081
  %5083 = vrot.lane.b32.xlu0 %v4382, 113
  %v5084 = vpop.permute.xlu0 %5083
  %5085 = vrot.lane.b32.xlu0 %v4383, 113
  %v5086 = vpop.permute.xlu0 %5085
  %5087 = vrot.lane.b32.xlu0 %v4384, 113
  %v5088 = vpop.permute.xlu0 %5087
  %v5153 = vsel %vm3036, %v4450, %v4706
  %v5154 = vsel %vm3036, %v4452, %v4708
  %v5155 = vsel %vm3036, %v4454, %v4710
  %v5156 = vsel %vm3036, %v4456, %v4712
  %v5157 = vsel %vm3036, %v4458, %v4714
  %v5158 = vsel %vm3036, %v4460, %v4716
  %v5159 = vsel %vm3036, %v4462, %v4718
  %v5160 = vsel %vm3036, %v4464, %v4720
  %v5161 = vsel %vm3036, %v4466, %v4722
  %v5162 = vsel %vm3036, %v4468, %v4724
  %v5163 = vsel %vm3036, %v4470, %v4726
  %v5164 = vsel %vm3036, %v4472, %v4728
  %v5165 = vsel %vm3036, %v4474, %v4730
  %v5166 = vsel %vm3036, %v4476, %v4732
  %v5167 = vsel %vm3036, %v4478, %v4734
  %v5168 = vsel %vm3036, %v4480, %v4736
  %v5169 = vsel %vm3036, %v4482, %v4738
  %v5170 = vsel %vm3036, %v4484, %v4740
  %v5171 = vsel %vm3036, %v4486, %v4742
  %v5172 = vsel %vm3036, %v4488, %v4744
  %v5173 = vsel %vm3036, %v4490, %v4746
  %v5174 = vsel %vm3036, %v4492, %v4748
  %v5175 = vsel %vm3036, %v4494, %v4750
  %v5176 = vsel %vm3036, %v4496, %v4752
  %v5177 = vsel %vm3036, %v4498, %v4754
  %v5178 = vsel %vm3036, %v4500, %v4756
  %v5179 = vsel %vm3036, %v4502, %v4758
  %v5180 = vsel %vm3036, %v4504, %v4760
  %v5181 = vsel %vm3036, %v4506, %v4762
  %v5182 = vsel %vm3036, %v4508, %v4764
  %v5183 = vsel %vm3036, %v4510, %v4766
  %v5184 = vsel %vm3036, %v4512, %v4768
  %v5185 = vsel %vm3036, %v4514, %v4770
  %v5186 = vsel %vm3036, %v4516, %v4772
  %v5187 = vsel %vm3036, %v4518, %v4774
  %v5188 = vsel %vm3036, %v4520, %v4776
  %v5189 = vsel %vm3036, %v4522, %v4778
  %v5190 = vsel %vm3036, %v4524, %v4780
  %v5191 = vsel %vm3036, %v4526, %v4782
  %v5192 = vsel %vm3036, %v4528, %v4784
  %v5193 = vsel %vm3036, %v4530, %v4786
  %v5194 = vsel %vm3036, %v4532, %v4788
  %v5195 = vsel %vm3036, %v4534, %v4790
  %v5196 = vsel %vm3036, %v4536, %v4792
  %v5197 = vsel %vm3036, %v4538, %v4794
  %v5198 = vsel %vm3036, %v4540, %v4796
  %v5199 = vsel %vm3036, %v4542, %v4798
  %v5200 = vsel %vm3036, %v4544, %v4800
  %v5201 = vsel %vm3036, %v4546, %v4802
  %v5202 = vsel %vm3036, %v4548, %v4804
  %v5203 = vsel %vm3036, %v4550, %v4806
  %v5204 = vsel %vm3036, %v4552, %v4808
  %v5205 = vsel %vm3036, %v4554, %v4810
  %v5206 = vsel %vm3036, %v4556, %v4812
  %v5207 = vsel %vm3036, %v4558, %v4814
  %v5208 = vsel %vm3036, %v4560, %v4816
  %v5209 = vsel %vm3036, %v4562, %v4818
  %v5210 = vsel %vm3036, %v4564, %v4820
  %v5211 = vsel %vm3036, %v4566, %v4822
  %v5212 = vsel %vm3036, %v4568, %v4824
  %v5213 = vsel %vm3036, %v4570, %v4826
  %v5214 = vsel %vm3036, %v4572, %v4828
  %v5215 = vsel %vm3036, %v4574, %v4830
  %v5216 = vsel %vm3036, %v4576, %v4832
  %v5217 = vsel %vm3166, %v5153, %v4962
  %v5218 = vsel %vm3166, %v5154, %v4964
  %v5219 = vsel %vm3166, %v5155, %v4966
  %v5220 = vsel %vm3166, %v5156, %v4968
  %v5221 = vsel %vm3166, %v5157, %v4970
  %v5222 = vsel %vm3166, %v5158, %v4972
  %v5223 = vsel %vm3166, %v5159, %v4974
  %v5224 = vsel %vm3166, %v5160, %v4976
  %v5225 = vsel %vm3166, %v5161, %v4978
  %v5226 = vsel %vm3166, %v5162, %v4980
  %v5227 = vsel %vm3166, %v5163, %v4982
  %v5228 = vsel %vm3166, %v5164, %v4984
  %v5229 = vsel %vm3166, %v5165, %v4986
  %v5230 = vsel %vm3166, %v5166, %v4988
  %v5231 = vsel %vm3166, %v5167, %v4990
  %v5232 = vsel %vm3166, %v5168, %v4992
  %v5233 = vsel %vm3166, %v5169, %v4994
  %v5234 = vsel %vm3166, %v5170, %v4996
  %v5235 = vsel %vm3166, %v5171, %v4998
  %v5236 = vsel %vm3166, %v5172, %v5000
  %v5237 = vsel %vm3166, %v5173, %v5002
  %v5238 = vsel %vm3166, %v5174, %v5004
  %v5239 = vsel %vm3166, %v5175, %v5006
  %v5240 = vsel %vm3166, %v5176, %v5008
  %v5241 = vsel %vm3166, %v5177, %v5010
  %v5242 = vsel %vm3166, %v5178, %v5012
  %v5243 = vsel %vm3166, %v5179, %v5014
  %v5244 = vsel %vm3166, %v5180, %v5016
  %v5245 = vsel %vm3166, %v5181, %v5018
  %v5246 = vsel %vm3166, %v5182, %v5020
  %v5247 = vsel %vm3166, %v5183, %v5022
  %v5248 = vsel %vm3166, %v5184, %v5024
  %v5249 = vsel %vm3166, %v5185, %v5026
  %v5250 = vsel %vm3166, %v5186, %v5028
  %v5251 = vsel %vm3166, %v5187, %v5030
  %v5252 = vsel %vm3166, %v5188, %v5032
  %v5253 = vsel %vm3166, %v5189, %v5034
  %v5254 = vsel %vm3166, %v5190, %v5036
  %v5255 = vsel %vm3166, %v5191, %v5038
  %v5256 = vsel %vm3166, %v5192, %v5040
  %v5257 = vsel %vm3166, %v5193, %v5042
  %v5258 = vsel %vm3166, %v5194, %v5044
  %v5259 = vsel %vm3166, %v5195, %v5046
  %v5260 = vsel %vm3166, %v5196, %v5048
  %v5261 = vsel %vm3166, %v5197, %v5050
  %v5262 = vsel %vm3166, %v5198, %v5052
  %v5263 = vsel %vm3166, %v5199, %v5054
  %v5264 = vsel %vm3166, %v5200, %v5056
  %v5265 = vsel %vm3166, %v5201, %v5058
  %v5266 = vsel %vm3166, %v5202, %v5060
  %v5267 = vsel %vm3166, %v5203, %v5062
  %v5268 = vsel %vm3166, %v5204, %v5064
  %v5269 = vsel %vm3166, %v5205, %v5066
  %v5270 = vsel %vm3166, %v5206, %v5068
  %v5271 = vsel %vm3166, %v5207, %v5070
  %v5272 = vsel %vm3166, %v5208, %v5072
  %v5273 = vsel %vm3166, %v5209, %v5074
  %v5274 = vsel %vm3166, %v5210, %v5076
  %v5275 = vsel %vm3166, %v5211, %v5078
  %v5276 = vsel %vm3166, %v5212, %v5080
  %v5277 = vsel %vm3166, %v5213, %v5082
  %v5278 = vsel %vm3166, %v5214, %v5084
  %v5279 = vsel %vm3166, %v5215, %v5086
  %v5280 = vsel %vm3166, %v5216, %v5088
  %5281 = vst.msk [vmem:[%s6] sm:$0xff] %vm3296, %v5217
  %5282 = vst.msk [vmem:[%s6 + $0x8] sm:$0xff] %vm3296, %v5218
  %5283 = vst.msk [vmem:[%s6 + $0x10] sm:$0xff] %vm3296, %v5219
  %5284 = vst.msk [vmem:[%s6 + $0x18] sm:$0xff] %vm3296, %v5220
  %5285 = vst.msk [vmem:[%s6 + $0x20] sm:$0xff] %vm3296, %v5221
  %5286 = vst.msk [vmem:[%s6 + $0x28] sm:$0xff] %vm3296, %v5222
  %5287 = vst.msk [vmem:[%s6 + $0x30] sm:$0xff] %vm3296, %v5223
  %5288 = vst.msk [vmem:[%s6 + $0x38] sm:$0xff] %vm3296, %v5224
  %5289 = vst.msk [vmem:[%s6 + $0x40] sm:$0xff] %vm3296, %v5225
  %5290 = vst.msk [vmem:[%s6 + $0x48] sm:$0xff] %vm3296, %v5226
  %5291 = vst.msk [vmem:[%s6 + $0x50] sm:$0xff] %vm3296, %v5227
  %5292 = vst.msk [vmem:[%s6 + $0x58] sm:$0xff] %vm3296, %v5228
  %5293 = vst.msk [vmem:[%s6 + $0x60] sm:$0xff] %vm3296, %v5229
  %5294 = vst.msk [vmem:[%s6 + $0x68] sm:$0xff] %vm3296, %v5230
  %5295 = vst.msk [vmem:[%s6 + $0x70] sm:$0xff] %vm3296, %v5231
  %5296 = vst.msk [vmem:[%s6 + $0x78] sm:$0xff] %vm3296, %v5232
  %5297 = vst.msk [vmem:[%s6 + $0x80] sm:$0xff] %vm3296, %v5233
  %5298 = vst.msk [vmem:[%s6 + $0x88] sm:$0xff] %vm3296, %v5234
  %5299 = vst.msk [vmem:[%s6 + $0x90] sm:$0xff] %vm3296, %v5235
  %5300 = vst.msk [vmem:[%s6 + $0x98] sm:$0xff] %vm3296, %v5236
  %5301 = vst.msk [vmem:[%s6 + $0xa0] sm:$0xff] %vm3296, %v5237
  %5302 = vst.msk [vmem:[%s6 + $0xa8] sm:$0xff] %vm3296, %v5238
  %5303 = vst.msk [vmem:[%s6 + $0xb0] sm:$0xff] %vm3296, %v5239
  %5304 = vst.msk [vmem:[%s6 + $0xb8] sm:$0xff] %vm3296, %v5240
  %5305 = vst.msk [vmem:[%s6 + $0xc0] sm:$0xff] %vm3296, %v5241
  %5306 = vst.msk [vmem:[%s6 + $0xc8] sm:$0xff] %vm3296, %v5242
  %5307 = vst.msk [vmem:[%s6 + $0xd0] sm:$0xff] %vm3296, %v5243
  %5308 = vst.msk [vmem:[%s6 + $0xd8] sm:$0xff] %vm3296, %v5244
  %5309 = vst.msk [vmem:[%s6 + $0xe0] sm:$0xff] %vm3296, %v5245
  %5310 = vst.msk [vmem:[%s6 + $0xe8] sm:$0xff] %vm3296, %v5246
  %5311 = vst.msk [vmem:[%s6 + $0xf0] sm:$0xff] %vm3296, %v5247
  %5312 = vst.msk [vmem:[%s6 + $0xf8] sm:$0xff] %vm3296, %v5248
  %5313 = vst.msk [vmem:[%s6 + $0x100] sm:$0xff] %vm3296, %v5249
  %5314 = vst.msk [vmem:[%s6 + $0x108] sm:$0xff] %vm3296, %v5250
  %5315 = vst.msk [vmem:[%s6 + $0x110] sm:$0xff] %vm3296, %v5251
  %5316 = vst.msk [vmem:[%s6 + $0x118] sm:$0xff] %vm3296, %v5252
  %5317 = vst.msk [vmem:[%s6 + $0x120] sm:$0xff] %vm3296, %v5253
  %5318 = vst.msk [vmem:[%s6 + $0x128] sm:$0xff] %vm3296, %v5254
  %5319 = vst.msk [vmem:[%s6 + $0x130] sm:$0xff] %vm3296, %v5255
  %5320 = vst.msk [vmem:[%s6 + $0x138] sm:$0xff] %vm3296, %v5256
  %5321 = vst.msk [vmem:[%s6 + $0x140] sm:$0xff] %vm3296, %v5257
  %5322 = vst.msk [vmem:[%s6 + $0x148] sm:$0xff] %vm3296, %v5258
  %5323 = vst.msk [vmem:[%s6 + $0x150] sm:$0xff] %vm3296, %v5259
  %5324 = vst.msk [vmem:[%s6 + $0x158] sm:$0xff] %vm3296, %v5260
  %5325 = vst.msk [vmem:[%s6 + $0x160] sm:$0xff] %vm3296, %v5261
  %5326 = vst.msk [vmem:[%s6 + $0x168] sm:$0xff] %vm3296, %v5262
  %5327 = vst.msk [vmem:[%s6 + $0x170] sm:$0xff] %vm3296, %v5263
  %5328 = vst.msk [vmem:[%s6 + $0x178] sm:$0xff] %vm3296, %v5264
  %5329 = vst.msk [vmem:[%s6 + $0x180] sm:$0xff] %vm3296, %v5265
  %5330 = vst.msk [vmem:[%s6 + $0x188] sm:$0xff] %vm3296, %v5266
  %5331 = vst.msk [vmem:[%s6 + $0x190] sm:$0xff] %vm3296, %v5267
  %5332 = vst.msk [vmem:[%s6 + $0x198] sm:$0xff] %vm3296, %v5268
  %5333 = vst.msk [vmem:[%s6 + $0x1a0] sm:$0xff] %vm3296, %v5269
  %5334 = vst.msk [vmem:[%s6 + $0x1a8] sm:$0xff] %vm3296, %v5270
  %5335 = vst.msk [vmem:[%s6 + $0x1b0] sm:$0xff] %vm3296, %v5271
  %5336 = vst.msk [vmem:[%s6 + $0x1b8] sm:$0xff] %vm3296, %v5272
  %5337 = vst.msk [vmem:[%s6 + $0x1c0] sm:$0xff] %vm3296, %v5273
  %5338 = vst.msk [vmem:[%s6 + $0x1c8] sm:$0xff] %vm3296, %v5274
  %5339 = vst.msk [vmem:[%s6 + $0x1d0] sm:$0xff] %vm3296, %v5275
  %5340 = vst.msk [vmem:[%s6 + $0x1d8] sm:$0xff] %vm3296, %v5276
  %5341 = vst.msk [vmem:[%s6 + $0x1e0] sm:$0xff] %vm3296, %v5277
  %5342 = vst.msk [vmem:[%s6 + $0x1e8] sm:$0xff] %vm3296, %v5278
  %5343 = vst.msk [vmem:[%s6 + $0x1f0] sm:$0xff] %vm3296, %v5279
  %5344 = vst.msk [vmem:[%s6 + $0x1f8] sm:$0xff] %vm3296, %v5280
  %5345 = vrot.lane.b32.xlu0 %v915, 116
  %v5346 = vpop.permute.xlu0 %5345
  %5347 = vrot.lane.b32.xlu0 %v917, 116
  %v5348 = vpop.permute.xlu0 %5347
  %5349 = vrot.lane.b32.xlu0 %v919, 116
  %v5350 = vpop.permute.xlu0 %5349
  %5351 = vrot.lane.b32.xlu0 %v921, 116
  %v5352 = vpop.permute.xlu0 %5351
  %5353 = vrot.lane.b32.xlu0 %v923, 116
  %v5354 = vpop.permute.xlu0 %5353
  %5355 = vrot.lane.b32.xlu0 %v925, 116
  %v5356 = vpop.permute.xlu0 %5355
  %5357 = vrot.lane.b32.xlu0 %v927, 116
  %v5358 = vpop.permute.xlu0 %5357
  %5359 = vrot.lane.b32.xlu0 %v929, 116
  %v5360 = vpop.permute.xlu0 %5359
  %5361 = vrot.lane.b32.xlu0 %v931, 116
  %v5362 = vpop.permute.xlu0 %5361
  %5363 = vrot.lane.b32.xlu0 %v933, 116
  %v5364 = vpop.permute.xlu0 %5363
  %5365 = vrot.lane.b32.xlu0 %v935, 116
  %v5366 = vpop.permute.xlu0 %5365
  %5367 = vrot.lane.b32.xlu0 %v937, 116
  %v5368 = vpop.permute.xlu0 %5367
  %5369 = vrot.lane.b32.xlu0 %v939, 116
  %v5370 = vpop.permute.xlu0 %5369
  %5371 = vrot.lane.b32.xlu0 %v941, 116
  %v5372 = vpop.permute.xlu0 %5371
  %5373 = vrot.lane.b32.xlu0 %v943, 116
  %v5374 = vpop.permute.xlu0 %5373
  %5375 = vrot.lane.b32.xlu0 %v945, 116
  %v5376 = vpop.permute.xlu0 %5375
  %5377 = vrot.lane.b32.xlu0 %v947, 116
  %v5378 = vpop.permute.xlu0 %5377
  %5379 = vrot.lane.b32.xlu0 %v949, 116
  %v5380 = vpop.permute.xlu0 %5379
  %5381 = vrot.lane.b32.xlu0 %v951, 116
  %v5382 = vpop.permute.xlu0 %5381
  %5383 = vrot.lane.b32.xlu0 %v953, 116
  %v5384 = vpop.permute.xlu0 %5383
  %5385 = vrot.lane.b32.xlu0 %v955, 116
  %v5386 = vpop.permute.xlu0 %5385
  %5387 = vrot.lane.b32.xlu0 %v957, 116
  %v5388 = vpop.permute.xlu0 %5387
  %5389 = vrot.lane.b32.xlu0 %v959, 116
  %v5390 = vpop.permute.xlu0 %5389
  %5391 = vrot.lane.b32.xlu0 %v961, 116
  %v5392 = vpop.permute.xlu0 %5391
  %5393 = vrot.lane.b32.xlu0 %v963, 116
  %v5394 = vpop.permute.xlu0 %5393
  %5395 = vrot.lane.b32.xlu0 %v965, 116
  %v5396 = vpop.permute.xlu0 %5395
  %5397 = vrot.lane.b32.xlu0 %v967, 116
  %v5398 = vpop.permute.xlu0 %5397
  %5399 = vrot.lane.b32.xlu0 %v969, 116
  %v5400 = vpop.permute.xlu0 %5399
  %5401 = vrot.lane.b32.xlu0 %v971, 116
  %v5402 = vpop.permute.xlu0 %5401
  %5403 = vrot.lane.b32.xlu0 %v973, 116
  %v5404 = vpop.permute.xlu0 %5403
  %5405 = vrot.lane.b32.xlu0 %v975, 116
  %v5406 = vpop.permute.xlu0 %5405
  %5407 = vrot.lane.b32.xlu0 %v977, 116
  %v5408 = vpop.permute.xlu0 %5407
  %5409 = vrot.lane.b32.xlu0 %v979, 116
  %v5410 = vpop.permute.xlu0 %5409
  %5411 = vrot.lane.b32.xlu0 %v981, 116
  %v5412 = vpop.permute.xlu0 %5411
  %5413 = vrot.lane.b32.xlu0 %v983, 116
  %v5414 = vpop.permute.xlu0 %5413
  %5415 = vrot.lane.b32.xlu0 %v985, 116
  %v5416 = vpop.permute.xlu0 %5415
  %5417 = vrot.lane.b32.xlu0 %v987, 116
  %v5418 = vpop.permute.xlu0 %5417
  %5419 = vrot.lane.b32.xlu0 %v989, 116
  %v5420 = vpop.permute.xlu0 %5419
  %5421 = vrot.lane.b32.xlu0 %v991, 116
  %v5422 = vpop.permute.xlu0 %5421
  %5423 = vrot.lane.b32.xlu0 %v993, 116
  %v5424 = vpop.permute.xlu0 %5423
  %5425 = vrot.lane.b32.xlu0 %v995, 116
  %v5426 = vpop.permute.xlu0 %5425
  %5427 = vrot.lane.b32.xlu0 %v997, 116
  %v5428 = vpop.permute.xlu0 %5427
  %5429 = vrot.lane.b32.xlu0 %v999, 116
  %v5430 = vpop.permute.xlu0 %5429
  %5431 = vrot.lane.b32.xlu0 %v1001, 116
  %v5432 = vpop.permute.xlu0 %5431
  %5433 = vrot.lane.b32.xlu0 %v1003, 116
  %v5434 = vpop.permute.xlu0 %5433
  %5435 = vrot.lane.b32.xlu0 %v1005, 116
  %v5436 = vpop.permute.xlu0 %5435
  %5437 = vrot.lane.b32.xlu0 %v1007, 116
  %v5438 = vpop.permute.xlu0 %5437
  %5439 = vrot.lane.b32.xlu0 %v1009, 116
  %v5440 = vpop.permute.xlu0 %5439
  %5441 = vrot.lane.b32.xlu0 %v1011, 116
  %v5442 = vpop.permute.xlu0 %5441
  %5443 = vrot.lane.b32.xlu0 %v1013, 116
  %v5444 = vpop.permute.xlu0 %5443
  %5445 = vrot.lane.b32.xlu0 %v1015, 116
  %v5446 = vpop.permute.xlu0 %5445
  %5447 = vrot.lane.b32.xlu0 %v1017, 116
  %v5448 = vpop.permute.xlu0 %5447
  %5449 = vrot.lane.b32.xlu0 %v1019, 116
  %v5450 = vpop.permute.xlu0 %5449
  %5451 = vrot.lane.b32.xlu0 %v1021, 116
  %v5452 = vpop.permute.xlu0 %5451
  %5453 = vrot.lane.b32.xlu0 %v1023, 116
  %v5454 = vpop.permute.xlu0 %5453
  %5455 = vrot.lane.b32.xlu0 %v1025, 116
  %v5456 = vpop.permute.xlu0 %5455
  %5457 = vrot.lane.b32.xlu0 %v1027, 116
  %v5458 = vpop.permute.xlu0 %5457
  %5459 = vrot.lane.b32.xlu0 %v1029, 116
  %v5460 = vpop.permute.xlu0 %5459
  %5461 = vrot.lane.b32.xlu0 %v1031, 116
  %v5462 = vpop.permute.xlu0 %5461
  %5463 = vrot.lane.b32.xlu0 %v1033, 116
  %v5464 = vpop.permute.xlu0 %5463
  %5465 = vrot.lane.b32.xlu0 %v1035, 116
  %v5466 = vpop.permute.xlu0 %5465
  %5467 = vrot.lane.b32.xlu0 %v1037, 116
  %v5468 = vpop.permute.xlu0 %5467
  %5469 = vrot.lane.b32.xlu0 %v1039, 116
  %v5470 = vpop.permute.xlu0 %5469
  %5471 = vrot.lane.b32.xlu0 %v1041, 116
  %v5472 = vpop.permute.xlu0 %5471
  %vm5537 = vcmask 23552
  %5538 = vst.msk [vmem:[%s7] sm:$0xff] %vm5537, %v5346
  %5539 = vst.msk [vmem:[%s7 + $0x8] sm:$0xff] %vm5537, %v5348
  %5540 = vst.msk [vmem:[%s7 + $0x10] sm:$0xff] %vm5537, %v5350
  %5541 = vst.msk [vmem:[%s7 + $0x18] sm:$0xff] %vm5537, %v5352
  %5542 = vst.msk [vmem:[%s7 + $0x20] sm:$0xff] %vm5537, %v5354
  %5543 = vst.msk [vmem:[%s7 + $0x28] sm:$0xff] %vm5537, %v5356
  %5544 = vst.msk [vmem:[%s7 + $0x30] sm:$0xff] %vm5537, %v5358
  %5545 = vst.msk [vmem:[%s7 + $0x38] sm:$0xff] %vm5537, %v5360
  %5546 = vst.msk [vmem:[%s7 + $0x40] sm:$0xff] %vm5537, %v5362
  %5547 = vst.msk [vmem:[%s7 + $0x48] sm:$0xff] %vm5537, %v5364
  %5548 = vst.msk [vmem:[%s7 + $0x50] sm:$0xff] %vm5537, %v5366
  %5549 = vst.msk [vmem:[%s7 + $0x58] sm:$0xff] %vm5537, %v5368
  %5550 = vst.msk [vmem:[%s7 + $0x60] sm:$0xff] %vm5537, %v5370
  %5551 = vst.msk [vmem:[%s7 + $0x68] sm:$0xff] %vm5537, %v5372
  %5552 = vst.msk [vmem:[%s7 + $0x70] sm:$0xff] %vm5537, %v5374
  %5553 = vst.msk [vmem:[%s7 + $0x78] sm:$0xff] %vm5537, %v5376
  %5554 = vst.msk [vmem:[%s7 + $0x80] sm:$0xff] %vm5537, %v5378
  %5555 = vst.msk [vmem:[%s7 + $0x88] sm:$0xff] %vm5537, %v5380
  %5556 = vst.msk [vmem:[%s7 + $0x90] sm:$0xff] %vm5537, %v5382
  %5557 = vst.msk [vmem:[%s7 + $0x98] sm:$0xff] %vm5537, %v5384
  %5558 = vst.msk [vmem:[%s7 + $0xa0] sm:$0xff] %vm5537, %v5386
  %5559 = vst.msk [vmem:[%s7 + $0xa8] sm:$0xff] %vm5537, %v5388
  %5560 = vst.msk [vmem:[%s7 + $0xb0] sm:$0xff] %vm5537, %v5390
  %5561 = vst.msk [vmem:[%s7 + $0xb8] sm:$0xff] %vm5537, %v5392
  %5562 = vst.msk [vmem:[%s7 + $0xc0] sm:$0xff] %vm5537, %v5394
  %5563 = vst.msk [vmem:[%s7 + $0xc8] sm:$0xff] %vm5537, %v5396
  %5564 = vst.msk [vmem:[%s7 + $0xd0] sm:$0xff] %vm5537, %v5398
  %5565 = vst.msk [vmem:[%s7 + $0xd8] sm:$0xff] %vm5537, %v5400
  %5566 = vst.msk [vmem:[%s7 + $0xe0] sm:$0xff] %vm5537, %v5402
  %5567 = vst.msk [vmem:[%s7 + $0xe8] sm:$0xff] %vm5537, %v5404
  %5568 = vst.msk [vmem:[%s7 + $0xf0] sm:$0xff] %vm5537, %v5406
  %5569 = vst.msk [vmem:[%s7 + $0xf8] sm:$0xff] %vm5537, %v5408
  %5570 = vst.msk [vmem:[%s7 + $0x100] sm:$0xff] %vm5537, %v5410
  %5571 = vst.msk [vmem:[%s7 + $0x108] sm:$0xff] %vm5537, %v5412
  %5572 = vst.msk [vmem:[%s7 + $0x110] sm:$0xff] %vm5537, %v5414
  %5573 = vst.msk [vmem:[%s7 + $0x118] sm:$0xff] %vm5537, %v5416
  %5574 = vst.msk [vmem:[%s7 + $0x120] sm:$0xff] %vm5537, %v5418
  %5575 = vst.msk [vmem:[%s7 + $0x128] sm:$0xff] %vm5537, %v5420
  %5576 = vst.msk [vmem:[%s7 + $0x130] sm:$0xff] %vm5537, %v5422
  %5577 = vst.msk [vmem:[%s7 + $0x138] sm:$0xff] %vm5537, %v5424
  %5578 = vst.msk [vmem:[%s7 + $0x140] sm:$0xff] %vm5537, %v5426
  %5579 = vst.msk [vmem:[%s7 + $0x148] sm:$0xff] %vm5537, %v5428
  %5580 = vst.msk [vmem:[%s7 + $0x150] sm:$0xff] %vm5537, %v5430
  %5581 = vst.msk [vmem:[%s7 + $0x158] sm:$0xff] %vm5537, %v5432
  %5582 = vst.msk [vmem:[%s7 + $0x160] sm:$0xff] %vm5537, %v5434
  %5583 = vst.msk [vmem:[%s7 + $0x168] sm:$0xff] %vm5537, %v5436
  %5584 = vst.msk [vmem:[%s7 + $0x170] sm:$0xff] %vm5537, %v5438
  %5585 = vst.msk [vmem:[%s7 + $0x178] sm:$0xff] %vm5537, %v5440
  %5586 = vst.msk [vmem:[%s7 + $0x180] sm:$0xff] %vm5537, %v5442
  %5587 = vst.msk [vmem:[%s7 + $0x188] sm:$0xff] %vm5537, %v5444
  %5588 = vst.msk [vmem:[%s7 + $0x190] sm:$0xff] %vm5537, %v5446
  %5589 = vst.msk [vmem:[%s7 + $0x198] sm:$0xff] %vm5537, %v5448
  %5590 = vst.msk [vmem:[%s7 + $0x1a0] sm:$0xff] %vm5537, %v5450
  %5591 = vst.msk [vmem:[%s7 + $0x1a8] sm:$0xff] %vm5537, %v5452
  %5592 = vst.msk [vmem:[%s7 + $0x1b0] sm:$0xff] %vm5537, %v5454
  %5593 = vst.msk [vmem:[%s7 + $0x1b8] sm:$0xff] %vm5537, %v5456
  %5594 = vst.msk [vmem:[%s7 + $0x1c0] sm:$0xff] %vm5537, %v5458
  %5595 = vst.msk [vmem:[%s7 + $0x1c8] sm:$0xff] %vm5537, %v5460
  %5596 = vst.msk [vmem:[%s7 + $0x1d0] sm:$0xff] %vm5537, %v5462
  %5597 = vst.msk [vmem:[%s7 + $0x1d8] sm:$0xff] %vm5537, %v5464
  %5598 = vst.msk [vmem:[%s7 + $0x1e0] sm:$0xff] %vm5537, %v5466
  %5599 = vst.msk [vmem:[%s7 + $0x1e8] sm:$0xff] %vm5537, %v5468
  %5600 = vst.msk [vmem:[%s7 + $0x1f0] sm:$0xff] %vm5537, %v5470
  %5601 = vst.msk [vmem:[%s7 + $0x1f8] sm:$0xff] %vm5537, %v5472
  %5666 = vrot.lane.b32.xlu0 %v404, 101
  %v5667 = vpop.permute.xlu0 %5666
  %5668 = vrot.lane.b32.xlu0 %v407, 101
  %v5669 = vpop.permute.xlu0 %5668
  %5670 = vrot.lane.b32.xlu0 %v412, 101
  %v5671 = vpop.permute.xlu0 %5670
  %5672 = vrot.lane.b32.xlu0 %v415, 101
  %v5673 = vpop.permute.xlu0 %5672
  %5674 = vrot.lane.b32.xlu0 %v420, 101
  %v5675 = vpop.permute.xlu0 %5674
  %5676 = vrot.lane.b32.xlu0 %v423, 101
  %v5677 = vpop.permute.xlu0 %5676
  %5678 = vrot.lane.b32.xlu0 %v428, 101
  %v5679 = vpop.permute.xlu0 %5678
  %5680 = vrot.lane.b32.xlu0 %v431, 101
  %v5681 = vpop.permute.xlu0 %5680
  %5682 = vrot.lane.b32.xlu0 %v436, 101
  %v5683 = vpop.permute.xlu0 %5682
  %5684 = vrot.lane.b32.xlu0 %v439, 101
  %v5685 = vpop.permute.xlu0 %5684
  %5686 = vrot.lane.b32.xlu0 %v444, 101
  %v5687 = vpop.permute.xlu0 %5686
  %5688 = vrot.lane.b32.xlu0 %v447, 101
  %v5689 = vpop.permute.xlu0 %5688
  %5690 = vrot.lane.b32.xlu0 %v452, 101
  %v5691 = vpop.permute.xlu0 %5690
  %5692 = vrot.lane.b32.xlu0 %v455, 101
  %v5693 = vpop.permute.xlu0 %5692
  %5694 = vrot.lane.b32.xlu0 %v460, 101
  %v5695 = vpop.permute.xlu0 %5694
  %5696 = vrot.lane.b32.xlu0 %v463, 101
  %v5697 = vpop.permute.xlu0 %5696
  %5698 = vrot.lane.b32.xlu0 %v468, 101
  %v5699 = vpop.permute.xlu0 %5698
  %5700 = vrot.lane.b32.xlu0 %v471, 101
  %v5701 = vpop.permute.xlu0 %5700
  %5702 = vrot.lane.b32.xlu0 %v476, 101
  %v5703 = vpop.permute.xlu0 %5702
  %5704 = vrot.lane.b32.xlu0 %v479, 101
  %v5705 = vpop.permute.xlu0 %5704
  %5706 = vrot.lane.b32.xlu0 %v484, 101
  %v5707 = vpop.permute.xlu0 %5706
  %5708 = vrot.lane.b32.xlu0 %v487, 101
  %v5709 = vpop.permute.xlu0 %5708
  %5710 = vrot.lane.b32.xlu0 %v492, 101
  %v5711 = vpop.permute.xlu0 %5710
  %5712 = vrot.lane.b32.xlu0 %v495, 101
  %v5713 = vpop.permute.xlu0 %5712
  %5714 = vrot.lane.b32.xlu0 %v500, 101
  %v5715 = vpop.permute.xlu0 %5714
  %5716 = vrot.lane.b32.xlu0 %v503, 101
  %v5717 = vpop.permute.xlu0 %5716
  %5718 = vrot.lane.b32.xlu0 %v508, 101
  %v5719 = vpop.permute.xlu0 %5718
  %5720 = vrot.lane.b32.xlu0 %v511, 101
  %v5721 = vpop.permute.xlu0 %5720
  %5722 = vrot.lane.b32.xlu0 %v516, 101
  %v5723 = vpop.permute.xlu0 %5722
  %5724 = vrot.lane.b32.xlu0 %v519, 101
  %v5725 = vpop.permute.xlu0 %5724
  %5726 = vrot.lane.b32.xlu0 %v524, 101
  %v5727 = vpop.permute.xlu0 %5726
  %5728 = vrot.lane.b32.xlu0 %v527, 101
  %v5729 = vpop.permute.xlu0 %5728
  %5730 = vrot.lane.b32.xlu0 %v532, 101
  %v5731 = vpop.permute.xlu0 %5730
  %5732 = vrot.lane.b32.xlu0 %v535, 101
  %v5733 = vpop.permute.xlu0 %5732
  %5734 = vrot.lane.b32.xlu0 %v540, 101
  %v5735 = vpop.permute.xlu0 %5734
  %5736 = vrot.lane.b32.xlu0 %v543, 101
  %v5737 = vpop.permute.xlu0 %5736
  %5738 = vrot.lane.b32.xlu0 %v548, 101
  %v5739 = vpop.permute.xlu0 %5738
  %5740 = vrot.lane.b32.xlu0 %v551, 101
  %v5741 = vpop.permute.xlu0 %5740
  %5742 = vrot.lane.b32.xlu0 %v556, 101
  %v5743 = vpop.permute.xlu0 %5742
  %5744 = vrot.lane.b32.xlu0 %v559, 101
  %v5745 = vpop.permute.xlu0 %5744
  %5746 = vrot.lane.b32.xlu0 %v564, 101
  %v5747 = vpop.permute.xlu0 %5746
  %5748 = vrot.lane.b32.xlu0 %v567, 101
  %v5749 = vpop.permute.xlu0 %5748
  %5750 = vrot.lane.b32.xlu0 %v572, 101
  %v5751 = vpop.permute.xlu0 %5750
  %5752 = vrot.lane.b32.xlu0 %v575, 101
  %v5753 = vpop.permute.xlu0 %5752
  %5754 = vrot.lane.b32.xlu0 %v580, 101
  %v5755 = vpop.permute.xlu0 %5754
  %5756 = vrot.lane.b32.xlu0 %v583, 101
  %v5757 = vpop.permute.xlu0 %5756
  %5758 = vrot.lane.b32.xlu0 %v588, 101
  %v5759 = vpop.permute.xlu0 %5758
  %5760 = vrot.lane.b32.xlu0 %v591, 101
  %v5761 = vpop.permute.xlu0 %5760
  %5762 = vrot.lane.b32.xlu0 %v596, 101
  %v5763 = vpop.permute.xlu0 %5762
  %5764 = vrot.lane.b32.xlu0 %v599, 101
  %v5765 = vpop.permute.xlu0 %5764
  %5766 = vrot.lane.b32.xlu0 %v604, 101
  %v5767 = vpop.permute.xlu0 %5766
  %5768 = vrot.lane.b32.xlu0 %v607, 101
  %v5769 = vpop.permute.xlu0 %5768
  %5770 = vrot.lane.b32.xlu0 %v612, 101
  %v5771 = vpop.permute.xlu0 %5770
  %5772 = vrot.lane.b32.xlu0 %v615, 101
  %v5773 = vpop.permute.xlu0 %5772
  %5774 = vrot.lane.b32.xlu0 %v620, 101
  %v5775 = vpop.permute.xlu0 %5774
  %5776 = vrot.lane.b32.xlu0 %v623, 101
  %v5777 = vpop.permute.xlu0 %5776
  %5778 = vrot.lane.b32.xlu0 %v628, 101
  %v5779 = vpop.permute.xlu0 %5778
  %5780 = vrot.lane.b32.xlu0 %v631, 101
  %v5781 = vpop.permute.xlu0 %5780
  %5782 = vrot.lane.b32.xlu0 %v636, 101
  %v5783 = vpop.permute.xlu0 %5782
  %5784 = vrot.lane.b32.xlu0 %v639, 101
  %v5785 = vpop.permute.xlu0 %5784
  %5786 = vrot.lane.b32.xlu0 %v644, 101
  %v5787 = vpop.permute.xlu0 %5786
  %5788 = vrot.lane.b32.xlu0 %v647, 101
  %v5789 = vpop.permute.xlu0 %5788
  %5790 = vrot.lane.b32.xlu0 %v652, 101
  %v5791 = vpop.permute.xlu0 %5790
  %5792 = vrot.lane.b32.xlu0 %v655, 101
  %v5793 = vpop.permute.xlu0 %5792
  %5858 = vst.msk [vmem:[%s8] sm:$0xff] %vm3296, %v5667
  %5859 = vst.msk [vmem:[%s8 + $0x8] sm:$0xff] %vm3296, %v5669
  %5860 = vst.msk [vmem:[%s8 + $0x10] sm:$0xff] %vm3296, %v5671
  %5861 = vst.msk [vmem:[%s8 + $0x18] sm:$0xff] %vm3296, %v5673
  %5862 = vst.msk [vmem:[%s8 + $0x20] sm:$0xff] %vm3296, %v5675
  %5863 = vst.msk [vmem:[%s8 + $0x28] sm:$0xff] %vm3296, %v5677
  %5864 = vst.msk [vmem:[%s8 + $0x30] sm:$0xff] %vm3296, %v5679
  %5865 = vst.msk [vmem:[%s8 + $0x38] sm:$0xff] %vm3296, %v5681
  %5866 = vst.msk [vmem:[%s8 + $0x40] sm:$0xff] %vm3296, %v5683
  %5867 = vst.msk [vmem:[%s8 + $0x48] sm:$0xff] %vm3296, %v5685
  %5868 = vst.msk [vmem:[%s8 + $0x50] sm:$0xff] %vm3296, %v5687
  %5869 = vst.msk [vmem:[%s8 + $0x58] sm:$0xff] %vm3296, %v5689
  %5870 = vst.msk [vmem:[%s8 + $0x60] sm:$0xff] %vm3296, %v5691
  %5871 = vst.msk [vmem:[%s8 + $0x68] sm:$0xff] %vm3296, %v5693
  %5872 = vst.msk [vmem:[%s8 + $0x70] sm:$0xff] %vm3296, %v5695
  %5873 = vst.msk [vmem:[%s8 + $0x78] sm:$0xff] %vm3296, %v5697
  %5874 = vst.msk [vmem:[%s8 + $0x80] sm:$0xff] %vm3296, %v5699
  %5875 = vst.msk [vmem:[%s8 + $0x88] sm:$0xff] %vm3296, %v5701
  %5876 = vst.msk [vmem:[%s8 + $0x90] sm:$0xff] %vm3296, %v5703
  %5877 = vst.msk [vmem:[%s8 + $0x98] sm:$0xff] %vm3296, %v5705
  %5878 = vst.msk [vmem:[%s8 + $0xa0] sm:$0xff] %vm3296, %v5707
  %5879 = vst.msk [vmem:[%s8 + $0xa8] sm:$0xff] %vm3296, %v5709
  %5880 = vst.msk [vmem:[%s8 + $0xb0] sm:$0xff] %vm3296, %v5711
  %5881 = vst.msk [vmem:[%s8 + $0xb8] sm:$0xff] %vm3296, %v5713
  %5882 = vst.msk [vmem:[%s8 + $0xc0] sm:$0xff] %vm3296, %v5715
  %5883 = vst.msk [vmem:[%s8 + $0xc8] sm:$0xff] %vm3296, %v5717
  %5884 = vst.msk [vmem:[%s8 + $0xd0] sm:$0xff] %vm3296, %v5719
  %5885 = vst.msk [vmem:[%s8 + $0xd8] sm:$0xff] %vm3296, %v5721
  %5886 = vst.msk [vmem:[%s8 + $0xe0] sm:$0xff] %vm3296, %v5723
  %5887 = vst.msk [vmem:[%s8 + $0xe8] sm:$0xff] %vm3296, %v5725
  %5888 = vst.msk [vmem:[%s8 + $0xf0] sm:$0xff] %vm3296, %v5727
  %5889 = vst.msk [vmem:[%s8 + $0xf8] sm:$0xff] %vm3296, %v5729
  %5890 = vst.msk [vmem:[%s8 + $0x100] sm:$0xff] %vm3296, %v5731
  %5891 = vst.msk [vmem:[%s8 + $0x108] sm:$0xff] %vm3296, %v5733
  %5892 = vst.msk [vmem:[%s8 + $0x110] sm:$0xff] %vm3296, %v5735
  %5893 = vst.msk [vmem:[%s8 + $0x118] sm:$0xff] %vm3296, %v5737
  %5894 = vst.msk [vmem:[%s8 + $0x120] sm:$0xff] %vm3296, %v5739
  %5895 = vst.msk [vmem:[%s8 + $0x128] sm:$0xff] %vm3296, %v5741
  %5896 = vst.msk [vmem:[%s8 + $0x130] sm:$0xff] %vm3296, %v5743
  %5897 = vst.msk [vmem:[%s8 + $0x138] sm:$0xff] %vm3296, %v5745
  %5898 = vst.msk [vmem:[%s8 + $0x140] sm:$0xff] %vm3296, %v5747
  %5899 = vst.msk [vmem:[%s8 + $0x148] sm:$0xff] %vm3296, %v5749
  %5900 = vst.msk [vmem:[%s8 + $0x150] sm:$0xff] %vm3296, %v5751
  %5901 = vst.msk [vmem:[%s8 + $0x158] sm:$0xff] %vm3296, %v5753
  %5902 = vst.msk [vmem:[%s8 + $0x160] sm:$0xff] %vm3296, %v5755
  %5903 = vst.msk [vmem:[%s8 + $0x168] sm:$0xff] %vm3296, %v5757
  %5904 = vst.msk [vmem:[%s8 + $0x170] sm:$0xff] %vm3296, %v5759
  %5905 = vst.msk [vmem:[%s8 + $0x178] sm:$0xff] %vm3296, %v5761
  %5906 = vst.msk [vmem:[%s8 + $0x180] sm:$0xff] %vm3296, %v5763
  %5907 = vst.msk [vmem:[%s8 + $0x188] sm:$0xff] %vm3296, %v5765
  %5908 = vst.msk [vmem:[%s8 + $0x190] sm:$0xff] %vm3296, %v5767
  %5909 = vst.msk [vmem:[%s8 + $0x198] sm:$0xff] %vm3296, %v5769
  %5910 = vst.msk [vmem:[%s8 + $0x1a0] sm:$0xff] %vm3296, %v5771
  %5911 = vst.msk [vmem:[%s8 + $0x1a8] sm:$0xff] %vm3296, %v5773
  %5912 = vst.msk [vmem:[%s8 + $0x1b0] sm:$0xff] %vm3296, %v5775
  %5913 = vst.msk [vmem:[%s8 + $0x1b8] sm:$0xff] %vm3296, %v5777
  %5914 = vst.msk [vmem:[%s8 + $0x1c0] sm:$0xff] %vm3296, %v5779
  %5915 = vst.msk [vmem:[%s8 + $0x1c8] sm:$0xff] %vm3296, %v5781
  %5916 = vst.msk [vmem:[%s8 + $0x1d0] sm:$0xff] %vm3296, %v5783
  %5917 = vst.msk [vmem:[%s8 + $0x1d8] sm:$0xff] %vm3296, %v5785
  %5918 = vst.msk [vmem:[%s8 + $0x1e0] sm:$0xff] %vm3296, %v5787
  %5919 = vst.msk [vmem:[%s8 + $0x1e8] sm:$0xff] %vm3296, %v5789
  %5920 = vst.msk [vmem:[%s8 + $0x1f0] sm:$0xff] %vm3296, %v5791
  %5921 = vst.msk [vmem:[%s8 + $0x1f8] sm:$0xff] %vm3296, %v5793
  // Predicated region
  $region22: #{tpu_custom_call.1} parent=0 // pred_check
    _
  $region23: #{tpu_custom_call.1} parent=0 // pred_check_branch
    %5923 = sbr.rel (0) target = $region25
  $region24: #{tpu_custom_call.1} parent=0 // pred_region
    _
  $region25: #{tpu_custom_call.1} parent=0 // pred_fallthru
    _
  // Predicated region
  $region26: #{tpu_custom_call.1} parent=0 // pred_check
    _
  $region27: #{tpu_custom_call.1} parent=0 // pred_check_branch
    %5925 = sbr.rel (0) target = $region29
  $region28: #{tpu_custom_call.1} parent=0 // pred_region
    _
  $region29: #{tpu_custom_call.1} parent=0 // pred_fallthru
    _
  // Predicated region
  $region30: #{tpu_custom_call.1} parent=0 // pred_check
    _
  $region31: #{tpu_custom_call.1} parent=0 // pred_check_branch
    %5927 = sbr.rel (0) target = $region33
  $region32: #{tpu_custom_call.1} parent=0 // pred_region
    _
  $region33: #{tpu_custom_call.1} parent=0 // pred_fallthru
    _
  // Predicated region
  $region34: #{tpu_custom_call.1} parent=0 // pred_check
    _
  $region35: #{tpu_custom_call.1} parent=0 // pred_check_branch
    %5929 = sbr.rel (0) target = $region37
  $region36: #{tpu_custom_call.1} parent=0 // pred_region
    _
  $region37: #{tpu_custom_call.1} parent=0 // pred_fallthru
    _
  // Predicated region
  $region38: #{tpu_custom_call.1} parent=0 // pred_check
    _
  $region39: #{tpu_custom_call.1} parent=0 // pred_check_branch
    %5931 = sbr.rel (0) target = $region41
  $region40: #{tpu_custom_call.1} parent=0 // pred_region
    _
  $region41: #{tpu_custom_call.1} parent=0 // pred_fallthru
    _
  // Predicated region
  $region42: #{tpu_custom_call.1} parent=0 // pred_check
    _
  $region43: #{tpu_custom_call.1} parent=0 // pred_check_branch
    %5933 = sbr.rel (0) target = $region45
  $region44: #{tpu_custom_call.1} parent=0 // pred_region
    _
  $region45: #{tpu_custom_call.1} parent=0 // pred_fallthru
    _
  // Predicated region
  $region46: #{tpu_custom_call.1} parent=0 // pred_check
    _
  $region47: #{tpu_custom_call.1} parent=0 // pred_check_branch
    %5935 = sbr.rel (0) target = $region49
  $region48: #{tpu_custom_call.1} parent=0 // pred_region
    _
  $region49: #{tpu_custom_call.1} parent=0 // pred_fallthru
    _
  // Predicated region
  $region50: #{tpu_custom_call.1} parent=0 // pred_check
    _
  $region51: #{tpu_custom_call.1} parent=0 // pred_check_branch
    %5937 = sbr.rel (0) target = $region53
  $region52: #{tpu_custom_call.1} parent=0 // pred_region
    _
  $region53: #{tpu_custom_call.1} parent=0 // pred_fallthru
    _

</llo_original>
